<compile_context>
chip_gen: v6e
topology: v6e:2x2x1
jax: 0.10.0
libtpu: 0.0.40
codegen_flags: <defaults>
</compile_context>

<pallas_src>
import functools

import jax
import jax.numpy as jnp
from jax.experimental import pallas as pl
from jax.experimental.pallas import tpu as pltpu


_TAPS = ((-1, -1), (-1, 0), (-1, 1),
         (0, -1), (0, 0), (0, 1),
         (1, -1), (1, 0), (1, 1))


# ----------------------------------------------------------------------------
# Fused Pallas kernel: whole UNetDec block for one image per grid step
# ----------------------------------------------------------------------------
def _unetdec_kernel(x_ref, ml_ref, mr_ref, w1_ref, b1_ref, w2_ref,
                    w3_ref, b3_ref, we1_ref, be1_ref, we2_ref, be2_ref,
                    o_ref, h1pad_ref, *, H, W, pad):
    f32 = jnp.float32
    HW = H * W

    x = x_ref[0].astype(f32)          # (Cin, 2*pad + HW), flat pixels, zero-padded
    ml = ml_ref[...]                  # (1, HW) column mask: valid when dx = -1
    mr = mr_ref[...]                  # (1, HW) column mask: valid when dx = +1

    def conv3x3(window, w_ref):
        """3x3 conv as 9 shifted channel matmuls: sum_t W_t @ X(shift_t)."""
        acc = None
        for t, (dy, dx) in enumerate(_TAPS):
            win = window(pad + dy * W + dx)           # (Cin, HW)
            if dx == -1:
                win = win * ml
            elif dx == 1:
                win = win * mr
            part = jnp.dot(w_ref[t], win, preferred_element_type=f32)
            acc = part if acc is None else acc + part
        return acc                                    # (Cout, HW)

    # --- conv1 (3x3, no bias; BN1 folded into weights) + ReLU --------------
    h1 = conv3x3(lambda off: x[:, off:off + HW], w1_ref)
    h1 = jnp.maximum(h1 + b1_ref[...], 0.0)           # (C, HW)

    # --- conv2 (3x3, no bias) + ReLU  (BN2 affine folded into conv3) -------
    h1pad_ref[...] = jnp.zeros(h1pad_ref.shape, f32)
    h1pad_ref[:, pad:pad + HW] = h1
    r2 = conv3x3(lambda off: h1pad_ref[:, off:off + HW], w2_ref)
    r2 = jnp.maximum(r2, 0.0)                         # (C, HW)

    # --- conv3 1x1 (+bias; BN2 affine and Haar 1/2 pre-folded) + ReLU ------
    h3 = jnp.dot(w3_ref[...], r2, preferred_element_type=f32) + b3_ref[...]
    h3 = jnp.maximum(h3, 0.0)                         # (4C, HW), already * 1/2

    C = h3.shape[0] // 4
    q1 = h3[0 * C:1 * C]
    q2 = h3[1 * C:2 * C]
    q3 = h3[2 * C:3 * C]
    q4 = h3[3 * C:4 * C]
    # inverse-Haar quadrants: y_ab are the output pixels (2y + a, 2x + b)
    y00 = q1 - q2 - q3 + q4
    y10 = q1 - q2 + q3 - q4
    y01 = q1 + q2 - q3 - q4
    y11 = q1 + q2 + q3 + q4

    # --- squeeze-excitation: global mean over the (2H, 2W) upsampled map ---
    pooled = jnp.sum(y00 + y01 + y10 + y11, axis=1, keepdims=True) \
        * (1.0 / (4.0 * HW))                          # (C, 1)
    e1 = jnp.dot(we1_ref[...], pooled, preferred_element_type=f32) + be1_ref[...]
    e1 = jnp.maximum(e1, 0.0)                         # (Cr, 1)
    z = jnp.dot(we2_ref[...], e1, preferred_element_type=f32) + be2_ref[...]
    scale = 1.0 / (1.0 + jnp.exp(-z))                 # (C, 1) sigmoid

    o_ref[0, 0, 0, :, :] = (y00 * scale).astype(o_ref.dtype)
    o_ref[0, 1, 0, :, :] = (y10 * scale).astype(o_ref.dtype)
    o_ref[0, 0, 1, :, :] = (y01 * scale).astype(o_ref.dtype)
    o_ref[0, 1, 1, :, :] = (y11 * scale).astype(o_ref.dtype)


# ----------------------------------------------------------------------------
# Wrapper: NCHW in / NCHW out, BN folding, pixel flattening, Haar interleave
# ----------------------------------------------------------------------------
@jax.jit
def unetdec_forward(x, params):
    """x: (N, Cin, H, W) -> (N, C, 2H, 2W).  Assumes H == W (as the module's
    F.avg_pool2d(out, fm_size) global pooling does)."""
    eps = 1e-5
    N, Cin, H, W = x.shape
    HW = H * W
    pad = W + 1                               # max |flat shift| of a 3x3 tap

    C = params["conv1_w"].shape[0]
    C4 = params["conv3_w"].shape[0]
    Cr = params["exc1_w"].shape[0]
    hp = jax.lax.Precision.HIGHEST

    # ---- fold eval-mode BatchNorms ----------------------------------------
    g1, bb1, m1, v1 = params["bn1"]
    s1 = g1 / jnp.sqrt(v1 + eps)
    t1 = bb1 - m1 * s1
    w1 = params["conv1_w"] * s1[:, None, None, None]              # (C, Cin, 3, 3)
    w1_taps = jnp.transpose(w1, (2, 3, 0, 1)).reshape(9, C, Cin)
    b1 = t1[:, None]                                              # (C, 1)

    w2_taps = jnp.transpose(params["conv2_w"], (2, 3, 0, 1)).reshape(9, C, C)

    g2, bb2, m2, v2 = params["bn2"]
    s2 = g2 / jnp.sqrt(v2 + eps)
    t2 = bb2 - m2 * s2
    w3 = params["conv3_w"].reshape(C4, C)
    # BN2 is a per-channel affine applied after conv2's ReLU; fold it (and the
    # inverse-Haar 1/2, which commutes with the positively-homogeneous ReLU)
    # into the 1x1 conv3.
    w3f = 0.5 * w3 * s2[None, :]
    b3f = (0.5 * (jnp.dot(w3, t2, precision=hp) + params["conv3_b"]))[:, None]

    we1 = params["exc1_w"]
    be1 = params["exc1_b"][:, None]
    we2 = params["exc2_w"]
    be2 = params["exc2_b"][:, None]

    # ---- channel-major flattened pixels (reshape only, no transpose) ------
    x_fp = jnp.pad(x.reshape(N, Cin, HW), ((0, 0), (0, 0), (pad, pad)))

    lane_x = jnp.arange(HW, dtype=jnp.int32) % W
    mask_l = (lane_x != 0).astype(jnp.float32)[None, :]
    mask_r = (lane_x != W - 1).astype(jnp.float32)[None, :]

    kernel = functools.partial(_unetdec_kernel, H=H, W=W, pad=pad)
    c2 = lambda n: (0, 0)
    c3 = lambda n: (0, 0, 0)

    out_q = pl.pallas_call(
        kernel,
        out_shape=jax.ShapeDtypeStruct((N, 2, 2, C, HW), x.dtype),
        grid_spec=pltpu.PrefetchScalarGridSpec(
            num_scalar_prefetch=0,
            grid=(N,),
            in_specs=[
                pl.BlockSpec((1, Cin, HW + 2 * pad), lambda n: (n, 0, 0)),
                pl.BlockSpec((1, HW), c2),            # mask_l
                pl.BlockSpec((1, HW), c2),            # mask_r
                pl.BlockSpec((9, C, Cin), c3),        # conv1 taps (BN1 folded)
                pl.BlockSpec((C, 1), c2),             # bias1 (BN1)
                pl.BlockSpec((9, C, C), c3),          # conv2 taps
                pl.BlockSpec((C4, C), c2),            # conv3 (BN2 + 1/2 folded)
                pl.BlockSpec((C4, 1), c2),            # bias3
                pl.BlockSpec((Cr, C), c2),            # excitation1 W
                pl.BlockSpec((Cr, 1), c2),            # excitation1 b
                pl.BlockSpec((C, Cr), c2),            # excitation2 W
                pl.BlockSpec((C, 1), c2),             # excitation2 b
            ],
            out_specs=pl.BlockSpec((1, 2, 2, C, HW),
                                   lambda n: (n, 0, 0, 0, 0)),
            scratch_shapes=[pltpu.VMEM((C, HW + 2 * pad), jnp.float32)],
        ),
        compiler_params=pltpu.CompilerParams(
            dimension_semantics=("parallel",)),
    )(x_fp, mask_l, mask_r, w1_taps, b1, w2_taps, w3f, b3f, we1, be1, we2, be2)

    # interleave the four Haar quadrants -> NCHW (N, C, 2H, 2W)
    out = out_q.reshape(N, 2, 2, C, H, W)
    out = jnp.transpose(out, (0, 3, 4, 1, 5, 2)).reshape(N, C, 2 * H, 2 * W)
    return out


# ----------------------------------------------------------------------------
# Deterministic synthetic parameters
# ----------------------------------------------------------------------------
def init_params(key, in_channels, out_channels, reduction_ratio):
    C = out_channels
    Cr = max(1, C // reduction_ratio)
    ks = jax.random.split(key, 10)

    def w(k, shape, scale=0.1):
        return scale * jax.random.normal(k, shape, jnp.float32)

    def bn(k, c):
        kg, kb, km, kv = jax.random.split(k, 4)
        return (1.0 + 0.1 * jax.random.normal(kg, (c,), jnp.float32),
                0.1 * jax.random.normal(kb, (c,), jnp.float32),
                0.1 * jax.random.normal(km, (c,), jnp.float32),
                jnp.abs(1.0 + 0.1 * jax.random.normal(kv, (c,), jnp.float32)))

    return dict(
        conv1_w=w(ks[0], (C, in_channels, 3, 3)),
        bn1=bn(ks[1], C),
        conv2_w=w(ks[2], (C, C, 3, 3)),
        bn2=bn(ks[3], C),
        conv3_w=w(ks[4], (4 * C, C, 1, 1)),
        conv3_b=w(ks[5], (4 * C,)),
        exc1_w=w(ks[6], (Cr, C)),
        exc1_b=w(ks[7], (Cr,)),
        exc2_w=w(ks[8], (C, Cr)),
        exc2_b=w(ks[9], (C,)),
    )


# ----------------------------------------------------------------------------
# Pure-JAX reference (module-faithful) for the self-check
# ----------------------------------------------------------------------------
def _reference_forward(x, params, eps=1e-5):
    dn = ("NCHW", "OIHW", "NCHW")
    hp = jax.lax.Precision.HIGHEST

    def bn(h, p):
        g, b, m, v = p
        return (h - m[None, :, None, None]) / jnp.sqrt(v[None, :, None, None] + eps) \
            * g[None, :, None, None] + b[None, :, None, None]

    h = jax.lax.conv_general_dilated(x, params["conv1_w"], (1, 1), ((1, 1), (1, 1)),
                                     dimension_numbers=dn, precision=hp)
    h = jax.nn.relu(bn(h, params["bn1"]))
    h = jax.lax.conv_general_dilated(h, params["conv2_w"], (1, 1), ((1, 1), (1, 1)),
                                     dimension_numbers=dn, precision=hp)
    h = bn(jax.nn.relu(h), params["bn2"])
    h = jax.lax.conv_general_dilated(h, params["conv3_w"], (1, 1), ((0, 0), (0, 0)),
                                     dimension_numbers=dn, precision=hp)
    h = jax.nn.relu(h + params["conv3_b"][None, :, None, None])

    # InverseHaar (standard 2-D inverse Haar / IWT, 2x upsample)
    N, C4, H, W = h.shape
    C = C4 // 4
    x1 = h[:, 0 * C:1 * C] / 2.0
    x2 = h[:, 1 * C:2 * C] / 2.0
    x3 = h[:, 2 * C:3 * C] / 2.0
    x4 = h[:, 3 * C:4 * C] / 2.0
    out = jnp.zeros((N, C, 2 * H, 2 * W), h.dtype)
    out = out.at[:, :, 0::2, 0::2].set(x1 - x2 - x3 + x4)
    out = out.at[:, :, 1::2, 0::2].set(x1 - x2 + x3 - x4)
    out = out.at[:, :, 0::2, 1::2].set(x1 + x2 - x3 - x4)
    out = out.at[:, :, 1::2, 1::2].set(x1 + x2 + x3 + x4)

    # squeeze-excitation (avg_pool2d(out, fm_size) == global mean, square map)
    pooled = jnp.mean(out, axis=(2, 3))                                # (N, C)
    e = jax.nn.relu(jnp.dot(pooled, params["exc1_w"].T, precision=hp)
                    + params["exc1_b"][None, :])
    s = jax.nn.sigmoid(jnp.dot(e, params["exc2_w"].T, precision=hp)
                       + params["exc2_b"][None, :])
    return out * s[:, :, None, None]


if __name__ == "__main__":
    key = jax.random.PRNGKey(0)
    kx, kp = jax.random.split(key)

    N, Cin, H, W = 2, 8, 16, 16
    out_channels, reduction_ratio = 16, 4

    x = jax.random.uniform(kx, (N, Cin, H, W), jnp.float32)
    params = init_params(kp, Cin, out_channels, reduction_ratio)

    out = unetdec_forward(x, params)
    out = jax.block_until_ready(out)

    ref = _reference_forward(x, params)
    assert out.shape == (N, out_channels, 2 * H, 2 * W), out.shape
    assert bool(jnp.allclose(out, ref, atol=1e-3, rtol=1e-3)), \
        float(jnp.max(jnp.abs(out - ref)))

    print("KERNEL_OK")
</pallas_src>

<mosaic_0001>
module attributes {stable_mosaic.version = 11 : i64} {
  func.func @_unetdec_kernel(%arg0: i32, %arg1: memref<1x8x290xf32, #tpu.memory_space<vmem>>, %arg2: memref<1x256xf32, #tpu.memory_space<vmem>>, %arg3: memref<1x256xf32, #tpu.memory_space<vmem>>, %arg4: memref<9x16x8xf32, #tpu.memory_space<vmem>>, %arg5: memref<16x1xf32, #tpu.memory_space<vmem>>, %arg6: memref<9x16x16xf32, #tpu.memory_space<vmem>>, %arg7: memref<64x16xf32, #tpu.memory_space<vmem>>, %arg8: memref<64x1xf32, #tpu.memory_space<vmem>>, %arg9: memref<4x16xf32, #tpu.memory_space<vmem>>, %arg10: memref<4x1xf32, #tpu.memory_space<vmem>>, %arg11: memref<16x4xf32, #tpu.memory_space<vmem>>, %arg12: memref<16x1xf32, #tpu.memory_space<vmem>>, %arg13: memref<1x2x2x16x256xf32, #tpu.memory_space<vmem>>, %arg14: memref<16x290xf32, #tpu.memory_space<vmem>>) attributes {dimension_semantics = [#tpu.dimension_semantics<parallel>], iteration_bounds = array<i64: 2>, scalar_prefetch = 0 : i64, scratch_operands = 1 : i64, tpu.core_type = #tpu.core_type<tc>, window_params = [{transform_indices = @transform_0, window_bounds = array<i64: 1, 8, 290>}, {pipeline_mode = #tpu.pipeline_mode<synchronous>, transform_indices = @transform_1, window_bounds = array<i64: 1, 256>}, {pipeline_mode = #tpu.pipeline_mode<synchronous>, transform_indices = @transform_2, window_bounds = array<i64: 1, 256>}, {pipeline_mode = #tpu.pipeline_mode<synchronous>, transform_indices = @transform_3, window_bounds = array<i64: 9, 16, 8>}, {pipeline_mode = #tpu.pipeline_mode<synchronous>, transform_indices = @transform_4, window_bounds = array<i64: 16, 1>}, {pipeline_mode = #tpu.pipeline_mode<synchronous>, transform_indices = @transform_5, window_bounds = array<i64: 9, 16, 16>}, {pipeline_mode = #tpu.pipeline_mode<synchronous>, transform_indices = @transform_6, window_bounds = array<i64: 64, 16>}, {pipeline_mode = #tpu.pipeline_mode<synchronous>, transform_indices = @transform_7, window_bounds = array<i64: 64, 1>}, {pipeline_mode = #tpu.pipeline_mode<synchronous>, transform_indices = @transform_8, window_bounds = array<i64: 4, 16>}, {pipeline_mode = #tpu.pipeline_mode<synchronous>, transform_indices = @transform_9, window_bounds = array<i64: 4, 1>}, {pipeline_mode = #tpu.pipeline_mode<synchronous>, transform_indices = @transform_10, window_bounds = array<i64: 16, 4>}, {pipeline_mode = #tpu.pipeline_mode<synchronous>, transform_indices = @transform_11, window_bounds = array<i64: 16, 1>}, {transform_indices = @transform_12, window_bounds = array<i64: 1, 2, 2, 16, 256>}]} {
    %c0 = arith.constant 0 : index
    %c0_0 = arith.constant 0 : index
    %c0_1 = arith.constant 0 : index
    %0 = vector.load %arg1[%c0, %c0_0, %c0_1] : memref<1x8x290xf32, #tpu.memory_space<vmem>>, vector<1x8x290xf32>
    %1 = vector.shape_cast %0 : vector<1x8x290xf32> to vector<8x290xf32>
    %c0_2 = arith.constant 0 : index
    %c0_3 = arith.constant 0 : index
    %2 = vector.load %arg2[%c0_2, %c0_3] : memref<1x256xf32, #tpu.memory_space<vmem>>, vector<1x256xf32>
    %c0_4 = arith.constant 0 : index
    %c0_5 = arith.constant 0 : index
    %3 = vector.load %arg3[%c0_4, %c0_5] : memref<1x256xf32, #tpu.memory_space<vmem>>, vector<1x256xf32>
    %4 = vector.extract_strided_slice %1 {offsets = [0, 0], sizes = [8, 256], strides = [1, 1]} : vector<8x290xf32> to vector<8x256xf32>
    %5 = vector.broadcast %2 : vector<1x256xf32> to vector<8x256xf32>
    %6 = arith.mulf %4, %5 : vector<8x256xf32>
    %c0_6 = arith.constant 0 : index
    %c0_7 = arith.constant 0 : index
    %c0_8 = arith.constant 0 : index
    %7 = vector.load %arg4[%c0_6, %c0_7, %c0_8] : memref<9x16x8xf32, #tpu.memory_space<vmem>>, vector<1x16x8xf32>
    %8 = vector.shape_cast %7 : vector<1x16x8xf32> to vector<16x8xf32>
    %cst = arith.constant dense<0.000000e+00> : vector<16x256xf32>
    %9 = tpu.matmul %8, %6, %cst {dimension_numbers = #tpu.dot_dimension_numbers<[1], [0], [0], [1], [0, 0, 1, 1], [], []>} : vector<16x8xf32>, vector<8x256xf32>, vector<16x256xf32> -> vector<16x256xf32>
    %10 = vector.extract_strided_slice %1 {offsets = [0, 1], sizes = [8, 256], strides = [1, 1]} : vector<8x290xf32> to vector<8x256xf32>
    %c1 = arith.constant 1 : index
    %c0_9 = arith.constant 0 : index
    %c0_10 = arith.constant 0 : index
    %11 = vector.load %arg4[%c1, %c0_9, %c0_10] : memref<9x16x8xf32, #tpu.memory_space<vmem>>, vector<1x16x8xf32>
    %12 = vector.shape_cast %11 : vector<1x16x8xf32> to vector<16x8xf32>
    %cst_11 = arith.constant dense<0.000000e+00> : vector<16x256xf32>
    %13 = tpu.matmul %12, %10, %cst_11 {dimension_numbers = #tpu.dot_dimension_numbers<[1], [0], [0], [1], [0, 0, 1, 1], [], []>} : vector<16x8xf32>, vector<8x256xf32>, vector<16x256xf32> -> vector<16x256xf32>
    %14 = arith.addf %9, %13 : vector<16x256xf32>
    %15 = vector.extract_strided_slice %1 {offsets = [0, 2], sizes = [8, 256], strides = [1, 1]} : vector<8x290xf32> to vector<8x256xf32>
    %16 = vector.broadcast %3 : vector<1x256xf32> to vector<8x256xf32>
    %17 = arith.mulf %15, %16 : vector<8x256xf32>
    %c2 = arith.constant 2 : index
    %c0_12 = arith.constant 0 : index
    %c0_13 = arith.constant 0 : index
    %18 = vector.load %arg4[%c2, %c0_12, %c0_13] : memref<9x16x8xf32, #tpu.memory_space<vmem>>, vector<1x16x8xf32>
    %19 = vector.shape_cast %18 : vector<1x16x8xf32> to vector<16x8xf32>
    %cst_14 = arith.constant dense<0.000000e+00> : vector<16x256xf32>
    %20 = tpu.matmul %19, %17, %cst_14 {dimension_numbers = #tpu.dot_dimension_numbers<[1], [0], [0], [1], [0, 0, 1, 1], [], []>} : vector<16x8xf32>, vector<8x256xf32>, vector<16x256xf32> -> vector<16x256xf32>
    %21 = arith.addf %14, %20 : vector<16x256xf32>
    %22 = vector.extract_strided_slice %1 {offsets = [0, 16], sizes = [8, 256], strides = [1, 1]} : vector<8x290xf32> to vector<8x256xf32>
    %23 = vector.broadcast %2 : vector<1x256xf32> to vector<8x256xf32>
    %24 = arith.mulf %22, %23 : vector<8x256xf32>
    %c3 = arith.constant 3 : index
    %c0_15 = arith.constant 0 : index
    %c0_16 = arith.constant 0 : index
    %25 = vector.load %arg4[%c3, %c0_15, %c0_16] : memref<9x16x8xf32, #tpu.memory_space<vmem>>, vector<1x16x8xf32>
    %26 = vector.shape_cast %25 : vector<1x16x8xf32> to vector<16x8xf32>
    %cst_17 = arith.constant dense<0.000000e+00> : vector<16x256xf32>
    %27 = tpu.matmul %26, %24, %cst_17 {dimension_numbers = #tpu.dot_dimension_numbers<[1], [0], [0], [1], [0, 0, 1, 1], [], []>} : vector<16x8xf32>, vector<8x256xf32>, vector<16x256xf32> -> vector<16x256xf32>
    %28 = arith.addf %21, %27 : vector<16x256xf32>
    %29 = vector.extract_strided_slice %1 {offsets = [0, 17], sizes = [8, 256], strides = [1, 1]} : vector<8x290xf32> to vector<8x256xf32>
    %c4 = arith.constant 4 : index
    %c0_18 = arith.constant 0 : index
    %c0_19 = arith.constant 0 : index
    %30 = vector.load %arg4[%c4, %c0_18, %c0_19] : memref<9x16x8xf32, #tpu.memory_space<vmem>>, vector<1x16x8xf32>
    %31 = vector.shape_cast %30 : vector<1x16x8xf32> to vector<16x8xf32>
    %cst_20 = arith.constant dense<0.000000e+00> : vector<16x256xf32>
    %32 = tpu.matmul %31, %29, %cst_20 {dimension_numbers = #tpu.dot_dimension_numbers<[1], [0], [0], [1], [0, 0, 1, 1], [], []>} : vector<16x8xf32>, vector<8x256xf32>, vector<16x256xf32> -> vector<16x256xf32>
    %33 = arith.addf %28, %32 : vector<16x256xf32>
    %34 = vector.extract_strided_slice %1 {offsets = [0, 18], sizes = [8, 256], strides = [1, 1]} : vector<8x290xf32> to vector<8x256xf32>
    %35 = vector.broadcast %3 : vector<1x256xf32> to vector<8x256xf32>
    %36 = arith.mulf %34, %35 : vector<8x256xf32>
    %c5 = arith.constant 5 : index
    %c0_21 = arith.constant 0 : index
    %c0_22 = arith.constant 0 : index
    %37 = vector.load %arg4[%c5, %c0_21, %c0_22] : memref<9x16x8xf32, #tpu.memory_space<vmem>>, vector<1x16x8xf32>
    %38 = vector.shape_cast %37 : vector<1x16x8xf32> to vector<16x8xf32>
    %cst_23 = arith.constant dense<0.000000e+00> : vector<16x256xf32>
    %39 = tpu.matmul %38, %36, %cst_23 {dimension_numbers = #tpu.dot_dimension_numbers<[1], [0], [0], [1], [0, 0, 1, 1], [], []>} : vector<16x8xf32>, vector<8x256xf32>, vector<16x256xf32> -> vector<16x256xf32>
    %40 = arith.addf %33, %39 : vector<16x256xf32>
    %41 = vector.extract_strided_slice %1 {offsets = [0, 32], sizes = [8, 256], strides = [1, 1]} : vector<8x290xf32> to vector<8x256xf32>
    %42 = vector.broadcast %2 : vector<1x256xf32> to vector<8x256xf32>
    %43 = arith.mulf %41, %42 : vector<8x256xf32>
    %c6 = arith.constant 6 : index
    %c0_24 = arith.constant 0 : index
    %c0_25 = arith.constant 0 : index
    %44 = vector.load %arg4[%c6, %c0_24, %c0_25] : memref<9x16x8xf32, #tpu.memory_space<vmem>>, vector<1x16x8xf32>
    %45 = vector.shape_cast %44 : vector<1x16x8xf32> to vector<16x8xf32>
    %cst_26 = arith.constant dense<0.000000e+00> : vector<16x256xf32>
    %46 = tpu.matmul %45, %43, %cst_26 {dimension_numbers = #tpu.dot_dimension_numbers<[1], [0], [0], [1], [0, 0, 1, 1], [], []>} : vector<16x8xf32>, vector<8x256xf32>, vector<16x256xf32> -> vector<16x256xf32>
    %47 = arith.addf %40, %46 : vector<16x256xf32>
    %48 = vector.extract_strided_slice %1 {offsets = [0, 33], sizes = [8, 256], strides = [1, 1]} : vector<8x290xf32> to vector<8x256xf32>
    %c7 = arith.constant 7 : index
    %c0_27 = arith.constant 0 : index
    %c0_28 = arith.constant 0 : index
    %49 = vector.load %arg4[%c7, %c0_27, %c0_28] : memref<9x16x8xf32, #tpu.memory_space<vmem>>, vector<1x16x8xf32>
    %50 = vector.shape_cast %49 : vector<1x16x8xf32> to vector<16x8xf32>
    %cst_29 = arith.constant dense<0.000000e+00> : vector<16x256xf32>
    %51 = tpu.matmul %50, %48, %cst_29 {dimension_numbers = #tpu.dot_dimension_numbers<[1], [0], [0], [1], [0, 0, 1, 1], [], []>} : vector<16x8xf32>, vector<8x256xf32>, vector<16x256xf32> -> vector<16x256xf32>
    %52 = arith.addf %47, %51 : vector<16x256xf32>
    %53 = vector.extract_strided_slice %1 {offsets = [0, 34], sizes = [8, 256], strides = [1, 1]} : vector<8x290xf32> to vector<8x256xf32>
    %54 = vector.broadcast %3 : vector<1x256xf32> to vector<8x256xf32>
    %55 = arith.mulf %53, %54 : vector<8x256xf32>
    %c8 = arith.constant 8 : index
    %c0_30 = arith.constant 0 : index
    %c0_31 = arith.constant 0 : index
    %56 = vector.load %arg4[%c8, %c0_30, %c0_31] : memref<9x16x8xf32, #tpu.memory_space<vmem>>, vector<1x16x8xf32>
    %57 = vector.shape_cast %56 : vector<1x16x8xf32> to vector<16x8xf32>
    %cst_32 = arith.constant dense<0.000000e+00> : vector<16x256xf32>
    %58 = tpu.matmul %57, %55, %cst_32 {dimension_numbers = #tpu.dot_dimension_numbers<[1], [0], [0], [1], [0, 0, 1, 1], [], []>} : vector<16x8xf32>, vector<8x256xf32>, vector<16x256xf32> -> vector<16x256xf32>
    %59 = arith.addf %52, %58 : vector<16x256xf32>
    %c0_33 = arith.constant 0 : index
    %c0_34 = arith.constant 0 : index
    %60 = vector.load %arg5[%c0_33, %c0_34] : memref<16x1xf32, #tpu.memory_space<vmem>>, vector<16x1xf32>
    %61 = vector.broadcast %60 : vector<16x1xf32> to vector<16x256xf32>
    %62 = arith.addf %59, %61 : vector<16x256xf32>
    %cst_35 = arith.constant 0.000000e+00 : f32
    %63 = vector.broadcast %cst_35 : f32 to vector<16x256xf32>
    %64 = arith.maximumf %62, %63 : vector<16x256xf32>
    %cst_36 = arith.constant 0.000000e+00 : f32
    %65 = vector.broadcast %cst_36 : f32 to vector<16x290xf32>
    %c0_37 = arith.constant 0 : index
    %c0_38 = arith.constant 0 : index
    %66 = vector.load %arg14[%c0_37, %c0_38] : memref<16x290xf32, #tpu.memory_space<vmem>>, vector<16x290xf32>
    tpu.vector_store %arg14[%c0_37, %c0_38], %65 {strides = array<i32>} : memref<16x290xf32, #tpu.memory_space<vmem>>, vector<16x290xf32>,
    %c0_39 = arith.constant 0 : index
    %c17 = arith.constant 17 : index
    %67 = vector.load %arg14[%c0_39, %c17] : memref<16x290xf32, #tpu.memory_space<vmem>>, vector<16x256xf32>
    tpu.vector_store %arg14[%c0_39, %c17], %64 {strides = array<i32>} : memref<16x290xf32, #tpu.memory_space<vmem>>, vector<16x256xf32>,
    %c0_40 = arith.constant 0 : index
    %c0_41 = arith.constant 0 : index
    %68 = vector.load %arg14[%c0_40, %c0_41] : memref<16x290xf32, #tpu.memory_space<vmem>>, vector<16x256xf32>
    %69 = vector.broadcast %2 : vector<1x256xf32> to vector<16x256xf32>
    %70 = arith.mulf %68, %69 : vector<16x256xf32>
    %c0_42 = arith.constant 0 : index
    %c0_43 = arith.constant 0 : index
    %c0_44 = arith.constant 0 : index
    %71 = vector.load %arg6[%c0_42, %c0_43, %c0_44] : memref<9x16x16xf32, #tpu.memory_space<vmem>>, vector<1x16x16xf32>
    %72 = vector.shape_cast %71 : vector<1x16x16xf32> to vector<16x16xf32>
    %cst_45 = arith.constant dense<0.000000e+00> : vector<16x256xf32>
    %73 = tpu.matmul %72, %70, %cst_45 {dimension_numbers = #tpu.dot_dimension_numbers<[1], [0], [0], [1], [0, 0, 1, 1], [], []>} : vector<16x16xf32>, vector<16x256xf32>, vector<16x256xf32> -> vector<16x256xf32>
    %c0_46 = arith.constant 0 : index
    %c1_47 = arith.constant 1 : index
    %74 = vector.load %arg14[%c0_46, %c1_47] : memref<16x290xf32, #tpu.memory_space<vmem>>, vector<16x256xf32>
    %c1_48 = arith.constant 1 : index
    %c0_49 = arith.constant 0 : index
    %c0_50 = arith.constant 0 : index
    %75 = vector.load %arg6[%c1_48, %c0_49, %c0_50] : memref<9x16x16xf32, #tpu.memory_space<vmem>>, vector<1x16x16xf32>
    %76 = vector.shape_cast %75 : vector<1x16x16xf32> to vector<16x16xf32>
    %cst_51 = arith.constant dense<0.000000e+00> : vector<16x256xf32>
    %77 = tpu.matmul %76, %74, %cst_51 {dimension_numbers = #tpu.dot_dimension_numbers<[1], [0], [0], [1], [0, 0, 1, 1], [], []>} : vector<16x16xf32>, vector<16x256xf32>, vector<16x256xf32> -> vector<16x256xf32>
    %78 = arith.addf %73, %77 : vector<16x256xf32>
    %c0_52 = arith.constant 0 : index
    %c2_53 = arith.constant 2 : index
    %79 = vector.load %arg14[%c0_52, %c2_53] : memref<16x290xf32, #tpu.memory_space<vmem>>, vector<16x256xf32>
    %80 = vector.broadcast %3 : vector<1x256xf32> to vector<16x256xf32>
    %81 = arith.mulf %79, %80 : vector<16x256xf32>
    %c2_54 = arith.constant 2 : index
    %c0_55 = arith.constant 0 : index
    %c0_56 = arith.constant 0 : index
    %82 = vector.load %arg6[%c2_54, %c0_55, %c0_56] : memref<9x16x16xf32, #tpu.memory_space<vmem>>, vector<1x16x16xf32>
    %83 = vector.shape_cast %82 : vector<1x16x16xf32> to vector<16x16xf32>
    %cst_57 = arith.constant dense<0.000000e+00> : vector<16x256xf32>
    %84 = tpu.matmul %83, %81, %cst_57 {dimension_numbers = #tpu.dot_dimension_numbers<[1], [0], [0], [1], [0, 0, 1, 1], [], []>} : vector<16x16xf32>, vector<16x256xf32>, vector<16x256xf32> -> vector<16x256xf32>
    %85 = arith.addf %78, %84 : vector<16x256xf32>
    %c0_58 = arith.constant 0 : index
    %c16 = arith.constant 16 : index
    %86 = vector.load %arg14[%c0_58, %c16] : memref<16x290xf32, #tpu.memory_space<vmem>>, vector<16x256xf32>
    %87 = vector.broadcast %2 : vector<1x256xf32> to vector<16x256xf32>
    %88 = arith.mulf %86, %87 : vector<16x256xf32>
    %c3_59 = arith.constant 3 : index
    %c0_60 = arith.constant 0 : index
    %c0_61 = arith.constant 0 : index
    %89 = vector.load %arg6[%c3_59, %c0_60, %c0_61] : memref<9x16x16xf32, #tpu.memory_space<vmem>>, vector<1x16x16xf32>
    %90 = vector.shape_cast %89 : vector<1x16x16xf32> to vector<16x16xf32>
    %cst_62 = arith.constant dense<0.000000e+00> : vector<16x256xf32>
    %91 = tpu.matmul %90, %88, %cst_62 {dimension_numbers = #tpu.dot_dimension_numbers<[1], [0], [0], [1], [0, 0, 1, 1], [], []>} : vector<16x16xf32>, vector<16x256xf32>, vector<16x256xf32> -> vector<16x256xf32>
    %92 = arith.addf %85, %91 : vector<16x256xf32>
    %c0_63 = arith.constant 0 : index
    %c17_64 = arith.constant 17 : index
    %93 = vector.load %arg14[%c0_63, %c17_64] : memref<16x290xf32, #tpu.memory_space<vmem>>, vector<16x256xf32>
    %c4_65 = arith.constant 4 : index
    %c0_66 = arith.constant 0 : index
    %c0_67 = arith.constant 0 : index
    %94 = vector.load %arg6[%c4_65, %c0_66, %c0_67] : memref<9x16x16xf32, #tpu.memory_space<vmem>>, vector<1x16x16xf32>
    %95 = vector.shape_cast %94 : vector<1x16x16xf32> to vector<16x16xf32>
    %cst_68 = arith.constant dense<0.000000e+00> : vector<16x256xf32>
    %96 = tpu.matmul %95, %93, %cst_68 {dimension_numbers = #tpu.dot_dimension_numbers<[1], [0], [0], [1], [0, 0, 1, 1], [], []>} : vector<16x16xf32>, vector<16x256xf32>, vector<16x256xf32> -> vector<16x256xf32>
    %97 = arith.addf %92, %96 : vector<16x256xf32>
    %c0_69 = arith.constant 0 : index
    %c18 = arith.constant 18 : index
    %98 = vector.load %arg14[%c0_69, %c18] : memref<16x290xf32, #tpu.memory_space<vmem>>, vector<16x256xf32>
    %99 = vector.broadcast %3 : vector<1x256xf32> to vector<16x256xf32>
    %100 = arith.mulf %98, %99 : vector<16x256xf32>
    %c5_70 = arith.constant 5 : index
    %c0_71 = arith.constant 0 : index
    %c0_72 = arith.constant 0 : index
    %101 = vector.load %arg6[%c5_70, %c0_71, %c0_72] : memref<9x16x16xf32, #tpu.memory_space<vmem>>, vector<1x16x16xf32>
    %102 = vector.shape_cast %101 : vector<1x16x16xf32> to vector<16x16xf32>
    %cst_73 = arith.constant dense<0.000000e+00> : vector<16x256xf32>
    %103 = tpu.matmul %102, %100, %cst_73 {dimension_numbers = #tpu.dot_dimension_numbers<[1], [0], [0], [1], [0, 0, 1, 1], [], []>} : vector<16x16xf32>, vector<16x256xf32>, vector<16x256xf32> -> vector<16x256xf32>
    %104 = arith.addf %97, %103 : vector<16x256xf32>
    %c0_74 = arith.constant 0 : index
    %c32 = arith.constant 32 : index
    %105 = vector.load %arg14[%c0_74, %c32] : memref<16x290xf32, #tpu.memory_space<vmem>>, vector<16x256xf32>
    %106 = vector.broadcast %2 : vector<1x256xf32> to vector<16x256xf32>
    %107 = arith.mulf %105, %106 : vector<16x256xf32>
    %c6_75 = arith.constant 6 : index
    %c0_76 = arith.constant 0 : index
    %c0_77 = arith.constant 0 : index
    %108 = vector.load %arg6[%c6_75, %c0_76, %c0_77] : memref<9x16x16xf32, #tpu.memory_space<vmem>>, vector<1x16x16xf32>
    %109 = vector.shape_cast %108 : vector<1x16x16xf32> to vector<16x16xf32>
    %cst_78 = arith.constant dense<0.000000e+00> : vector<16x256xf32>
    %110 = tpu.matmul %109, %107, %cst_78 {dimension_numbers = #tpu.dot_dimension_numbers<[1], [0], [0], [1], [0, 0, 1, 1], [], []>} : vector<16x16xf32>, vector<16x256xf32>, vector<16x256xf32> -> vector<16x256xf32>
    %111 = arith.addf %104, %110 : vector<16x256xf32>
    %c0_79 = arith.constant 0 : index
    %c33 = arith.constant 33 : index
    %112 = vector.load %arg14[%c0_79, %c33] : memref<16x290xf32, #tpu.memory_space<vmem>>, vector<16x256xf32>
    %c7_80 = arith.constant 7 : index
    %c0_81 = arith.constant 0 : index
    %c0_82 = arith.constant 0 : index
    %113 = vector.load %arg6[%c7_80, %c0_81, %c0_82] : memref<9x16x16xf32, #tpu.memory_space<vmem>>, vector<1x16x16xf32>
    %114 = vector.shape_cast %113 : vector<1x16x16xf32> to vector<16x16xf32>
    %cst_83 = arith.constant dense<0.000000e+00> : vector<16x256xf32>
    %115 = tpu.matmul %114, %112, %cst_83 {dimension_numbers = #tpu.dot_dimension_numbers<[1], [0], [0], [1], [0, 0, 1, 1], [], []>} : vector<16x16xf32>, vector<16x256xf32>, vector<16x256xf32> -> vector<16x256xf32>
    %116 = arith.addf %111, %115 : vector<16x256xf32>
    %c0_84 = arith.constant 0 : index
    %c34 = arith.constant 34 : index
    %117 = vector.load %arg14[%c0_84, %c34] : memref<16x290xf32, #tpu.memory_space<vmem>>, vector<16x256xf32>
    %118 = vector.broadcast %3 : vector<1x256xf32> to vector<16x256xf32>
    %119 = arith.mulf %117, %118 : vector<16x256xf32>
    %c8_85 = arith.constant 8 : index
    %c0_86 = arith.constant 0 : index
    %c0_87 = arith.constant 0 : index
    %120 = vector.load %arg6[%c8_85, %c0_86, %c0_87] : memref<9x16x16xf32, #tpu.memory_space<vmem>>, vector<1x16x16xf32>
    %121 = vector.shape_cast %120 : vector<1x16x16xf32> to vector<16x16xf32>
    %cst_88 = arith.constant dense<0.000000e+00> : vector<16x256xf32>
    %122 = tpu.matmul %121, %119, %cst_88 {dimension_numbers = #tpu.dot_dimension_numbers<[1], [0], [0], [1], [0, 0, 1, 1], [], []>} : vector<16x16xf32>, vector<16x256xf32>, vector<16x256xf32> -> vector<16x256xf32>
    %123 = arith.addf %116, %122 : vector<16x256xf32>
    %cst_89 = arith.constant 0.000000e+00 : f32
    %124 = vector.broadcast %cst_89 : f32 to vector<16x256xf32>
    %125 = arith.maximumf %123, %124 : vector<16x256xf32>
    %c0_90 = arith.constant 0 : index
    %c0_91 = arith.constant 0 : index
    %126 = vector.load %arg7[%c0_90, %c0_91] : memref<64x16xf32, #tpu.memory_space<vmem>>, vector<64x16xf32>
    %cst_92 = arith.constant dense<0.000000e+00> : vector<64x256xf32>
    %127 = tpu.matmul %126, %125, %cst_92 {dimension_numbers = #tpu.dot_dimension_numbers<[1], [0], [0], [1], [0, 0, 1, 1], [], []>} : vector<64x16xf32>, vector<16x256xf32>, vector<64x256xf32> -> vector<64x256xf32>
    %c0_93 = arith.constant 0 : index
    %c0_94 = arith.constant 0 : index
    %128 = vector.load %arg8[%c0_93, %c0_94] : memref<64x1xf32, #tpu.memory_space<vmem>>, vector<64x1xf32>
    %129 = vector.broadcast %128 : vector<64x1xf32> to vector<64x256xf32>
    %130 = arith.addf %127, %129 : vector<64x256xf32>
    %cst_95 = arith.constant 0.000000e+00 : f32
    %131 = vector.broadcast %cst_95 : f32 to vector<64x256xf32>
    %132 = arith.maximumf %130, %131 : vector<64x256xf32>
    %133 = vector.extract_strided_slice %132 {offsets = [0, 0], sizes = [16, 256], strides = [1, 1]} : vector<64x256xf32> to vector<16x256xf32>
    %134 = vector.extract_strided_slice %132 {offsets = [16, 0], sizes = [16, 256], strides = [1, 1]} : vector<64x256xf32> to vector<16x256xf32>
    %135 = vector.extract_strided_slice %132 {offsets = [32, 0], sizes = [16, 256], strides = [1, 1]} : vector<64x256xf32> to vector<16x256xf32>
    %136 = vector.extract_strided_slice %132 {offsets = [48, 0], sizes = [16, 256], strides = [1, 1]} : vector<64x256xf32> to vector<16x256xf32>
    %137 = arith.subf %133, %134 : vector<16x256xf32>
    %138 = arith.subf %137, %135 : vector<16x256xf32>
    %139 = arith.addf %138, %136 : vector<16x256xf32>
    %140 = arith.subf %133, %134 : vector<16x256xf32>
    %141 = arith.addf %140, %135 : vector<16x256xf32>
    %142 = arith.subf %141, %136 : vector<16x256xf32>
    %143 = arith.addf %133, %134 : vector<16x256xf32>
    %144 = arith.subf %143, %135 : vector<16x256xf32>
    %145 = arith.subf %144, %136 : vector<16x256xf32>
    %146 = arith.addf %133, %134 : vector<16x256xf32>
    %147 = arith.addf %146, %135 : vector<16x256xf32>
    %148 = arith.addf %147, %136 : vector<16x256xf32>
    %149 = arith.addf %139, %145 : vector<16x256xf32>
    %150 = arith.addf %149, %142 : vector<16x256xf32>
    %151 = arith.addf %150, %148 : vector<16x256xf32>
    %cst_96 = arith.constant dense<0.000000e+00> : vector<16xf32>
    %152 = vector.multi_reduction <add>, %151, %cst_96 [1] : vector<16x256xf32> to vector<16xf32>
    %153 = vector.shape_cast %152 : vector<16xf32> to vector<16x1xf32>
    %cst_97 = arith.constant 9.765625E-4 : f32
    %154 = vector.broadcast %cst_97 : f32 to vector<16x1xf32>
    %155 = arith.mulf %153, %154 : vector<16x1xf32>
    %c0_98 = arith.constant 0 : index
    %c0_99 = arith.constant 0 : index
    %156 = vector.load %arg9[%c0_98, %c0_99] : memref<4x16xf32, #tpu.memory_space<vmem>>, vector<4x16xf32>
    %cst_100 = arith.constant dense<0.000000e+00> : vector<4x1xf32>
    %157 = tpu.matmul %156, %155, %cst_100 {dimension_numbers = #tpu.dot_dimension_numbers<[1], [0], [0], [1], [0, 0, 1, 1], [], []>} : vector<4x16xf32>, vector<16x1xf32>, vector<4x1xf32> -> vector<4x1xf32>
    %c0_101 = arith.constant 0 : index
    %c0_102 = arith.constant 0 : index
    %158 = vector.load %arg10[%c0_101, %c0_102] : memref<4x1xf32, #tpu.memory_space<vmem>>, vector<4x1xf32>
    %159 = arith.addf %157, %158 : vector<4x1xf32>
    %cst_103 = arith.constant 0.000000e+00 : f32
    %160 = vector.broadcast %cst_103 : f32 to vector<4x1xf32>
    %161 = arith.maximumf %159, %160 : vector<4x1xf32>
    %c0_104 = arith.constant 0 : index
    %c0_105 = arith.constant 0 : index
    %162 = vector.load %arg11[%c0_104, %c0_105] : memref<16x4xf32, #tpu.memory_space<vmem>>, vector<16x4xf32>
    %cst_106 = arith.constant dense<0.000000e+00> : vector<16x1xf32>
    %163 = tpu.matmul %162, %161, %cst_106 {dimension_numbers = #tpu.dot_dimension_numbers<[1], [0], [0], [1], [0, 0, 1, 1], [], []>} : vector<16x4xf32>, vector<4x1xf32>, vector<16x1xf32> -> vector<16x1xf32>
    %c0_107 = arith.constant 0 : index
    %c0_108 = arith.constant 0 : index
    %164 = vector.load %arg12[%c0_107, %c0_108] : memref<16x1xf32, #tpu.memory_space<vmem>>, vector<16x1xf32>
    %165 = arith.addf %163, %164 : vector<16x1xf32>
    %cst_109 = arith.constant 0.000000e+00 : f32
    %166 = vector.broadcast %cst_109 : f32 to vector<16x1xf32>
    %167 = arith.subf %166, %165 : vector<16x1xf32>
    %168 = math.exp %167 : vector<16x1xf32>
    %cst_110 = arith.constant 1.000000e+00 : f32
    %169 = vector.broadcast %cst_110 : f32 to vector<16x1xf32>
    %170 = arith.addf %169, %168 : vector<16x1xf32>
    %cst_111 = arith.constant 1.000000e+00 : f32
    %171 = vector.broadcast %cst_111 : f32 to vector<16x1xf32>
    %172 = arith.divf %171, %170 : vector<16x1xf32>
    %173 = vector.broadcast %172 : vector<16x1xf32> to vector<16x256xf32>
    %174 = arith.mulf %139, %173 : vector<16x256xf32>
    %c0_112 = arith.constant 0 : index
    %c0_113 = arith.constant 0 : index
    %c0_114 = arith.constant 0 : index
    %c0_115 = arith.constant 0 : index
    %c0_116 = arith.constant 0 : index
    %175 = vector.load %arg13[%c0_112, %c0_113, %c0_114, %c0_115, %c0_116] : memref<1x2x2x16x256xf32, #tpu.memory_space<vmem>>, vector<1x1x1x16x256xf32>
    %176 = vector.shape_cast %175 : vector<1x1x1x16x256xf32> to vector<16x256xf32>
    %177 = vector.shape_cast %174 : vector<16x256xf32> to vector<1x1x1x16x256xf32>
    tpu.vector_store %arg13[%c0_112, %c0_113, %c0_114, %c0_115, %c0_116], %177 {strides = array<i32>} : memref<1x2x2x16x256xf32, #tpu.memory_space<vmem>>, vector<1x1x1x16x256xf32>,
    %178 = vector.broadcast %172 : vector<16x1xf32> to vector<16x256xf32>
    %179 = arith.mulf %142, %178 : vector<16x256xf32>
    %c0_117 = arith.constant 0 : index
    %c1_118 = arith.constant 1 : index
    %c0_119 = arith.constant 0 : index
    %c0_120 = arith.constant 0 : index
    %c0_121 = arith.constant 0 : index
    %180 = vector.load %arg13[%c0_117, %c1_118, %c0_119, %c0_120, %c0_121] : memref<1x2x2x16x256xf32, #tpu.memory_space<vmem>>, vector<1x1x1x16x256xf32>
    %181 = vector.shape_cast %180 : vector<1x1x1x16x256xf32> to vector<16x256xf32>
    %182 = vector.shape_cast %179 : vector<16x256xf32> to vector<1x1x1x16x256xf32>
    tpu.vector_store %arg13[%c0_117, %c1_118, %c0_119, %c0_120, %c0_121], %182 {strides = array<i32>} : memref<1x2x2x16x256xf32, #tpu.memory_space<vmem>>, vector<1x1x1x16x256xf32>,
    %183 = vector.broadcast %172 : vector<16x1xf32> to vector<16x256xf32>
    %184 = arith.mulf %145, %183 : vector<16x256xf32>
    %c0_122 = arith.constant 0 : index
    %c0_123 = arith.constant 0 : index
    %c1_124 = arith.constant 1 : index
    %c0_125 = arith.constant 0 : index
    %c0_126 = arith.constant 0 : index
    %185 = vector.load %arg13[%c0_122, %c0_123, %c1_124, %c0_125, %c0_126] : memref<1x2x2x16x256xf32, #tpu.memory_space<vmem>>, vector<1x1x1x16x256xf32>
    %186 = vector.shape_cast %185 : vector<1x1x1x16x256xf32> to vector<16x256xf32>
    %187 = vector.shape_cast %184 : vector<16x256xf32> to vector<1x1x1x16x256xf32>
    tpu.vector_store %arg13[%c0_122, %c0_123, %c1_124, %c0_125, %c0_126], %187 {strides = array<i32>} : memref<1x2x2x16x256xf32, #tpu.memory_space<vmem>>, vector<1x1x1x16x256xf32>,
    %188 = vector.broadcast %172 : vector<16x1xf32> to vector<16x256xf32>
    %189 = arith.mulf %148, %188 : vector<16x256xf32>
    %c0_127 = arith.constant 0 : index
    %c1_128 = arith.constant 1 : index
    %c1_129 = arith.constant 1 : index
    %c0_130 = arith.constant 0 : index
    %c0_131 = arith.constant 0 : index
    %190 = vector.load %arg13[%c0_127, %c1_128, %c1_129, %c0_130, %c0_131] : memref<1x2x2x16x256xf32, #tpu.memory_space<vmem>>, vector<1x1x1x16x256xf32>
    %191 = vector.shape_cast %190 : vector<1x1x1x16x256xf32> to vector<16x256xf32>
    %192 = vector.shape_cast %189 : vector<16x256xf32> to vector<1x1x1x16x256xf32>
    tpu.vector_store %arg13[%c0_127, %c1_128, %c1_129, %c0_130, %c0_131], %192 {strides = array<i32>} : memref<1x2x2x16x256xf32, #tpu.memory_space<vmem>>, vector<1x1x1x16x256xf32>,
    return
  }
  func.func @transform_0(%arg0: i32) -> (i32, i32, i32) {
    %c0_i32 = arith.constant 0 : i32
    %c0_i32_0 = arith.constant 0 : i32
    %c0_i32_1 = arith.constant 0 : i32
    return %arg0, %c0_i32, %c0_i32_0 : i32, i32, i32
  }
  func.func @transform_1(%arg0: i32) -> (i32, i32) {
    %c0_i32 = arith.constant 0 : i32
    %c0_i32_0 = arith.constant 0 : i32
    %c0_i32_1 = arith.constant 0 : i32
    return %c0_i32, %c0_i32_0 : i32, i32
  }
  func.func @transform_2(%arg0: i32) -> (i32, i32) {
    %c0_i32 = arith.constant 0 : i32
    %c0_i32_0 = arith.constant 0 : i32
    %c0_i32_1 = arith.constant 0 : i32
    return %c0_i32, %c0_i32_0 : i32, i32
  }
  func.func @transform_3(%arg0: i32) -> (i32, i32, i32) {
    %c0_i32 = arith.constant 0 : i32
    %c0_i32_0 = arith.constant 0 : i32
    %c0_i32_1 = arith.constant 0 : i32
    %c0_i32_2 = arith.constant 0 : i32
    return %c0_i32, %c0_i32_0, %c0_i32_1 : i32, i32, i32
  }
  func.func @transform_4(%arg0: i32) -> (i32, i32) {
    %c0_i32 = arith.constant 0 : i32
    %c0_i32_0 = arith.constant 0 : i32
    %c0_i32_1 = arith.constant 0 : i32
    return %c0_i32, %c0_i32_0 : i32, i32
  }
  func.func @transform_5(%arg0: i32) -> (i32, i32, i32) {
    %c0_i32 = arith.constant 0 : i32
    %c0_i32_0 = arith.constant 0 : i32
    %c0_i32_1 = arith.constant 0 : i32
    %c0_i32_2 = arith.constant 0 : i32
    return %c0_i32, %c0_i32_0, %c0_i32_1 : i32, i32, i32
  }
  func.func @transform_6(%arg0: i32) -> (i32, i32) {
    %c0_i32 = arith.constant 0 : i32
    %c0_i32_0 = arith.constant 0 : i32
    %c0_i32_1 = arith.constant 0 : i32
    return %c0_i32, %c0_i32_0 : i32, i32
  }
  func.func @transform_7(%arg0: i32) -> (i32, i32) {
    %c0_i32 = arith.constant 0 : i32
    %c0_i32_0 = arith.constant 0 : i32
    %c0_i32_1 = arith.constant 0 : i32
    return %c0_i32, %c0_i32_0 : i32, i32
  }
  func.func @transform_8(%arg0: i32) -> (i32, i32) {
    %c0_i32 = arith.constant 0 : i32
    %c0_i32_0 = arith.constant 0 : i32
    %c0_i32_1 = arith.constant 0 : i32
    return %c0_i32, %c0_i32_0 : i32, i32
  }
  func.func @transform_9(%arg0: i32) -> (i32, i32) {
    %c0_i32 = arith.constant 0 : i32
    %c0_i32_0 = arith.constant 0 : i32
    %c0_i32_1 = arith.constant 0 : i32
    return %c0_i32, %c0_i32_0 : i32, i32
  }
  func.func @transform_10(%arg0: i32) -> (i32, i32) {
    %c0_i32 = arith.constant 0 : i32
    %c0_i32_0 = arith.constant 0 : i32
    %c0_i32_1 = arith.constant 0 : i32
    return %c0_i32, %c0_i32_0 : i32, i32
  }
  func.func @transform_11(%arg0: i32) -> (i32, i32) {
    %c0_i32 = arith.constant 0 : i32
    %c0_i32_0 = arith.constant 0 : i32
    %c0_i32_1 = arith.constant 0 : i32
    return %c0_i32, %c0_i32_0 : i32, i32
  }
  func.func @transform_12(%arg0: i32) -> (i32, i32, i32, i32, i32) {
    %c0_i32 = arith.constant 0 : i32
    %c0_i32_0 = arith.constant 0 : i32
    %c0_i32_1 = arith.constant 0 : i32
    %c0_i32_2 = arith.constant 0 : i32
    %c0_i32_3 = arith.constant 0 : i32
    return %arg0, %c0_i32, %c0_i32_0, %c0_i32_1, %c0_i32_2 : i32, i32, i32, i32, i32
  }
}

</mosaic_0001>

<llo_original>
// kernel: unetdec_forward.1
$region0: #{unetdec_forward.1}
  #allocation0 [shape = 'u32[]', space=smem, size = 0x4, offset = 0x4, fixed_abs, tag = 'smem constant byte address 0x4 - core index']
  #allocation1 [shape = 'u32[144,128]{1,0:T(1,128)}', space=vmem, size = 0x12000, scoped, tag = 'internal scratch']
  #allocation2 [shape = 'f32[16,290]{1,0:T(8,128)}', space=vmem, size = 0x6000, scoped, tag = 'scratch operand']
  %s0 = inlined_call_operand.vmem [shape: f32[2,8,290], index: 0, kind: input, shape index: {}]
  %s1 = inlined_call_operand.vmem [shape: f32[1,256], index: 1, kind: input, shape index: {}]
  %s2 = inlined_call_operand.vmem [shape: f32[1,256], index: 2, kind: input, shape index: {}]
  %s3 = inlined_call_operand.vmem [shape: f32[9,16,8], index: 3, kind: input, shape index: {}]
  %s4 = inlined_call_operand.vmem [shape: f32[16,1], index: 4, kind: input, shape index: {}]
  %s5 = inlined_call_operand.vmem [shape: f32[9,16,16], index: 5, kind: input, shape index: {}]
  %s6 = inlined_call_operand.vmem [shape: f32[64,16], index: 6, kind: input, shape index: {}]
  %s7 = inlined_call_operand.vmem [shape: f32[64,1], index: 7, kind: input, shape index: {}]
  %s8 = inlined_call_operand.vmem [shape: f32[4,16], index: 8, kind: input, shape index: {}]
  %s9 = inlined_call_operand.vmem [shape: f32[4,1], index: 9, kind: input, shape index: {}]
  %s10 = inlined_call_operand.vmem [shape: f32[16,4], index: 10, kind: input, shape index: {}]
  %s11 = inlined_call_operand.vmem [shape: f32[16,1], index: 11, kind: input, shape index: {}]
  %s12 = inlined_call_operand.vmem [shape: f32[2,2,2,16,256], index: 12, kind: output, shape index: {}]
  %s13 = sld [smem:[#allocation0]]
  $region81: #{unetdec_forward.1} parent=0
    _
  %s15 = ssub.s32 1, %s13
  %s16 = scalar_select 0, %s15, %s13
  loop: start=0, step=1, limit=4
  $region2: #{unetdec_forward.1} parent=0 // loop_pre_header
    _
  $region3: #{unetdec_forward.1} parent=0 // loop_header
    %s18 = sphi 0, %s22
    %p19 = scmp.ge.s32.totalorder %s18, 4
    %s28 = sphi 0, %s30
    %s31 = sphi 0, %s28
    %s32 = sphi 0, %s31
    %s48 = sphi 0, %s32
    %s52 = sphi 0, %s52
    %s54 = sphi 0, %s52
    %s55 = sphi 0, %s54
    %s69 = sphi 0, %s55
    %s73 = sphi 0, %s73
    %s75 = sphi 0, %s73
    %s76 = sphi 0, %s75
    %s90 = sphi 0, %s76
    %s94 = sphi 0, %s94
    %s96 = sphi 0, %s94
    %s97 = sphi 0, %s96
    %s111 = sphi 0, %s97
    %s115 = sphi 0, %s115
    %s117 = sphi 0, %s115
    %s118 = sphi 0, %s117
    %s132 = sphi 0, %s118
    %s136 = sphi 0, %s136
    %s138 = sphi 0, %s136
    %s139 = sphi 0, %s138
    %s153 = sphi 0, %s139
    %s157 = sphi 0, %s157
    %s159 = sphi 0, %s157
    %s160 = sphi 0, %s159
    %s174 = sphi 0, %s160
    %s178 = sphi 0, %s178
    %s180 = sphi 0, %s178
    %s181 = sphi 0, %s180
    %s195 = sphi 0, %s181
    %s199 = sphi 0, %s199
    %s201 = sphi 0, %s199
    %s202 = sphi 0, %s201
    %s216 = sphi 0, %s202
    %s220 = sphi 0, %s220
    %s222 = sphi 0, %s220
    %s223 = sphi 0, %s222
    %s237 = sphi 0, %s223
    %s241 = sphi 0, %s241
    %s243 = sphi 0, %s241
    %s244 = sphi 0, %s243
    %s258 = sphi 0, %s244
    %s262 = sphi 0, %s262
    %s264 = sphi 0, %s262
    %s265 = sphi 0, %s264
    %s279 = sphi 0, %s265
    %s285 = sphi 0, %s287
    %s288 = sphi 0, %s285
    %s289 = sphi 0, %s288
    %s305 = sphi 0, %s289
  $region4: #{unetdec_forward.1} parent=0 // loop_header_branch
    %21 = sbr.rel (%p19) target = $region8
  $region5: #{unetdec_forward.1} parent=0 // loop_body
    %s23 = ssub.s32 %s18, 1
    %s24 = ssub.s32 %s18, 2
    %s25 = sadd.s32 %s18, 1
    %s26 = ssub.s32 %s18, %s25
    %p27 = scmp.eq.s32.totalorder %s26, 0
    %s29 = sadd.s32 %s28, 1
    %s30 = scalar_select %p27, %s28, %s29
    %p33 = pneg %p27
    %p34 = scmp.eq.s32.totalorder %s18, 1
    %p35 = por %p33, %p34
    %p36 = scmp.ne.s32.totalorder %s28, %s31
    %p37 = scmp.eq.s32.totalorder %s18, 0
    %p38 = por %p36, %p37
    %p39 = scmp.ne.s32.totalorder %s28, %s31
    %p40 = scmp.eq.s32.totalorder %s23, 1
    %p41 = por %p39, %p40
    %p42 = scmp.ne.s32.totalorder %s31, %s32
    %p43 = scmp.eq.s32.totalorder %s23, 0
    %p44 = por %p42, %p43
    %p45 = scmp.ne.s32.totalorder %s31, %s32
    %p46 = scmp.eq.s32.totalorder %s24, 1
    %p47 = por %p45, %p46
    %p49 = scmp.ne.s32.totalorder %s32, %s48
    %p50 = scmp.eq.s32.totalorder %s24, 0
    %p51 = por %p49, %p50
    %s53 = sadd.s32 %s52, 1
    %p56 = scmp.eq.s32.totalorder %s18, 1
    %p57 = scmp.ne.s32.totalorder %s52, %s54
    %p58 = scmp.eq.s32.totalorder %s18, 0
    %p59 = por %p57, %p58
    %p60 = scmp.ne.s32.totalorder %s52, %s54
    %p61 = scmp.eq.s32.totalorder %s23, 1
    %p62 = por %p60, %p61
    %p63 = scmp.ne.s32.totalorder %s54, %s55
    %p64 = scmp.eq.s32.totalorder %s23, 0
    %p65 = por %p63, %p64
    %p66 = scmp.ne.s32.totalorder %s54, %s55
    %p67 = scmp.eq.s32.totalorder %s24, 1
    %p68 = por %p66, %p67
    %p70 = scmp.ne.s32.totalorder %s55, %s69
    %p71 = scmp.eq.s32.totalorder %s24, 0
    %p72 = por %p70, %p71
    %s74 = sadd.s32 %s73, 1
    %p77 = scmp.eq.s32.totalorder %s18, 1
    %p78 = scmp.ne.s32.totalorder %s73, %s75
    %p79 = scmp.eq.s32.totalorder %s18, 0
    %p80 = por %p78, %p79
    %p81 = scmp.ne.s32.totalorder %s73, %s75
    %p82 = scmp.eq.s32.totalorder %s23, 1
    %p83 = por %p81, %p82
    %p84 = scmp.ne.s32.totalorder %s75, %s76
    %p85 = scmp.eq.s32.totalorder %s23, 0
    %p86 = por %p84, %p85
    %p87 = scmp.ne.s32.totalorder %s75, %s76
    %p88 = scmp.eq.s32.totalorder %s24, 1
    %p89 = por %p87, %p88
    %p91 = scmp.ne.s32.totalorder %s76, %s90
    %p92 = scmp.eq.s32.totalorder %s24, 0
    %p93 = por %p91, %p92
    %s95 = sadd.s32 %s94, 1
    %p98 = scmp.eq.s32.totalorder %s18, 1
    %p99 = scmp.ne.s32.totalorder %s94, %s96
    %p100 = scmp.eq.s32.totalorder %s18, 0
    %p101 = por %p99, %p100
    %p102 = scmp.ne.s32.totalorder %s94, %s96
    %p103 = scmp.eq.s32.totalorder %s23, 1
    %p104 = por %p102, %p103
    %p105 = scmp.ne.s32.totalorder %s96, %s97
    %p106 = scmp.eq.s32.totalorder %s23, 0
    %p107 = por %p105, %p106
    %p108 = scmp.ne.s32.totalorder %s96, %s97
    %p109 = scmp.eq.s32.totalorder %s24, 1
    %p110 = por %p108, %p109
    %p112 = scmp.ne.s32.totalorder %s97, %s111
    %p113 = scmp.eq.s32.totalorder %s24, 0
    %p114 = por %p112, %p113
    %s116 = sadd.s32 %s115, 1
    %p119 = scmp.eq.s32.totalorder %s18, 1
    %p120 = scmp.ne.s32.totalorder %s115, %s117
    %p121 = scmp.eq.s32.totalorder %s18, 0
    %p122 = por %p120, %p121
    %p123 = scmp.ne.s32.totalorder %s115, %s117
    %p124 = scmp.eq.s32.totalorder %s23, 1
    %p125 = por %p123, %p124
    %p126 = scmp.ne.s32.totalorder %s117, %s118
    %p127 = scmp.eq.s32.totalorder %s23, 0
    %p128 = por %p126, %p127
    %p129 = scmp.ne.s32.totalorder %s117, %s118
    %p130 = scmp.eq.s32.totalorder %s24, 1
    %p131 = por %p129, %p130
    %p133 = scmp.ne.s32.totalorder %s118, %s132
    %p134 = scmp.eq.s32.totalorder %s24, 0
    %p135 = por %p133, %p134
    %s137 = sadd.s32 %s136, 1
    %p140 = scmp.eq.s32.totalorder %s18, 1
    %p141 = scmp.ne.s32.totalorder %s136, %s138
    %p142 = scmp.eq.s32.totalorder %s18, 0
    %p143 = por %p141, %p142
    %p144 = scmp.ne.s32.totalorder %s136, %s138
    %p145 = scmp.eq.s32.totalorder %s23, 1
    %p146 = por %p144, %p145
    %p147 = scmp.ne.s32.totalorder %s138, %s139
    %p148 = scmp.eq.s32.totalorder %s23, 0
    %p149 = por %p147, %p148
    %p150 = scmp.ne.s32.totalorder %s138, %s139
    %p151 = scmp.eq.s32.totalorder %s24, 1
    %p152 = por %p150, %p151
    %p154 = scmp.ne.s32.totalorder %s139, %s153
    %p155 = scmp.eq.s32.totalorder %s24, 0
    %p156 = por %p154, %p155
    %s158 = sadd.s32 %s157, 1
    %p161 = scmp.eq.s32.totalorder %s18, 1
    %p162 = scmp.ne.s32.totalorder %s157, %s159
    %p163 = scmp.eq.s32.totalorder %s18, 0
    %p164 = por %p162, %p163
    %p165 = scmp.ne.s32.totalorder %s157, %s159
    %p166 = scmp.eq.s32.totalorder %s23, 1
    %p167 = por %p165, %p166
    %p168 = scmp.ne.s32.totalorder %s159, %s160
    %p169 = scmp.eq.s32.totalorder %s23, 0
    %p170 = por %p168, %p169
    %p171 = scmp.ne.s32.totalorder %s159, %s160
    %p172 = scmp.eq.s32.totalorder %s24, 1
    %p173 = por %p171, %p172
    %p175 = scmp.ne.s32.totalorder %s160, %s174
    %p176 = scmp.eq.s32.totalorder %s24, 0
    %p177 = por %p175, %p176
    %s179 = sadd.s32 %s178, 1
    %p182 = scmp.eq.s32.totalorder %s18, 1
    %p183 = scmp.ne.s32.totalorder %s178, %s180
    %p184 = scmp.eq.s32.totalorder %s18, 0
    %p185 = por %p183, %p184
    %p186 = scmp.ne.s32.totalorder %s178, %s180
    %p187 = scmp.eq.s32.totalorder %s23, 1
    %p188 = por %p186, %p187
    %p189 = scmp.ne.s32.totalorder %s180, %s181
    %p190 = scmp.eq.s32.totalorder %s23, 0
    %p191 = por %p189, %p190
    %p192 = scmp.ne.s32.totalorder %s180, %s181
    %p193 = scmp.eq.s32.totalorder %s24, 1
    %p194 = por %p192, %p193
    %p196 = scmp.ne.s32.totalorder %s181, %s195
    %p197 = scmp.eq.s32.totalorder %s24, 0
    %p198 = por %p196, %p197
    %s200 = sadd.s32 %s199, 1
    %p203 = scmp.eq.s32.totalorder %s18, 1
    %p204 = scmp.ne.s32.totalorder %s199, %s201
    %p205 = scmp.eq.s32.totalorder %s18, 0
    %p206 = por %p204, %p205
    %p207 = scmp.ne.s32.totalorder %s199, %s201
    %p208 = scmp.eq.s32.totalorder %s23, 1
    %p209 = por %p207, %p208
    %p210 = scmp.ne.s32.totalorder %s201, %s202
    %p211 = scmp.eq.s32.totalorder %s23, 0
    %p212 = por %p210, %p211
    %p213 = scmp.ne.s32.totalorder %s201, %s202
    %p214 = scmp.eq.s32.totalorder %s24, 1
    %p215 = por %p213, %p214
    %p217 = scmp.ne.s32.totalorder %s202, %s216
    %p218 = scmp.eq.s32.totalorder %s24, 0
    %p219 = por %p217, %p218
    %s221 = sadd.s32 %s220, 1
    %p224 = scmp.eq.s32.totalorder %s18, 1
    %p225 = scmp.ne.s32.totalorder %s220, %s222
    %p226 = scmp.eq.s32.totalorder %s18, 0
    %p227 = por %p225, %p226
    %p228 = scmp.ne.s32.totalorder %s220, %s222
    %p229 = scmp.eq.s32.totalorder %s23, 1
    %p230 = por %p228, %p229
    %p231 = scmp.ne.s32.totalorder %s222, %s223
    %p232 = scmp.eq.s32.totalorder %s23, 0
    %p233 = por %p231, %p232
    %p234 = scmp.ne.s32.totalorder %s222, %s223
    %p235 = scmp.eq.s32.totalorder %s24, 1
    %p236 = por %p234, %p235
    %p238 = scmp.ne.s32.totalorder %s223, %s237
    %p239 = scmp.eq.s32.totalorder %s24, 0
    %p240 = por %p238, %p239
    %s242 = sadd.s32 %s241, 1
    %p245 = scmp.eq.s32.totalorder %s18, 1
    %p246 = scmp.ne.s32.totalorder %s241, %s243
    %p247 = scmp.eq.s32.totalorder %s18, 0
    %p248 = por %p246, %p247
    %p249 = scmp.ne.s32.totalorder %s241, %s243
    %p250 = scmp.eq.s32.totalorder %s23, 1
    %p251 = por %p249, %p250
    %p252 = scmp.ne.s32.totalorder %s243, %s244
    %p253 = scmp.eq.s32.totalorder %s23, 0
    %p254 = por %p252, %p253
    %p255 = scmp.ne.s32.totalorder %s243, %s244
    %p256 = scmp.eq.s32.totalorder %s24, 1
    %p257 = por %p255, %p256
    %p259 = scmp.ne.s32.totalorder %s244, %s258
    %p260 = scmp.eq.s32.totalorder %s24, 0
    %p261 = por %p259, %p260
    %s263 = sadd.s32 %s262, 1
    %p266 = scmp.eq.s32.totalorder %s18, 1
    %p267 = scmp.ne.s32.totalorder %s262, %s264
    %p268 = scmp.eq.s32.totalorder %s18, 0
    %p269 = por %p267, %p268
    %p270 = scmp.ne.s32.totalorder %s262, %s264
    %p271 = scmp.eq.s32.totalorder %s23, 1
    %p272 = por %p270, %p271
    %p273 = scmp.ne.s32.totalorder %s264, %s265
    %p274 = scmp.eq.s32.totalorder %s23, 0
    %p275 = por %p273, %p274
    %p276 = scmp.ne.s32.totalorder %s264, %s265
    %p277 = scmp.eq.s32.totalorder %s24, 1
    %p278 = por %p276, %p277
    %p280 = scmp.ne.s32.totalorder %s265, %s279
    %p281 = scmp.eq.s32.totalorder %s24, 0
    %p282 = por %p280, %p281
    %s283 = ssub.s32 %s18, %s25
    %p284 = scmp.eq.s32.totalorder %s283, 0
    %s286 = sadd.s32 %s285, 1
    %s287 = scalar_select %p284, %s285, %s286
    %p290 = pneg %p284
    %p291 = scmp.eq.s32.totalorder %s18, 1
    %p292 = por %p290, %p291
    %p293 = scmp.ne.s32.totalorder %s285, %s288
    %p294 = scmp.eq.s32.totalorder %s18, 0
    %p295 = por %p293, %p294
    %p296 = scmp.ne.s32.totalorder %s285, %s288
    %p297 = scmp.eq.s32.totalorder %s23, 1
    %p298 = por %p296, %p297
    %p299 = scmp.ne.s32.totalorder %s288, %s289
    %p300 = scmp.eq.s32.totalorder %s23, 0
    %p301 = por %p299, %p300
    %p302 = scmp.ne.s32.totalorder %s288, %s289
    %p303 = scmp.eq.s32.totalorder %s24, 1
    %p304 = por %p302, %p303
    %p306 = scmp.ne.s32.totalorder %s289, %s305
    %p307 = scmp.eq.s32.totalorder %s24, 0
    %p308 = por %p306, %p307
    %p309 = scmp.le.s32.totalorder 1, %s18
    %p310 = scmp.lt.s32.totalorder %s18, 3
    %p311 = pnand %p309, %p310
    %p312 = pneg %p311
    // Predicated region
    $region9: #{unetdec_forward.1} parent=5 // pred_check
      _
    $region10: #{unetdec_forward.1} parent=5 // pred_check_branch
      %314 = sbr.rel (%p311) target = $region12
    $region11: #{unetdec_forward.1} parent=5 // pred_region
      %s315 = ssub.s32 %s18, 1
      // Predicated region
      $region13: #{unetdec_forward.1} parent=11 // pred_check
        %p316 = pneg %p65
      $region14: #{unetdec_forward.1} parent=11 // pred_check_branch
        %318 = sbr.rel (%p316) target = $region16
      $region15: #{unetdec_forward.1} parent=11 // pred_region
        _
      $region16: #{unetdec_forward.1} parent=11 // pred_fallthru
        _
      // Predicated region
      $region17: #{unetdec_forward.1} parent=11 // pred_check
        %p319 = pneg %p86
      $region18: #{unetdec_forward.1} parent=11 // pred_check_branch
        %321 = sbr.rel (%p319) target = $region20
      $region19: #{unetdec_forward.1} parent=11 // pred_region
        _
      $region20: #{unetdec_forward.1} parent=11 // pred_fallthru
        _
      // Predicated region
      $region21: #{unetdec_forward.1} parent=11 // pred_check
        %p322 = pneg %p107
      $region22: #{unetdec_forward.1} parent=11 // pred_check_branch
        %324 = sbr.rel (%p322) target = $region24
      $region23: #{unetdec_forward.1} parent=11 // pred_region
        _
      $region24: #{unetdec_forward.1} parent=11 // pred_fallthru
        _
      // Predicated region
      $region25: #{unetdec_forward.1} parent=11 // pred_check
        %p325 = pneg %p128
      $region26: #{unetdec_forward.1} parent=11 // pred_check_branch
        %327 = sbr.rel (%p325) target = $region28
      $region27: #{unetdec_forward.1} parent=11 // pred_region
        _
      $region28: #{unetdec_forward.1} parent=11 // pred_fallthru
        _
      // Predicated region
      $region29: #{unetdec_forward.1} parent=11 // pred_check
        %p328 = pneg %p149
      $region30: #{unetdec_forward.1} parent=11 // pred_check_branch
        %330 = sbr.rel (%p328) target = $region32
      $region31: #{unetdec_forward.1} parent=11 // pred_region
        _
      $region32: #{unetdec_forward.1} parent=11 // pred_fallthru
        _
      // Predicated region
      $region33: #{unetdec_forward.1} parent=11 // pred_check
        %p331 = pneg %p170
      $region34: #{unetdec_forward.1} parent=11 // pred_check_branch
        %333 = sbr.rel (%p331) target = $region36
      $region35: #{unetdec_forward.1} parent=11 // pred_region
        _
      $region36: #{unetdec_forward.1} parent=11 // pred_fallthru
        _
      // Predicated region
      $region37: #{unetdec_forward.1} parent=11 // pred_check
        %p334 = pneg %p191
      $region38: #{unetdec_forward.1} parent=11 // pred_check_branch
        %336 = sbr.rel (%p334) target = $region40
      $region39: #{unetdec_forward.1} parent=11 // pred_region
        _
      $region40: #{unetdec_forward.1} parent=11 // pred_fallthru
        _
      // Predicated region
      $region41: #{unetdec_forward.1} parent=11 // pred_check
        %p337 = pneg %p212
      $region42: #{unetdec_forward.1} parent=11 // pred_check_branch
        %339 = sbr.rel (%p337) target = $region44
      $region43: #{unetdec_forward.1} parent=11 // pred_region
        _
      $region44: #{unetdec_forward.1} parent=11 // pred_fallthru
        _
      // Predicated region
      $region45: #{unetdec_forward.1} parent=11 // pred_check
        %p340 = pneg %p233
      $region46: #{unetdec_forward.1} parent=11 // pred_check_branch
        %342 = sbr.rel (%p340) target = $region48
      $region47: #{unetdec_forward.1} parent=11 // pred_region
        _
      $region48: #{unetdec_forward.1} parent=11 // pred_fallthru
        _
      // Predicated region
      $region49: #{unetdec_forward.1} parent=11 // pred_check
        %p343 = pneg %p254
      $region50: #{unetdec_forward.1} parent=11 // pred_check_branch
        %345 = sbr.rel (%p343) target = $region52
      $region51: #{unetdec_forward.1} parent=11 // pred_region
        _
      $region52: #{unetdec_forward.1} parent=11 // pred_fallthru
        _
      // Predicated region
      $region53: #{unetdec_forward.1} parent=11 // pred_check
        %p346 = pneg %p275
      $region54: #{unetdec_forward.1} parent=11 // pred_check_branch
        %348 = sbr.rel (%p346) target = $region56
      $region55: #{unetdec_forward.1} parent=11 // pred_region
        _
      $region56: #{unetdec_forward.1} parent=11 // pred_fallthru
        _
    $region12: #{unetdec_forward.1} parent=5 // pred_fallthru
      _
    %p349 = scmp.lt.s32.totalorder %s18, 2
    // Predicated region
    $region57: #{unetdec_forward.1} parent=5 // pred_check
      %p350 = pneg %p349
    $region58: #{unetdec_forward.1} parent=5 // pred_check_branch
      %352 = sbr.rel (%p350) target = $region60
    $region59: #{unetdec_forward.1} parent=5 // pred_region
      // Predicated region
      $region61: #{unetdec_forward.1} parent=59 // pred_check
        %p353 = pneg %p38
      $region62: #{unetdec_forward.1} parent=59 // pred_check_branch
        %355 = sbr.rel (%p353) target = $region64
      $region63: #{unetdec_forward.1} parent=59 // pred_region
        %p356 = scmp.lt.s32.totalorder %s18, 1
        %s357 = scalar_select %p356, %s18, 1
        %s358 = smul.addr %s357, 3
        %s359 = smul.addr %s358, 8
        %s360 = scalar_lea.vmem %s0, %s359
      $region64: #{unetdec_forward.1} parent=59 // pred_fallthru
        _
    $region60: #{unetdec_forward.1} parent=5 // pred_fallthru
      _
    %p361 = scmp.le.s32.totalorder 1, %s18
    %p362 = scmp.lt.s32.totalorder %s18, 3
    %p363 = pnand %p361, %p362
    %p364 = pneg %p363
    // Predicated region
    $region65: #{unetdec_forward.1} parent=5 // pred_check
      _
    $region66: #{unetdec_forward.1} parent=5 // pred_check_branch
      %366 = sbr.rel (%p363) target = $region68
    $region67: #{unetdec_forward.1} parent=5 // pred_region
      %s367 = ssub.s32 %s18, 1
      %p368 = scmp.lt.s32.totalorder %s23, 1
      %s369 = scalar_select %p368, %s23, 1
      %s370 = smul.addr %s369, 3
      %s371 = smul.addr %s370, 8
      %s372 = scalar_lea.vmem %s0, %s371
      %p373 = pneg %p44
      %p374 = pneg %p41
      %p375 = pneg %p65
      %p376 = pneg %p62
      %p377 = pneg %p86
      %p378 = pneg %p83
      %p379 = pneg %p107
      %p380 = pneg %p104
      %p381 = pneg %p128
      %p382 = pneg %p125
      %p383 = pneg %p149
      %p384 = pneg %p146
      %p385 = pneg %p170
      %p386 = pneg %p167
      %p387 = pneg %p191
      %p388 = pneg %p188
      %p389 = pneg %p212
      %p390 = pneg %p209
      %p391 = pneg %p233
      %p392 = pneg %p230
      %p393 = pneg %p254
      %p394 = pneg %p251
      %p395 = pneg %p275
      %p396 = pneg %p272
      %p397 = pneg %p301
      %p398 = pneg %p298
      %p399 = scmp.lt.s32.totalorder %s23, 1
      %s400 = scalar_select %p399, %s23, 1
      %s401 = smul.addr %s400, 16
      %s402 = smul.addr %s401, 8
      %s403 = scalar_lea.vmem %s12, %s402
      %p404 = scmp.lt.s32.totalorder %s23, 1
      %s405 = scalar_select %p404, %s23, 1
      %s406 = smul.addr %s405, 3
      %s407 = smul.addr %s406, 8
      %s408 = scalar_lea.vmem %s0, %s407
      %p409 = scmp.lt.s32.totalorder %s23, 1
      %s410 = scalar_select %p409, %s23, 1
      %s411 = smul.addr %s410, 16
      %s412 = smul.addr %s411, 8
      %s413 = scalar_lea.vmem %s12, %s412
      %v414 = vld [vmem:[%s408] sm:$0xff]
      %v415 = vld [vmem:[%s408 + $0x8] sm:$0xff]
      %v416 = vld [vmem:[%s408 + $0x10] sm:$0xff]
      %v417 = vld [vmem:[%s1] sm:$0x3]
      %v418 = vld [vmem:[%s2] sm:$0x3]
      %v420 = vlaneseq
      %v421 = vshrl.u32 %v420, 7
      %v422 = vsub.s32 0, %v421
      %v423 = vrot.slane %v417, %v422
      %v424 = vlaneseq
      %v425 = vshrl.u32 %v424, 7
      %v426 = vsub.s32 1, %v425
      %v427 = vrot.slane %v417, %v426
      %v430 = vmul.f32 %v414, %v423
      %v431 = vmul.f32 %v415, %v427
      %v432 = vld [vmem:[%s3] sm:$0xff]
      %v433 = vld [vmem:[%s3 + $0x8] sm:$0xff]
      %s434 = scalar_lea.vmem %s3, 16
      %v435 = vld [vmem:[%s434] sm:$0xff]
      %v436 = vld [vmem:[%s434 + $0x8] sm:$0xff]
      %440 = vrot.lane.b32.xlu0 %v414, 127
      %v441 = vpop.permute.xlu0 %440
      %442 = vrot.lane.b32.xlu0 %v415, 127
      %v443 = vpop.permute.xlu0 %442
      %444 = vrot.lane.b32.xlu0 %v416, 127
      %v445 = vpop.permute.xlu0 %444
      %vm446 = vcmask 1039360
      %v447 = vsel %vm446, %v441, %v443
      %v448 = vsel %vm446, %v443, %v445
      %vm451 = vcmask 64512
      %v453 = vsel %vm451, %v435, 0
      %v456 = vsel %vm451, %v436, 0
      %458 = vmatprep.subr.mxu0 0.0
      %459 = vmatpush1.msra.mxu0 0.0
      %460 = vmatprep.subr.mxu0 0.0
      %461 = vmatpush1.msra.mxu0 0.0
      %462 = vmatprep.subr.mxu0 0.0
      %463 = vmatpush1.msra.mxu0 0.0
      %464 = vmatprep.subr.mxu0 0.0
      %465 = vmatpush1.msra.mxu0 0.0
      %466 = vmatprep.subr.mxu0 0.0
      %467 = vmatpush1.msra.mxu0 0.0
      %468 = vmatprep.subr.mxu0 0.0
      %469 = vmatpush1.msra.mxu0 0.0
      %470 = vmatprep.subr.mxu0 0.0
      %471 = vmatpush1.msra.mxu0 0.0
      %472 = vmatprep.subr.mxu0 0.0
      %473 = vmatpush1.msra.mxu0 0.0
      %474 = vmatprep.subr.mxu0 0.0
      %475 = vmatpush1.msra.mxu0 0.0
      %476 = vmatprep.subr.mxu0 0.0
      %477 = vmatpush1.msra.mxu0 0.0
      %478 = vmatprep.subr.mxu0 0.0
      %479 = vmatpush1.msra.mxu0 0.0
      %480 = vmatprep.subr.mxu0 0.0
      %481 = vmatpush1.msra.mxu0 0.0
      %482 = vmatprep.subr.mxu0 0.0
      %483 = vmatpush1.msra.mxu0 0.0
      %484 = vmatprep.subr.mxu0 0.0
      %485 = vmatpush1.msra.mxu0 0.0
      %486 = vmatprep.subr.mxu0 0.0
      %487 = vmatpush1.msra.mxu0 0.0
      %488 = vmatprep.subr.mxu0 %v448
      %489 = vmatpush1.msra.mxu0 %v447
      %490 = vmatprep.subr.mxu0 0.0
      %491 = vmatpush2.msra.mxu0 0.0
      %492 = vmatprep.subr.mxu0 0.0
      %493 = vmatpush2.msra.mxu0 0.0
      %494 = vmatprep.subr.mxu0 0.0
      %495 = vmatpush2.msra.mxu0 0.0
      %496 = vmatprep.subr.mxu0 0.0
      %497 = vmatpush2.msra.mxu0 0.0
      %498 = vmatprep.subr.mxu0 0.0
      %499 = vmatpush2.msra.mxu0 0.0
      %500 = vmatprep.subr.mxu0 0.0
      %501 = vmatpush2.msra.mxu0 0.0
      %502 = vmatprep.subr.mxu0 0.0
      %503 = vmatpush2.msra.mxu0 0.0
      %504 = vmatprep.subr.mxu0 0.0
      %505 = vmatpush2.msra.mxu0 0.0
      %506 = vmatprep.subr.mxu0 0.0
      %507 = vmatpush2.msra.mxu0 0.0
      %508 = vmatprep.subr.mxu0 0.0
      %509 = vmatpush2.msra.mxu0 0.0
      %510 = vmatprep.subr.mxu0 0.0
      %511 = vmatpush2.msra.mxu0 0.0
      %512 = vmatprep.subr.mxu0 0.0
      %513 = vmatpush2.msra.mxu0 0.0
      %514 = vmatprep.subr.mxu0 0.0
      %515 = vmatpush2.msra.mxu0 0.0
      %516 = vmatprep.subr.mxu0 0.0
      %517 = vmatpush2.msra.mxu0 0.0
      %518 = vmatprep.subr.mxu0 0.0
      %519 = vmatpush2.msra.mxu0 0.0
      %520 = vmatprep.subr.mxu0 0.0
      %521 = vmatpush2.msra.mxu0 0.0
      %522 = vmatprep.mubr.f32.mxu0 0.0
      %523 = vmatmul.mubr.f32.gmra.mxu0 %v453
      %v524 = vpop.f32.mrf.mxu0
      %v525 = vadd.f32 0.0, %v524
      %v526 = vpop.f32.mrf.mxu0
      %v527 = vadd.f32 0.0, %v526
      %528 = vmatprep.mubr.f32.mxu0 0.0
      %529 = vmatmul.mubr.f32.gmra.mxu0 %v456
      %v530 = vpop.f32.mrf.mxu0
      %v531 = vadd.f32 0.0, %v530
      %v532 = vpop.f32.mrf.mxu0
      %v533 = vadd.f32 0.0, %v532
      %534 = vdwg.mxu0
      %v536 = vsel %vm451, %v432, 0
      %v539 = vsel %vm451, %v433, 0
      %541 = vmatprep.subr.mxu0 0.0
      %542 = vmatpush1.msra.mxu0 0.0
      %543 = vmatprep.subr.mxu0 0.0
      %544 = vmatpush1.msra.mxu0 0.0
      %545 = vmatprep.subr.mxu0 0.0
      %546 = vmatpush1.msra.mxu0 0.0
      %547 = vmatprep.subr.mxu0 0.0
      %548 = vmatpush1.msra.mxu0 0.0
      %549 = vmatprep.subr.mxu0 0.0
      %550 = vmatpush1.msra.mxu0 0.0
      %551 = vmatprep.subr.mxu0 0.0
      %552 = vmatpush1.msra.mxu0 0.0
      %553 = vmatprep.subr.mxu0 0.0
      %554 = vmatpush1.msra.mxu0 0.0
      %555 = vmatprep.subr.mxu0 0.0
      %556 = vmatpush1.msra.mxu0 0.0
      %557 = vmatprep.subr.mxu0 0.0
      %558 = vmatpush1.msra.mxu0 0.0
      %559 = vmatprep.subr.mxu0 0.0
      %560 = vmatpush1.msra.mxu0 0.0
      %561 = vmatprep.subr.mxu0 0.0
      %562 = vmatpush1.msra.mxu0 0.0
      %563 = vmatprep.subr.mxu0 0.0
      %564 = vmatpush1.msra.mxu0 0.0
      %565 = vmatprep.subr.mxu0 0.0
      %566 = vmatpush1.msra.mxu0 0.0
      %567 = vmatprep.subr.mxu0 0.0
      %568 = vmatpush1.msra.mxu0 0.0
      %569 = vmatprep.subr.mxu0 0.0
      %570 = vmatpush1.msra.mxu0 0.0
      %571 = vmatprep.subr.mxu0 %v431
      %572 = vmatpush1.msra.mxu0 %v430
      %573 = vmatprep.subr.mxu0 0.0
      %574 = vmatpush2.msra.mxu0 0.0
      %575 = vmatprep.subr.mxu0 0.0
      %576 = vmatpush2.msra.mxu0 0.0
      %577 = vmatprep.subr.mxu0 0.0
      %578 = vmatpush2.msra.mxu0 0.0
      %579 = vmatprep.subr.mxu0 0.0
      %580 = vmatpush2.msra.mxu0 0.0
      %581 = vmatprep.subr.mxu0 0.0
      %582 = vmatpush2.msra.mxu0 0.0
      %583 = vmatprep.subr.mxu0 0.0
      %584 = vmatpush2.msra.mxu0 0.0
      %585 = vmatprep.subr.mxu0 0.0
      %586 = vmatpush2.msra.mxu0 0.0
      %587 = vmatprep.subr.mxu0 0.0
      %588 = vmatpush2.msra.mxu0 0.0
      %589 = vmatprep.subr.mxu0 0.0
      %590 = vmatpush2.msra.mxu0 0.0
      %591 = vmatprep.subr.mxu0 0.0
      %592 = vmatpush2.msra.mxu0 0.0
      %593 = vmatprep.subr.mxu0 0.0
      %594 = vmatpush2.msra.mxu0 0.0
      %595 = vmatprep.subr.mxu0 0.0
      %596 = vmatpush2.msra.mxu0 0.0
      %597 = vmatprep.subr.mxu0 0.0
      %598 = vmatpush2.msra.mxu0 0.0
      %599 = vmatprep.subr.mxu0 0.0
      %600 = vmatpush2.msra.mxu0 0.0
      %601 = vmatprep.subr.mxu0 0.0
      %602 = vmatpush2.msra.mxu0 0.0
      %603 = vmatprep.subr.mxu0 0.0
      %604 = vmatpush2.msra.mxu0 0.0
      %605 = vmatprep.mubr.f32.mxu0 0.0
      %606 = vmatmul.mubr.f32.gmra.mxu0 %v536
      %v607 = vpop.f32.mrf.mxu0
      %v608 = vadd.f32 %v525, %v607
      %v609 = vpop.f32.mrf.mxu0
      %v610 = vadd.f32 %v527, %v609
      %611 = vmatprep.mubr.f32.mxu0 0.0
      %612 = vmatmul.mubr.f32.gmra.mxu0 %v539
      %v613 = vpop.f32.mrf.mxu0
      %v614 = vadd.f32 %v531, %v613
      %v615 = vpop.f32.mrf.mxu0
      %v616 = vadd.f32 %v533, %v615
      %617 = vdwg.mxu0
      %v619 = vlaneseq
      %v620 = vshrl.u32 %v619, 7
      %v621 = vsub.s32 0, %v620
      %v622 = vrot.slane %v418, %v621
      %v623 = vlaneseq
      %v624 = vshrl.u32 %v623, 7
      %v625 = vsub.s32 1, %v624
      %v626 = vrot.slane %v418, %v625
      %627 = vrot.lane.b32.xlu0 %v622, 2
      %v628 = vpop.permute.xlu0 %627
      %629 = vrot.lane.b32.xlu0 %v626, 2
      %v630 = vpop.permute.xlu0 %629
      %vm631 = vcmask 15360
      %v632 = vsel %vm631, %v628, %v630
      %v636 = vmul.f32 %v414, %v628
      %v637 = vmul.f32 %v415, %v632
      %v638 = vmul.f32 %v416, %v630
      %s639 = scalar_lea.vmem %s3, 32
      %v640 = vld [vmem:[%s639] sm:$0xff]
      %v641 = vld [vmem:[%s639 + $0x8] sm:$0xff]
      %645 = vrot.lane.b32.xlu0 %v636, 126
      %v646 = vpop.permute.xlu0 %645
      %647 = vrot.lane.b32.xlu0 %v637, 126
      %v648 = vpop.permute.xlu0 %647
      %649 = vrot.lane.b32.xlu0 %v638, 126
      %v650 = vpop.permute.xlu0 %649
      %vm651 = vcmask 1031168
      %v652 = vsel %vm651, %v646, %v648
      %v653 = vsel %vm651, %v648, %v650
      %v657 = vsel %vm451, %v640, 0
      %v660 = vsel %vm451, %v641, 0
      %662 = vmatprep.subr.mxu0 0.0
      %663 = vmatpush1.msra.mxu0 0.0
      %664 = vmatprep.subr.mxu0 0.0
      %665 = vmatpush1.msra.mxu0 0.0
      %666 = vmatprep.subr.mxu0 0.0
      %667 = vmatpush1.msra.mxu0 0.0
      %668 = vmatprep.subr.mxu0 0.0
      %669 = vmatpush1.msra.mxu0 0.0
      %670 = vmatprep.subr.mxu0 0.0
      %671 = vmatpush1.msra.mxu0 0.0
      %672 = vmatprep.subr.mxu0 0.0
      %673 = vmatpush1.msra.mxu0 0.0
      %674 = vmatprep.subr.mxu0 0.0
      %675 = vmatpush1.msra.mxu0 0.0
      %676 = vmatprep.subr.mxu0 0.0
      %677 = vmatpush1.msra.mxu0 0.0
      %678 = vmatprep.subr.mxu0 0.0
      %679 = vmatpush1.msra.mxu0 0.0
      %680 = vmatprep.subr.mxu0 0.0
      %681 = vmatpush1.msra.mxu0 0.0
      %682 = vmatprep.subr.mxu0 0.0
      %683 = vmatpush1.msra.mxu0 0.0
      %684 = vmatprep.subr.mxu0 0.0
      %685 = vmatpush1.msra.mxu0 0.0
      %686 = vmatprep.subr.mxu0 0.0
      %687 = vmatpush1.msra.mxu0 0.0
      %688 = vmatprep.subr.mxu0 0.0
      %689 = vmatpush1.msra.mxu0 0.0
      %690 = vmatprep.subr.mxu0 0.0
      %691 = vmatpush1.msra.mxu0 0.0
      %692 = vmatprep.subr.mxu0 %v653
      %693 = vmatpush1.msra.mxu0 %v652
      %694 = vmatprep.subr.mxu0 0.0
      %695 = vmatpush2.msra.mxu0 0.0
      %696 = vmatprep.subr.mxu0 0.0
      %697 = vmatpush2.msra.mxu0 0.0
      %698 = vmatprep.subr.mxu0 0.0
      %699 = vmatpush2.msra.mxu0 0.0
      %700 = vmatprep.subr.mxu0 0.0
      %701 = vmatpush2.msra.mxu0 0.0
      %702 = vmatprep.subr.mxu0 0.0
      %703 = vmatpush2.msra.mxu0 0.0
      %704 = vmatprep.subr.mxu0 0.0
      %705 = vmatpush2.msra.mxu0 0.0
      %706 = vmatprep.subr.mxu0 0.0
      %707 = vmatpush2.msra.mxu0 0.0
      %708 = vmatprep.subr.mxu0 0.0
      %709 = vmatpush2.msra.mxu0 0.0
      %710 = vmatprep.subr.mxu0 0.0
      %711 = vmatpush2.msra.mxu0 0.0
      %712 = vmatprep.subr.mxu0 0.0
      %713 = vmatpush2.msra.mxu0 0.0
      %714 = vmatprep.subr.mxu0 0.0
      %715 = vmatpush2.msra.mxu0 0.0
      %716 = vmatprep.subr.mxu0 0.0
      %717 = vmatpush2.msra.mxu0 0.0
      %718 = vmatprep.subr.mxu0 0.0
      %719 = vmatpush2.msra.mxu0 0.0
      %720 = vmatprep.subr.mxu0 0.0
      %721 = vmatpush2.msra.mxu0 0.0
      %722 = vmatprep.subr.mxu0 0.0
      %723 = vmatpush2.msra.mxu0 0.0
      %724 = vmatprep.subr.mxu0 0.0
      %725 = vmatpush2.msra.mxu0 0.0
      %726 = vmatprep.mubr.f32.mxu0 0.0
      %727 = vmatmul.mubr.f32.gmra.mxu0 %v657
      %v728 = vpop.f32.mrf.mxu0
      %v729 = vadd.f32 0.0, %v728
      %v730 = vpop.f32.mrf.mxu0
      %v731 = vadd.f32 0.0, %v730
      %732 = vmatprep.mubr.f32.mxu0 0.0
      %733 = vmatmul.mubr.f32.gmra.mxu0 %v660
      %v734 = vpop.f32.mrf.mxu0
      %v735 = vadd.f32 0.0, %v734
      %v736 = vpop.f32.mrf.mxu0
      %v737 = vadd.f32 0.0, %v736
      %738 = vdwg.mxu0
      %v739 = vadd.f32 %v608, %v729
      %v740 = vadd.f32 %v610, %v731
      %v741 = vadd.f32 %v614, %v735
      %v742 = vadd.f32 %v616, %v737
      %743 = vrot.lane.b32.xlu0 %v423, 16
      %v744 = vpop.permute.xlu0 %743
      %745 = vrot.lane.b32.xlu0 %v427, 16
      %v746 = vpop.permute.xlu0 %745
      %vm747 = vcmask 130048
      %v748 = vsel %vm747, %v744, %v746
      %v752 = vmul.f32 %v414, %v744
      %v753 = vmul.f32 %v415, %v748
      %v754 = vmul.f32 %v416, %v746
      %s755 = scalar_lea.vmem %s3, 48
      %v756 = vld [vmem:[%s755] sm:$0xff]
      %v757 = vld [vmem:[%s755 + $0x8] sm:$0xff]
      %761 = vrot.lane.b32.xlu0 %v752, 112
      %v762 = vpop.permute.xlu0 %761
      %763 = vrot.lane.b32.xlu0 %v753, 112
      %v764 = vpop.permute.xlu0 %763
      %765 = vrot.lane.b32.xlu0 %v754, 112
      %v766 = vpop.permute.xlu0 %765
      %vm767 = vcmask 916480
      %v768 = vsel %vm767, %v762, %v764
      %v769 = vsel %vm767, %v764, %v766
      %v773 = vsel %vm451, %v756, 0
      %v776 = vsel %vm451, %v757, 0
      %778 = vmatprep.subr.mxu0 0.0
      %779 = vmatpush1.msra.mxu0 0.0
      %780 = vmatprep.subr.mxu0 0.0
      %781 = vmatpush1.msra.mxu0 0.0
      %782 = vmatprep.subr.mxu0 0.0
      %783 = vmatpush1.msra.mxu0 0.0
      %784 = vmatprep.subr.mxu0 0.0
      %785 = vmatpush1.msra.mxu0 0.0
      %786 = vmatprep.subr.mxu0 0.0
      %787 = vmatpush1.msra.mxu0 0.0
      %788 = vmatprep.subr.mxu0 0.0
      %789 = vmatpush1.msra.mxu0 0.0
      %790 = vmatprep.subr.mxu0 0.0
      %791 = vmatpush1.msra.mxu0 0.0
      %792 = vmatprep.subr.mxu0 0.0
      %793 = vmatpush1.msra.mxu0 0.0
      %794 = vmatprep.subr.mxu0 0.0
      %795 = vmatpush1.msra.mxu0 0.0
      %796 = vmatprep.subr.mxu0 0.0
      %797 = vmatpush1.msra.mxu0 0.0
      %798 = vmatprep.subr.mxu0 0.0
      %799 = vmatpush1.msra.mxu0 0.0
      %800 = vmatprep.subr.mxu0 0.0
      %801 = vmatpush1.msra.mxu0 0.0
      %802 = vmatprep.subr.mxu0 0.0
      %803 = vmatpush1.msra.mxu0 0.0
      %804 = vmatprep.subr.mxu0 0.0
      %805 = vmatpush1.msra.mxu0 0.0
      %806 = vmatprep.subr.mxu0 0.0
      %807 = vmatpush1.msra.mxu0 0.0
      %808 = vmatprep.subr.mxu0 %v769
      %809 = vmatpush1.msra.mxu0 %v768
      %810 = vmatprep.subr.mxu0 0.0
      %811 = vmatpush2.msra.mxu0 0.0
      %812 = vmatprep.subr.mxu0 0.0
      %813 = vmatpush2.msra.mxu0 0.0
      %814 = vmatprep.subr.mxu0 0.0
      %815 = vmatpush2.msra.mxu0 0.0
      %816 = vmatprep.subr.mxu0 0.0
      %817 = vmatpush2.msra.mxu0 0.0
      %818 = vmatprep.subr.mxu0 0.0
      %819 = vmatpush2.msra.mxu0 0.0
      %820 = vmatprep.subr.mxu0 0.0
      %821 = vmatpush2.msra.mxu0 0.0
      %822 = vmatprep.subr.mxu0 0.0
      %823 = vmatpush2.msra.mxu0 0.0
      %824 = vmatprep.subr.mxu0 0.0
      %825 = vmatpush2.msra.mxu0 0.0
      %826 = vmatprep.subr.mxu0 0.0
      %827 = vmatpush2.msra.mxu0 0.0
      %828 = vmatprep.subr.mxu0 0.0
      %829 = vmatpush2.msra.mxu0 0.0
      %830 = vmatprep.subr.mxu0 0.0
      %831 = vmatpush2.msra.mxu0 0.0
      %832 = vmatprep.subr.mxu0 0.0
      %833 = vmatpush2.msra.mxu0 0.0
      %834 = vmatprep.subr.mxu0 0.0
      %835 = vmatpush2.msra.mxu0 0.0
      %836 = vmatprep.subr.mxu0 0.0
      %837 = vmatpush2.msra.mxu0 0.0
      %838 = vmatprep.subr.mxu0 0.0
      %839 = vmatpush2.msra.mxu0 0.0
      %840 = vmatprep.subr.mxu0 0.0
      %841 = vmatpush2.msra.mxu0 0.0
      %842 = vmatprep.mubr.f32.mxu0 0.0
      %843 = vmatmul.mubr.f32.gmra.mxu0 %v773
      %v844 = vpop.f32.mrf.mxu0
      %v845 = vadd.f32 0.0, %v844
      %v846 = vpop.f32.mrf.mxu0
      %v847 = vadd.f32 0.0, %v846
      %848 = vmatprep.mubr.f32.mxu0 0.0
      %849 = vmatmul.mubr.f32.gmra.mxu0 %v776
      %v850 = vpop.f32.mrf.mxu0
      %v851 = vadd.f32 0.0, %v850
      %v852 = vpop.f32.mrf.mxu0
      %v853 = vadd.f32 0.0, %v852
      %854 = vdwg.mxu0
      %v855 = vadd.f32 %v739, %v845
      %v856 = vadd.f32 %v740, %v847
      %v857 = vadd.f32 %v741, %v851
      %v858 = vadd.f32 %v742, %v853
      %s859 = scalar_lea.vmem %s3, 64
      %v860 = vld [vmem:[%s859] sm:$0xff]
      %v861 = vld [vmem:[%s859 + $0x8] sm:$0xff]
      %862 = vrot.lane.b32.xlu0 %v414, 111
      %v863 = vpop.permute.xlu0 %862
      %864 = vrot.lane.b32.xlu0 %v415, 111
      %v865 = vpop.permute.xlu0 %864
      %866 = vrot.lane.b32.xlu0 %v416, 111
      %v867 = vpop.permute.xlu0 %866
      %vm868 = vcmask 908288
      %v869 = vsel %vm868, %v863, %v865
      %v870 = vsel %vm868, %v865, %v867
      %v874 = vsel %vm451, %v860, 0
      %v877 = vsel %vm451, %v861, 0
      %879 = vmatprep.subr.mxu0 0.0
      %880 = vmatpush1.msra.mxu0 0.0
      %881 = vmatprep.subr.mxu0 0.0
      %882 = vmatpush1.msra.mxu0 0.0
      %883 = vmatprep.subr.mxu0 0.0
      %884 = vmatpush1.msra.mxu0 0.0
      %885 = vmatprep.subr.mxu0 0.0
      %886 = vmatpush1.msra.mxu0 0.0
      %887 = vmatprep.subr.mxu0 0.0
      %888 = vmatpush1.msra.mxu0 0.0
      %889 = vmatprep.subr.mxu0 0.0
      %890 = vmatpush1.msra.mxu0 0.0
      %891 = vmatprep.subr.mxu0 0.0
      %892 = vmatpush1.msra.mxu0 0.0
      %893 = vmatprep.subr.mxu0 0.0
      %894 = vmatpush1.msra.mxu0 0.0
      %895 = vmatprep.subr.mxu0 0.0
      %896 = vmatpush1.msra.mxu0 0.0
      %897 = vmatprep.subr.mxu0 0.0
      %898 = vmatpush1.msra.mxu0 0.0
      %899 = vmatprep.subr.mxu0 0.0
      %900 = vmatpush1.msra.mxu0 0.0
      %901 = vmatprep.subr.mxu0 0.0
      %902 = vmatpush1.msra.mxu0 0.0
      %903 = vmatprep.subr.mxu0 0.0
      %904 = vmatpush1.msra.mxu0 0.0
      %905 = vmatprep.subr.mxu0 0.0
      %906 = vmatpush1.msra.mxu0 0.0
      %907 = vmatprep.subr.mxu0 0.0
      %908 = vmatpush1.msra.mxu0 0.0
      %909 = vmatprep.subr.mxu0 %v870
      %910 = vmatpush1.msra.mxu0 %v869
      %911 = vmatprep.subr.mxu0 0.0
      %912 = vmatpush2.msra.mxu0 0.0
      %913 = vmatprep.subr.mxu0 0.0
      %914 = vmatpush2.msra.mxu0 0.0
      %915 = vmatprep.subr.mxu0 0.0
      %916 = vmatpush2.msra.mxu0 0.0
      %917 = vmatprep.subr.mxu0 0.0
      %918 = vmatpush2.msra.mxu0 0.0
      %919 = vmatprep.subr.mxu0 0.0
      %920 = vmatpush2.msra.mxu0 0.0
      %921 = vmatprep.subr.mxu0 0.0
      %922 = vmatpush2.msra.mxu0 0.0
      %923 = vmatprep.subr.mxu0 0.0
      %924 = vmatpush2.msra.mxu0 0.0
      %925 = vmatprep.subr.mxu0 0.0
      %926 = vmatpush2.msra.mxu0 0.0
      %927 = vmatprep.subr.mxu0 0.0
      %928 = vmatpush2.msra.mxu0 0.0
      %929 = vmatprep.subr.mxu0 0.0
      %930 = vmatpush2.msra.mxu0 0.0
      %931 = vmatprep.subr.mxu0 0.0
      %932 = vmatpush2.msra.mxu0 0.0
      %933 = vmatprep.subr.mxu0 0.0
      %934 = vmatpush2.msra.mxu0 0.0
      %935 = vmatprep.subr.mxu0 0.0
      %936 = vmatpush2.msra.mxu0 0.0
      %937 = vmatprep.subr.mxu0 0.0
      %938 = vmatpush2.msra.mxu0 0.0
      %939 = vmatprep.subr.mxu0 0.0
      %940 = vmatpush2.msra.mxu0 0.0
      %941 = vmatprep.subr.mxu0 0.0
      %942 = vmatpush2.msra.mxu0 0.0
      %943 = vmatprep.mubr.f32.mxu0 0.0
      %944 = vmatmul.mubr.f32.gmra.mxu0 %v874
      %v945 = vpop.f32.mrf.mxu0
      %v946 = vadd.f32 0.0, %v945
      %v947 = vpop.f32.mrf.mxu0
      %v948 = vadd.f32 0.0, %v947
      %949 = vmatprep.mubr.f32.mxu0 0.0
      %950 = vmatmul.mubr.f32.gmra.mxu0 %v877
      %v951 = vpop.f32.mrf.mxu0
      %v952 = vadd.f32 0.0, %v951
      %v953 = vpop.f32.mrf.mxu0
      %v954 = vadd.f32 0.0, %v953
      %955 = vdwg.mxu0
      %v956 = vadd.f32 %v855, %v946
      %v957 = vadd.f32 %v856, %v948
      %v958 = vadd.f32 %v857, %v952
      %v959 = vadd.f32 %v858, %v954
      %960 = vrot.lane.b32.xlu0 %v622, 18
      %v961 = vpop.permute.xlu0 %960
      %962 = vrot.lane.b32.xlu0 %v626, 18
      %v963 = vpop.permute.xlu0 %962
      %vm964 = vcmask 146432
      %v965 = vsel %vm964, %v961, %v963
      %v969 = vmul.f32 %v414, %v961
      %v970 = vmul.f32 %v415, %v965
      %v971 = vmul.f32 %v416, %v963
      %s972 = scalar_lea.vmem %s3, 80
      %v973 = vld [vmem:[%s972] sm:$0xff]
      %v974 = vld [vmem:[%s972 + $0x8] sm:$0xff]
      %978 = vrot.lane.b32.xlu0 %v969, 110
      %v979 = vpop.permute.xlu0 %978
      %980 = vrot.lane.b32.xlu0 %v970, 110
      %v981 = vpop.permute.xlu0 %980
      %982 = vrot.lane.b32.xlu0 %v971, 110
      %v983 = vpop.permute.xlu0 %982
      %vm984 = vcmask 900096
      %v985 = vsel %vm984, %v979, %v981
      %v986 = vsel %vm984, %v981, %v983
      %v990 = vsel %vm451, %v973, 0
      %v993 = vsel %vm451, %v974, 0
      %995 = vmatprep.subr.mxu0 0.0
      %996 = vmatpush1.msra.mxu0 0.0
      %997 = vmatprep.subr.mxu0 0.0
      %998 = vmatpush1.msra.mxu0 0.0
      %999 = vmatprep.subr.mxu0 0.0
      %1000 = vmatpush1.msra.mxu0 0.0
      %1001 = vmatprep.subr.mxu0 0.0
      %1002 = vmatpush1.msra.mxu0 0.0
      %1003 = vmatprep.subr.mxu0 0.0
      %1004 = vmatpush1.msra.mxu0 0.0
      %1005 = vmatprep.subr.mxu0 0.0
      %1006 = vmatpush1.msra.mxu0 0.0
      %1007 = vmatprep.subr.mxu0 0.0
      %1008 = vmatpush1.msra.mxu0 0.0
      %1009 = vmatprep.subr.mxu0 0.0
      %1010 = vmatpush1.msra.mxu0 0.0
      %1011 = vmatprep.subr.mxu0 0.0
      %1012 = vmatpush1.msra.mxu0 0.0
      %1013 = vmatprep.subr.mxu0 0.0
      %1014 = vmatpush1.msra.mxu0 0.0
      %1015 = vmatprep.subr.mxu0 0.0
      %1016 = vmatpush1.msra.mxu0 0.0
      %1017 = vmatprep.subr.mxu0 0.0
      %1018 = vmatpush1.msra.mxu0 0.0
      %1019 = vmatprep.subr.mxu0 0.0
      %1020 = vmatpush1.msra.mxu0 0.0
      %1021 = vmatprep.subr.mxu0 0.0
      %1022 = vmatpush1.msra.mxu0 0.0
      %1023 = vmatprep.subr.mxu0 0.0
      %1024 = vmatpush1.msra.mxu0 0.0
      %1025 = vmatprep.subr.mxu0 %v986
      %1026 = vmatpush1.msra.mxu0 %v985
      %1027 = vmatprep.subr.mxu0 0.0
      %1028 = vmatpush2.msra.mxu0 0.0
      %1029 = vmatprep.subr.mxu0 0.0
      %1030 = vmatpush2.msra.mxu0 0.0
      %1031 = vmatprep.subr.mxu0 0.0
      %1032 = vmatpush2.msra.mxu0 0.0
      %1033 = vmatprep.subr.mxu0 0.0
      %1034 = vmatpush2.msra.mxu0 0.0
      %1035 = vmatprep.subr.mxu0 0.0
      %1036 = vmatpush2.msra.mxu0 0.0
      %1037 = vmatprep.subr.mxu0 0.0
      %1038 = vmatpush2.msra.mxu0 0.0
      %1039 = vmatprep.subr.mxu0 0.0
      %1040 = vmatpush2.msra.mxu0 0.0
      %1041 = vmatprep.subr.mxu0 0.0
      %1042 = vmatpush2.msra.mxu0 0.0
      %1043 = vmatprep.subr.mxu0 0.0
      %1044 = vmatpush2.msra.mxu0 0.0
      %1045 = vmatprep.subr.mxu0 0.0
      %1046 = vmatpush2.msra.mxu0 0.0
      %1047 = vmatprep.subr.mxu0 0.0
      %1048 = vmatpush2.msra.mxu0 0.0
      %1049 = vmatprep.subr.mxu0 0.0
      %1050 = vmatpush2.msra.mxu0 0.0
      %1051 = vmatprep.subr.mxu0 0.0
      %1052 = vmatpush2.msra.mxu0 0.0
      %1053 = vmatprep.subr.mxu0 0.0
      %1054 = vmatpush2.msra.mxu0 0.0
      %1055 = vmatprep.subr.mxu0 0.0
      %1056 = vmatpush2.msra.mxu0 0.0
      %1057 = vmatprep.subr.mxu0 0.0
      %1058 = vmatpush2.msra.mxu0 0.0
      %1059 = vmatprep.mubr.f32.mxu0 0.0
      %1060 = vmatmul.mubr.f32.gmra.mxu0 %v990
      %v1061 = vpop.f32.mrf.mxu0
      %v1062 = vadd.f32 0.0, %v1061
      %v1063 = vpop.f32.mrf.mxu0
      %v1064 = vadd.f32 0.0, %v1063
      %1065 = vmatprep.mubr.f32.mxu0 0.0
      %1066 = vmatmul.mubr.f32.gmra.mxu0 %v993
      %v1067 = vpop.f32.mrf.mxu0
      %v1068 = vadd.f32 0.0, %v1067
      %v1069 = vpop.f32.mrf.mxu0
      %v1070 = vadd.f32 0.0, %v1069
      %1071 = vdwg.mxu0
      %v1072 = vadd.f32 %v956, %v1062
      %v1073 = vadd.f32 %v957, %v1064
      %v1074 = vadd.f32 %v958, %v1068
      %v1075 = vadd.f32 %v959, %v1070
      %1076 = vrot.lane.b32.xlu0 %v423, 32
      %v1077 = vpop.permute.xlu0 %1076
      %1078 = vrot.lane.b32.xlu0 %v427, 32
      %v1079 = vpop.permute.xlu0 %1078
      %vm1080 = vcmask 261120
      %v1081 = vsel %vm1080, %v1077, %v1079
      %v1085 = vmul.f32 %v414, %v1077
      %v1086 = vmul.f32 %v415, %v1081
      %v1087 = vmul.f32 %v416, %v1079
      %s1088 = scalar_lea.vmem %s3, 96
      %v1089 = vld [vmem:[%s1088] sm:$0xff]
      %v1090 = vld [vmem:[%s1088 + $0x8] sm:$0xff]
      %1094 = vrot.lane.b32.xlu0 %v1085, 96
      %v1095 = vpop.permute.xlu0 %1094
      %1096 = vrot.lane.b32.xlu0 %v1086, 96
      %v1097 = vpop.permute.xlu0 %1096
      %1098 = vrot.lane.b32.xlu0 %v1087, 96
      %v1099 = vpop.permute.xlu0 %1098
      %vm1100 = vcmask 785408
      %v1101 = vsel %vm1100, %v1095, %v1097
      %v1102 = vsel %vm1100, %v1097, %v1099
      %v1106 = vsel %vm451, %v1089, 0
      %v1109 = vsel %vm451, %v1090, 0
      %1111 = vmatprep.subr.mxu0 0.0
      %1112 = vmatpush1.msra.mxu0 0.0
      %1113 = vmatprep.subr.mxu0 0.0
      %1114 = vmatpush1.msra.mxu0 0.0
      %1115 = vmatprep.subr.mxu0 0.0
      %1116 = vmatpush1.msra.mxu0 0.0
      %1117 = vmatprep.subr.mxu0 0.0
      %1118 = vmatpush1.msra.mxu0 0.0
      %1119 = vmatprep.subr.mxu0 0.0
      %1120 = vmatpush1.msra.mxu0 0.0
      %1121 = vmatprep.subr.mxu0 0.0
      %1122 = vmatpush1.msra.mxu0 0.0
      %1123 = vmatprep.subr.mxu0 0.0
      %1124 = vmatpush1.msra.mxu0 0.0
      %1125 = vmatprep.subr.mxu0 0.0
      %1126 = vmatpush1.msra.mxu0 0.0
      %1127 = vmatprep.subr.mxu0 0.0
      %1128 = vmatpush1.msra.mxu0 0.0
      %1129 = vmatprep.subr.mxu0 0.0
      %1130 = vmatpush1.msra.mxu0 0.0
      %1131 = vmatprep.subr.mxu0 0.0
      %1132 = vmatpush1.msra.mxu0 0.0
      %1133 = vmatprep.subr.mxu0 0.0
      %1134 = vmatpush1.msra.mxu0 0.0
      %1135 = vmatprep.subr.mxu0 0.0
      %1136 = vmatpush1.msra.mxu0 0.0
      %1137 = vmatprep.subr.mxu0 0.0
      %1138 = vmatpush1.msra.mxu0 0.0
      %1139 = vmatprep.subr.mxu0 0.0
      %1140 = vmatpush1.msra.mxu0 0.0
      %1141 = vmatprep.subr.mxu0 %v1102
      %1142 = vmatpush1.msra.mxu0 %v1101
      %1143 = vmatprep.subr.mxu0 0.0
      %1144 = vmatpush2.msra.mxu0 0.0
      %1145 = vmatprep.subr.mxu0 0.0
      %1146 = vmatpush2.msra.mxu0 0.0
      %1147 = vmatprep.subr.mxu0 0.0
      %1148 = vmatpush2.msra.mxu0 0.0
      %1149 = vmatprep.subr.mxu0 0.0
      %1150 = vmatpush2.msra.mxu0 0.0
      %1151 = vmatprep.subr.mxu0 0.0
      %1152 = vmatpush2.msra.mxu0 0.0
      %1153 = vmatprep.subr.mxu0 0.0
      %1154 = vmatpush2.msra.mxu0 0.0
      %1155 = vmatprep.subr.mxu0 0.0
      %1156 = vmatpush2.msra.mxu0 0.0
      %1157 = vmatprep.subr.mxu0 0.0
      %1158 = vmatpush2.msra.mxu0 0.0
      %1159 = vmatprep.subr.mxu0 0.0
      %1160 = vmatpush2.msra.mxu0 0.0
      %1161 = vmatprep.subr.mxu0 0.0
      %1162 = vmatpush2.msra.mxu0 0.0
      %1163 = vmatprep.subr.mxu0 0.0
      %1164 = vmatpush2.msra.mxu0 0.0
      %1165 = vmatprep.subr.mxu0 0.0
      %1166 = vmatpush2.msra.mxu0 0.0
      %1167 = vmatprep.subr.mxu0 0.0
      %1168 = vmatpush2.msra.mxu0 0.0
      %1169 = vmatprep.subr.mxu0 0.0
      %1170 = vmatpush2.msra.mxu0 0.0
      %1171 = vmatprep.subr.mxu0 0.0
      %1172 = vmatpush2.msra.mxu0 0.0
      %1173 = vmatprep.subr.mxu0 0.0
      %1174 = vmatpush2.msra.mxu0 0.0
      %1175 = vmatprep.mubr.f32.mxu0 0.0
      %1176 = vmatmul.mubr.f32.gmra.mxu0 %v1106
      %v1177 = vpop.f32.mrf.mxu0
      %v1178 = vadd.f32 0.0, %v1177
      %v1179 = vpop.f32.mrf.mxu0
      %v1180 = vadd.f32 0.0, %v1179
      %1181 = vmatprep.mubr.f32.mxu0 0.0
      %1182 = vmatmul.mubr.f32.gmra.mxu0 %v1109
      %v1183 = vpop.f32.mrf.mxu0
      %v1184 = vadd.f32 0.0, %v1183
      %v1185 = vpop.f32.mrf.mxu0
      %v1186 = vadd.f32 0.0, %v1185
      %1187 = vdwg.mxu0
      %v1188 = vadd.f32 %v1072, %v1178
      %v1189 = vadd.f32 %v1073, %v1180
      %v1190 = vadd.f32 %v1074, %v1184
      %v1191 = vadd.f32 %v1075, %v1186
      %s1192 = scalar_lea.vmem %s3, 112
      %v1193 = vld [vmem:[%s1192] sm:$0xff]
      %v1194 = vld [vmem:[%s1192 + $0x8] sm:$0xff]
      %1195 = vrot.lane.b32.xlu0 %v414, 95
      %v1196 = vpop.permute.xlu0 %1195
      %1197 = vrot.lane.b32.xlu0 %v415, 95
      %v1198 = vpop.permute.xlu0 %1197
      %1199 = vrot.lane.b32.xlu0 %v416, 95
      %v1200 = vpop.permute.xlu0 %1199
      %vm1201 = vcmask 777216
      %v1202 = vsel %vm1201, %v1196, %v1198
      %v1203 = vsel %vm1201, %v1198, %v1200
      %v1207 = vsel %vm451, %v1193, 0
      %v1210 = vsel %vm451, %v1194, 0
      %1212 = vmatprep.subr.mxu0 0.0
      %1213 = vmatpush1.msra.mxu0 0.0
      %1214 = vmatprep.subr.mxu0 0.0
      %1215 = vmatpush1.msra.mxu0 0.0
      %1216 = vmatprep.subr.mxu0 0.0
      %1217 = vmatpush1.msra.mxu0 0.0
      %1218 = vmatprep.subr.mxu0 0.0
      %1219 = vmatpush1.msra.mxu0 0.0
      %1220 = vmatprep.subr.mxu0 0.0
      %1221 = vmatpush1.msra.mxu0 0.0
      %1222 = vmatprep.subr.mxu0 0.0
      %1223 = vmatpush1.msra.mxu0 0.0
      %1224 = vmatprep.subr.mxu0 0.0
      %1225 = vmatpush1.msra.mxu0 0.0
      %1226 = vmatprep.subr.mxu0 0.0
      %1227 = vmatpush1.msra.mxu0 0.0
      %1228 = vmatprep.subr.mxu0 0.0
      %1229 = vmatpush1.msra.mxu0 0.0
      %1230 = vmatprep.subr.mxu0 0.0
      %1231 = vmatpush1.msra.mxu0 0.0
      %1232 = vmatprep.subr.mxu0 0.0
      %1233 = vmatpush1.msra.mxu0 0.0
      %1234 = vmatprep.subr.mxu0 0.0
      %1235 = vmatpush1.msra.mxu0 0.0
      %1236 = vmatprep.subr.mxu0 0.0
      %1237 = vmatpush1.msra.mxu0 0.0
      %1238 = vmatprep.subr.mxu0 0.0
      %1239 = vmatpush1.msra.mxu0 0.0
      %1240 = vmatprep.subr.mxu0 0.0
      %1241 = vmatpush1.msra.mxu0 0.0
      %1242 = vmatprep.subr.mxu0 %v1203
      %1243 = vmatpush1.msra.mxu0 %v1202
      %1244 = vmatprep.subr.mxu0 0.0
      %1245 = vmatpush2.msra.mxu0 0.0
      %1246 = vmatprep.subr.mxu0 0.0
      %1247 = vmatpush2.msra.mxu0 0.0
      %1248 = vmatprep.subr.mxu0 0.0
      %1249 = vmatpush2.msra.mxu0 0.0
      %1250 = vmatprep.subr.mxu0 0.0
      %1251 = vmatpush2.msra.mxu0 0.0
      %1252 = vmatprep.subr.mxu0 0.0
      %1253 = vmatpush2.msra.mxu0 0.0
      %1254 = vmatprep.subr.mxu0 0.0
      %1255 = vmatpush2.msra.mxu0 0.0
      %1256 = vmatprep.subr.mxu0 0.0
      %1257 = vmatpush2.msra.mxu0 0.0
      %1258 = vmatprep.subr.mxu0 0.0
      %1259 = vmatpush2.msra.mxu0 0.0
      %1260 = vmatprep.subr.mxu0 0.0
      %1261 = vmatpush2.msra.mxu0 0.0
      %1262 = vmatprep.subr.mxu0 0.0
      %1263 = vmatpush2.msra.mxu0 0.0
      %1264 = vmatprep.subr.mxu0 0.0
      %1265 = vmatpush2.msra.mxu0 0.0
      %1266 = vmatprep.subr.mxu0 0.0
      %1267 = vmatpush2.msra.mxu0 0.0
      %1268 = vmatprep.subr.mxu0 0.0
      %1269 = vmatpush2.msra.mxu0 0.0
      %1270 = vmatprep.subr.mxu0 0.0
      %1271 = vmatpush2.msra.mxu0 0.0
      %1272 = vmatprep.subr.mxu0 0.0
      %1273 = vmatpush2.msra.mxu0 0.0
      %1274 = vmatprep.subr.mxu0 0.0
      %1275 = vmatpush2.msra.mxu0 0.0
      %1276 = vmatprep.mubr.f32.mxu0 0.0
      %1277 = vmatmul.mubr.f32.gmra.mxu0 %v1207
      %v1278 = vpop.f32.mrf.mxu0
      %v1279 = vadd.f32 0.0, %v1278
      %v1280 = vpop.f32.mrf.mxu0
      %v1281 = vadd.f32 0.0, %v1280
      %1282 = vmatprep.mubr.f32.mxu0 0.0
      %1283 = vmatmul.mubr.f32.gmra.mxu0 %v1210
      %v1284 = vpop.f32.mrf.mxu0
      %v1285 = vadd.f32 0.0, %v1284
      %v1286 = vpop.f32.mrf.mxu0
      %v1287 = vadd.f32 0.0, %v1286
      %1288 = vdwg.mxu0
      %v1289 = vadd.f32 %v1188, %v1279
      %v1290 = vadd.f32 %v1189, %v1281
      %v1291 = vadd.f32 %v1190, %v1285
      %v1292 = vadd.f32 %v1191, %v1287
      %1293 = vrot.lane.b32.xlu0 %v622, 34
      %v1294 = vpop.permute.xlu0 %1293
      %1295 = vrot.lane.b32.xlu0 %v626, 34
      %v1296 = vpop.permute.xlu0 %1295
      %vm1297 = vcmask 277504
      %v1298 = vsel %vm1297, %v1294, %v1296
      %v1302 = vmul.f32 %v414, %v1294
      %v1303 = vmul.f32 %v415, %v1298
      %v1304 = vmul.f32 %v416, %v1296
      %s1305 = scalar_lea.vmem %s3, 128
      %v1306 = vld [vmem:[%s1305] sm:$0xff]
      %v1307 = vld [vmem:[%s1305 + $0x8] sm:$0xff]
      %1311 = vrot.lane.b32.xlu0 %v1302, 94
      %v1312 = vpop.permute.xlu0 %1311
      %1313 = vrot.lane.b32.xlu0 %v1303, 94
      %v1314 = vpop.permute.xlu0 %1313
      %1315 = vrot.lane.b32.xlu0 %v1304, 94
      %v1316 = vpop.permute.xlu0 %1315
      %vm1317 = vcmask 769024
      %v1318 = vsel %vm1317, %v1312, %v1314
      %v1319 = vsel %vm1317, %v1314, %v1316
      %v1323 = vsel %vm451, %v1306, 0
      %v1326 = vsel %vm451, %v1307, 0
      %1328 = vmatprep.subr.mxu0 0.0
      %1329 = vmatpush1.msra.mxu0 0.0
      %1330 = vmatprep.subr.mxu0 0.0
      %1331 = vmatpush1.msra.mxu0 0.0
      %1332 = vmatprep.subr.mxu0 0.0
      %1333 = vmatpush1.msra.mxu0 0.0
      %1334 = vmatprep.subr.mxu0 0.0
      %1335 = vmatpush1.msra.mxu0 0.0
      %1336 = vmatprep.subr.mxu0 0.0
      %1337 = vmatpush1.msra.mxu0 0.0
      %1338 = vmatprep.subr.mxu0 0.0
      %1339 = vmatpush1.msra.mxu0 0.0
      %1340 = vmatprep.subr.mxu0 0.0
      %1341 = vmatpush1.msra.mxu0 0.0
      %1342 = vmatprep.subr.mxu0 0.0
      %1343 = vmatpush1.msra.mxu0 0.0
      %1344 = vmatprep.subr.mxu0 0.0
      %1345 = vmatpush1.msra.mxu0 0.0
      %1346 = vmatprep.subr.mxu0 0.0
      %1347 = vmatpush1.msra.mxu0 0.0
      %1348 = vmatprep.subr.mxu0 0.0
      %1349 = vmatpush1.msra.mxu0 0.0
      %1350 = vmatprep.subr.mxu0 0.0
      %1351 = vmatpush1.msra.mxu0 0.0
      %1352 = vmatprep.subr.mxu0 0.0
      %1353 = vmatpush1.msra.mxu0 0.0
      %1354 = vmatprep.subr.mxu0 0.0
      %1355 = vmatpush1.msra.mxu0 0.0
      %1356 = vmatprep.subr.mxu0 0.0
      %1357 = vmatpush1.msra.mxu0 0.0
      %1358 = vmatprep.subr.mxu0 %v1319
      %1359 = vmatpush1.msra.mxu0 %v1318
      %1360 = vmatprep.subr.mxu0 0.0
      %1361 = vmatpush2.msra.mxu0 0.0
      %1362 = vmatprep.subr.mxu0 0.0
      %1363 = vmatpush2.msra.mxu0 0.0
      %1364 = vmatprep.subr.mxu0 0.0
      %1365 = vmatpush2.msra.mxu0 0.0
      %1366 = vmatprep.subr.mxu0 0.0
      %1367 = vmatpush2.msra.mxu0 0.0
      %1368 = vmatprep.subr.mxu0 0.0
      %1369 = vmatpush2.msra.mxu0 0.0
      %1370 = vmatprep.subr.mxu0 0.0
      %1371 = vmatpush2.msra.mxu0 0.0
      %1372 = vmatprep.subr.mxu0 0.0
      %1373 = vmatpush2.msra.mxu0 0.0
      %1374 = vmatprep.subr.mxu0 0.0
      %1375 = vmatpush2.msra.mxu0 0.0
      %1376 = vmatprep.subr.mxu0 0.0
      %1377 = vmatpush2.msra.mxu0 0.0
      %1378 = vmatprep.subr.mxu0 0.0
      %1379 = vmatpush2.msra.mxu0 0.0
      %1380 = vmatprep.subr.mxu0 0.0
      %1381 = vmatpush2.msra.mxu0 0.0
      %1382 = vmatprep.subr.mxu0 0.0
      %1383 = vmatpush2.msra.mxu0 0.0
      %1384 = vmatprep.subr.mxu0 0.0
      %1385 = vmatpush2.msra.mxu0 0.0
      %1386 = vmatprep.subr.mxu0 0.0
      %1387 = vmatpush2.msra.mxu0 0.0
      %1388 = vmatprep.subr.mxu0 0.0
      %1389 = vmatpush2.msra.mxu0 0.0
      %1390 = vmatprep.subr.mxu0 0.0
      %1391 = vmatpush2.msra.mxu0 0.0
      %1392 = vmatprep.mubr.f32.mxu0 0.0
      %1393 = vmatmul.mubr.f32.gmra.mxu0 %v1323
      %v1394 = vpop.f32.mrf.mxu0
      %v1395 = vadd.f32 0.0, %v1394
      %v1396 = vpop.f32.mrf.mxu0
      %v1397 = vadd.f32 0.0, %v1396
      %1398 = vmatprep.mubr.f32.mxu0 0.0
      %1399 = vmatmul.mubr.f32.gmra.mxu0 %v1326
      %v1400 = vpop.f32.mrf.mxu0
      %v1401 = vadd.f32 0.0, %v1400
      %v1402 = vpop.f32.mrf.mxu0
      %v1403 = vadd.f32 0.0, %v1402
      %1404 = vdwg.mxu0
      %v1405 = vadd.f32 %v1289, %v1395
      %v1406 = vadd.f32 %v1290, %v1397
      %v1407 = vadd.f32 %v1291, %v1401
      %v1408 = vadd.f32 %v1292, %v1403
      %v1409 = vld [vmem:[%s4] sm:$0xff]
      %v1410 = vld [vmem:[%s4 + $0x8] sm:$0xff]
      %1412 = vset.pattern.permute.xlu0 0
      %1413 = vperm.xlu0 %1412, %v1409
      %v1414 = vpop.permute.xlu0 %1413
      %1417 = vset.pattern.permute.xlu0 0
      %1418 = vperm.xlu0 %1417, %v1410
      %v1419 = vpop.permute.xlu0 %1418
      %v1421 = vadd.f32 %v1405, %v1414
      %v1422 = vadd.f32 %v1406, %v1414
      %v1423 = vadd.f32 %v1407, %v1419
      %v1424 = vadd.f32 %v1408, %v1419
      %v1425 = vmax.f32 %v1421, 0.0
      %v1426 = vmax.f32 %v1422, 0.0
      %v1427 = vmax.f32 %v1423, 0.0
      %v1428 = vmax.f32 %v1424, 0.0
      %1429 = vst [vmem:[#allocation2] sm:$0xff] 0.0
      %1430 = vst [vmem:[#allocation2 + $0x8] sm:$0xff] 0.0
      %1431 = vst.msk [vmem:[#allocation2 + $0x10] sm:$0xff] %vm1297, 0.0
      %1432 = vst [vmem:[#allocation2 + $0x18] sm:$0xff] 0.0
      %1433 = vst [vmem:[#allocation2 + $0x20] sm:$0xff] 0.0
      %1434 = vst.msk [vmem:[#allocation2 + $0x28] sm:$0xff] %vm1297, 0.0
      %1439 = vrot.lane.b32.xlu0 %v1425, 17
      %v1440 = vpop.permute.xlu0 %1439
      %1441 = vrot.lane.b32.xlu0 %v1426, 17
      %v1442 = vpop.permute.xlu0 %1441
      %1443 = vrot.lane.b32.xlu0 %v1427, 17
      %v1444 = vpop.permute.xlu0 %1443
      %1445 = vrot.lane.b32.xlu0 %v1428, 17
      %v1446 = vpop.permute.xlu0 %1445
      %vm1447 = vcmask 138240
      %v1448 = vsel %vm1447, %v1440, %v1442
      %v1449 = vsel %vm1447, %v1444, %v1446
      %vm1456 = vcmask 1047688
      %1457 = vst.msk [vmem:[#allocation2] sm:$0xff] %vm1456, %v1440
      %1458 = vst [vmem:[#allocation2 + $0x8] sm:$0xff] %v1448
      %1459 = vst.msk [vmem:[#allocation2 + $0x10] sm:$0xff] %vm1447, %v1442
      %1460 = vst.msk [vmem:[#allocation2 + $0x18] sm:$0xff] %vm1456, %v1444
      %1461 = vst [vmem:[#allocation2 + $0x20] sm:$0xff] %v1449
      %1462 = vst.msk [vmem:[#allocation2 + $0x28] sm:$0xff] %vm1447, %v1446
      %v1463 = vld [vmem:[#allocation2] sm:$0xff]
      %v1464 = vld [vmem:[#allocation2 + $0x8] sm:$0xff]
      %v1465 = vld [vmem:[#allocation2 + $0x18] sm:$0xff]
      %v1466 = vld [vmem:[#allocation2 + $0x20] sm:$0xff]
      %v1467 = vmul.f32 %v1463, %v423
      %v1468 = vmul.f32 %v1464, %v427
      %v1469 = vmul.f32 %v1465, %v423
      %v1470 = vmul.f32 %v1466, %v427
      %v1471 = vld [vmem:[%s5] sm:$0xff]
      %v1472 = vld [vmem:[%s5 + $0x8] sm:$0xff]
      %v1473 = vld [vmem:[#allocation2 + $0x10] sm:$0xff]
      %v1474 = vld [vmem:[#allocation2 + $0x28] sm:$0xff]
      %s1475 = scalar_lea.vmem %s5, 16
      %v1476 = vld [vmem:[%s1475] sm:$0xff]
      %v1477 = vld [vmem:[%s1475 + $0x8] sm:$0xff]
      %1484 = vrot.lane.b32.xlu0 %v1463, 127
      %v1485 = vpop.permute.xlu0 %1484
      %1486 = vrot.lane.b32.xlu0 %v1464, 127
      %v1487 = vpop.permute.xlu0 %1486
      %1488 = vrot.lane.b32.xlu0 %v1473, 127
      %v1489 = vpop.permute.xlu0 %1488
      %1490 = vrot.lane.b32.xlu0 %v1465, 127
      %v1491 = vpop.permute.xlu0 %1490
      %1492 = vrot.lane.b32.xlu0 %v1466, 127
      %v1493 = vpop.permute.xlu0 %1492
      %1494 = vrot.lane.b32.xlu0 %v1474, 127
      %v1495 = vpop.permute.xlu0 %1494
      %v1496 = vsel %vm446, %v1485, %v1487
      %v1497 = vsel %vm446, %v1487, %v1489
      %v1498 = vsel %vm446, %v1491, %v1493
      %v1499 = vsel %vm446, %v1493, %v1495
      %v1505 = vsel %vm747, %v1476, 0
      %v1508 = vsel %vm747, %v1477, 0
      %1510 = vmatprep.subr.mxu0 0.0
      %1511 = vmatpush1.msra.mxu0 0.0
      %1512 = vmatprep.subr.mxu0 0.0
      %1513 = vmatpush1.msra.mxu0 0.0
      %1514 = vmatprep.subr.mxu0 0.0
      %1515 = vmatpush1.msra.mxu0 0.0
      %1516 = vmatprep.subr.mxu0 0.0
      %1517 = vmatpush1.msra.mxu0 0.0
      %1518 = vmatprep.subr.mxu0 0.0
      %1519 = vmatpush1.msra.mxu0 0.0
      %1520 = vmatprep.subr.mxu0 0.0
      %1521 = vmatpush1.msra.mxu0 0.0
      %1522 = vmatprep.subr.mxu0 0.0
      %1523 = vmatpush1.msra.mxu0 0.0
      %1524 = vmatprep.subr.mxu0 0.0
      %1525 = vmatpush1.msra.mxu0 0.0
      %1526 = vmatprep.subr.mxu0 0.0
      %1527 = vmatpush1.msra.mxu0 0.0
      %1528 = vmatprep.subr.mxu0 0.0
      %1529 = vmatpush1.msra.mxu0 0.0
      %1530 = vmatprep.subr.mxu0 0.0
      %1531 = vmatpush1.msra.mxu0 0.0
      %1532 = vmatprep.subr.mxu0 0.0
      %1533 = vmatpush1.msra.mxu0 0.0
      %1534 = vmatprep.subr.mxu0 0.0
      %1535 = vmatpush1.msra.mxu0 0.0
      %1536 = vmatprep.subr.mxu0 0.0
      %1537 = vmatpush1.msra.mxu0 0.0
      %1538 = vmatprep.subr.mxu0 %v1499
      %1539 = vmatpush1.msra.mxu0 %v1498
      %1540 = vmatprep.subr.mxu0 %v1497
      %1541 = vmatpush1.msra.mxu0 %v1496
      %1542 = vmatprep.subr.mxu0 0.0
      %1543 = vmatpush2.msra.mxu0 0.0
      %1544 = vmatprep.subr.mxu0 0.0
      %1545 = vmatpush2.msra.mxu0 0.0
      %1546 = vmatprep.subr.mxu0 0.0
      %1547 = vmatpush2.msra.mxu0 0.0
      %1548 = vmatprep.subr.mxu0 0.0
      %1549 = vmatpush2.msra.mxu0 0.0
      %1550 = vmatprep.subr.mxu0 0.0
      %1551 = vmatpush2.msra.mxu0 0.0
      %1552 = vmatprep.subr.mxu0 0.0
      %1553 = vmatpush2.msra.mxu0 0.0
      %1554 = vmatprep.subr.mxu0 0.0
      %1555 = vmatpush2.msra.mxu0 0.0
      %1556 = vmatprep.subr.mxu0 0.0
      %1557 = vmatpush2.msra.mxu0 0.0
      %1558 = vmatprep.subr.mxu0 0.0
      %1559 = vmatpush2.msra.mxu0 0.0
      %1560 = vmatprep.subr.mxu0 0.0
      %1561 = vmatpush2.msra.mxu0 0.0
      %1562 = vmatprep.subr.mxu0 0.0
      %1563 = vmatpush2.msra.mxu0 0.0
      %1564 = vmatprep.subr.mxu0 0.0
      %1565 = vmatpush2.msra.mxu0 0.0
      %1566 = vmatprep.subr.mxu0 0.0
      %1567 = vmatpush2.msra.mxu0 0.0
      %1568 = vmatprep.subr.mxu0 0.0
      %1569 = vmatpush2.msra.mxu0 0.0
      %1570 = vmatprep.subr.mxu0 0.0
      %1571 = vmatpush2.msra.mxu0 0.0
      %1572 = vmatprep.subr.mxu0 0.0
      %1573 = vmatpush2.msra.mxu0 0.0
      %1574 = vmatprep.mubr.f32.mxu0 0.0
      %1575 = vmatmul.mubr.f32.gmra.mxu0 %v1505
      %v1576 = vpop.f32.mrf.mxu0
      %v1577 = vadd.f32 0.0, %v1576
      %v1578 = vpop.f32.mrf.mxu0
      %v1579 = vadd.f32 0.0, %v1578
      %1580 = vmatprep.mubr.f32.mxu0 0.0
      %1581 = vmatmul.mubr.f32.gmra.mxu0 %v1508
      %v1582 = vpop.f32.mrf.mxu0
      %v1583 = vadd.f32 0.0, %v1582
      %v1584 = vpop.f32.mrf.mxu0
      %v1585 = vadd.f32 0.0, %v1584
      %1586 = vdwg.mxu0
      %v1588 = vsel %vm747, %v1471, 0
      %v1591 = vsel %vm747, %v1472, 0
      %1593 = vmatprep.subr.mxu0 0.0
      %1594 = vmatpush1.msra.mxu0 0.0
      %1595 = vmatprep.subr.mxu0 0.0
      %1596 = vmatpush1.msra.mxu0 0.0
      %1597 = vmatprep.subr.mxu0 0.0
      %1598 = vmatpush1.msra.mxu0 0.0
      %1599 = vmatprep.subr.mxu0 0.0
      %1600 = vmatpush1.msra.mxu0 0.0
      %1601 = vmatprep.subr.mxu0 0.0
      %1602 = vmatpush1.msra.mxu0 0.0
      %1603 = vmatprep.subr.mxu0 0.0
      %1604 = vmatpush1.msra.mxu0 0.0
      %1605 = vmatprep.subr.mxu0 0.0
      %1606 = vmatpush1.msra.mxu0 0.0
      %1607 = vmatprep.subr.mxu0 0.0
      %1608 = vmatpush1.msra.mxu0 0.0
      %1609 = vmatprep.subr.mxu0 0.0
      %1610 = vmatpush1.msra.mxu0 0.0
      %1611 = vmatprep.subr.mxu0 0.0
      %1612 = vmatpush1.msra.mxu0 0.0
      %1613 = vmatprep.subr.mxu0 0.0
      %1614 = vmatpush1.msra.mxu0 0.0
      %1615 = vmatprep.subr.mxu0 0.0
      %1616 = vmatpush1.msra.mxu0 0.0
      %1617 = vmatprep.subr.mxu0 0.0
      %1618 = vmatpush1.msra.mxu0 0.0
      %1619 = vmatprep.subr.mxu0 0.0
      %1620 = vmatpush1.msra.mxu0 0.0
      %1621 = vmatprep.subr.mxu0 %v1470
      %1622 = vmatpush1.msra.mxu0 %v1469
      %1623 = vmatprep.subr.mxu0 %v1468
      %1624 = vmatpush1.msra.mxu0 %v1467
      %1625 = vmatprep.subr.mxu0 0.0
      %1626 = vmatpush2.msra.mxu0 0.0
      %1627 = vmatprep.subr.mxu0 0.0
      %1628 = vmatpush2.msra.mxu0 0.0
      %1629 = vmatprep.subr.mxu0 0.0
      %1630 = vmatpush2.msra.mxu0 0.0
      %1631 = vmatprep.subr.mxu0 0.0
      %1632 = vmatpush2.msra.mxu0 0.0
      %1633 = vmatprep.subr.mxu0 0.0
      %1634 = vmatpush2.msra.mxu0 0.0
      %1635 = vmatprep.subr.mxu0 0.0
      %1636 = vmatpush2.msra.mxu0 0.0
      %1637 = vmatprep.subr.mxu0 0.0
      %1638 = vmatpush2.msra.mxu0 0.0
      %1639 = vmatprep.subr.mxu0 0.0
      %1640 = vmatpush2.msra.mxu0 0.0
      %1641 = vmatprep.subr.mxu0 0.0
      %1642 = vmatpush2.msra.mxu0 0.0
      %1643 = vmatprep.subr.mxu0 0.0
      %1644 = vmatpush2.msra.mxu0 0.0
      %1645 = vmatprep.subr.mxu0 0.0
      %1646 = vmatpush2.msra.mxu0 0.0
      %1647 = vmatprep.subr.mxu0 0.0
      %1648 = vmatpush2.msra.mxu0 0.0
      %1649 = vmatprep.subr.mxu0 0.0
      %1650 = vmatpush2.msra.mxu0 0.0
      %1651 = vmatprep.subr.mxu0 0.0
      %1652 = vmatpush2.msra.mxu0 0.0
      %1653 = vmatprep.subr.mxu0 0.0
      %1654 = vmatpush2.msra.mxu0 0.0
      %1655 = vmatprep.subr.mxu0 0.0
      %1656 = vmatpush2.msra.mxu0 0.0
      %1657 = vmatprep.mubr.f32.mxu0 0.0
      %1658 = vmatmul.mubr.f32.gmra.mxu0 %v1588
      %v1659 = vpop.f32.mrf.mxu0
      %v1660 = vadd.f32 %v1577, %v1659
      %v1661 = vpop.f32.mrf.mxu0
      %v1662 = vadd.f32 %v1579, %v1661
      %1663 = vmatprep.mubr.f32.mxu0 0.0
      %1664 = vmatmul.mubr.f32.gmra.mxu0 %v1591
      %v1665 = vpop.f32.mrf.mxu0
      %v1666 = vadd.f32 %v1583, %v1665
      %v1667 = vpop.f32.mrf.mxu0
      %v1668 = vadd.f32 %v1585, %v1667
      %1669 = vdwg.mxu0
      %v1670 = vmul.f32 %v1463, %v628
      %v1671 = vmul.f32 %v1464, %v632
      %v1672 = vmul.f32 %v1473, %v630
      %v1673 = vmul.f32 %v1465, %v628
      %v1674 = vmul.f32 %v1466, %v632
      %v1675 = vmul.f32 %v1474, %v630
      %s1676 = scalar_lea.vmem %s5, 32
      %v1677 = vld [vmem:[%s1676] sm:$0xff]
      %v1678 = vld [vmem:[%s1676 + $0x8] sm:$0xff]
      %1685 = vrot.lane.b32.xlu0 %v1670, 126
      %v1686 = vpop.permute.xlu0 %1685
      %1687 = vrot.lane.b32.xlu0 %v1671, 126
      %v1688 = vpop.permute.xlu0 %1687
      %1689 = vrot.lane.b32.xlu0 %v1672, 126
      %v1690 = vpop.permute.xlu0 %1689
      %1691 = vrot.lane.b32.xlu0 %v1673, 126
      %v1692 = vpop.permute.xlu0 %1691
      %1693 = vrot.lane.b32.xlu0 %v1674, 126
      %v1694 = vpop.permute.xlu0 %1693
      %1695 = vrot.lane.b32.xlu0 %v1675, 126
      %v1696 = vpop.permute.xlu0 %1695
      %v1697 = vsel %vm651, %v1686, %v1688
      %v1698 = vsel %vm651, %v1688, %v1690
      %v1699 = vsel %vm651, %v1692, %v1694
      %v1700 = vsel %vm651, %v1694, %v1696
      %v1706 = vsel %vm747, %v1677, 0
      %v1709 = vsel %vm747, %v1678, 0
      %1711 = vmatprep.subr.mxu0 0.0
      %1712 = vmatpush1.msra.mxu0 0.0
      %1713 = vmatprep.subr.mxu0 0.0
      %1714 = vmatpush1.msra.mxu0 0.0
      %1715 = vmatprep.subr.mxu0 0.0
      %1716 = vmatpush1.msra.mxu0 0.0
      %1717 = vmatprep.subr.mxu0 0.0
      %1718 = vmatpush1.msra.mxu0 0.0
      %1719 = vmatprep.subr.mxu0 0.0
      %1720 = vmatpush1.msra.mxu0 0.0
      %1721 = vmatprep.subr.mxu0 0.0
      %1722 = vmatpush1.msra.mxu0 0.0
      %1723 = vmatprep.subr.mxu0 0.0
      %1724 = vmatpush1.msra.mxu0 0.0
      %1725 = vmatprep.subr.mxu0 0.0
      %1726 = vmatpush1.msra.mxu0 0.0
      %1727 = vmatprep.subr.mxu0 0.0
      %1728 = vmatpush1.msra.mxu0 0.0
      %1729 = vmatprep.subr.mxu0 0.0
      %1730 = vmatpush1.msra.mxu0 0.0
      %1731 = vmatprep.subr.mxu0 0.0
      %1732 = vmatpush1.msra.mxu0 0.0
      %1733 = vmatprep.subr.mxu0 0.0
      %1734 = vmatpush1.msra.mxu0 0.0
      %1735 = vmatprep.subr.mxu0 0.0
      %1736 = vmatpush1.msra.mxu0 0.0
      %1737 = vmatprep.subr.mxu0 0.0
      %1738 = vmatpush1.msra.mxu0 0.0
      %1739 = vmatprep.subr.mxu0 %v1700
      %1740 = vmatpush1.msra.mxu0 %v1699
      %1741 = vmatprep.subr.mxu0 %v1698
      %1742 = vmatpush1.msra.mxu0 %v1697
      %1743 = vmatprep.subr.mxu0 0.0
      %1744 = vmatpush2.msra.mxu0 0.0
      %1745 = vmatprep.subr.mxu0 0.0
      %1746 = vmatpush2.msra.mxu0 0.0
      %1747 = vmatprep.subr.mxu0 0.0
      %1748 = vmatpush2.msra.mxu0 0.0
      %1749 = vmatprep.subr.mxu0 0.0
      %1750 = vmatpush2.msra.mxu0 0.0
      %1751 = vmatprep.subr.mxu0 0.0
      %1752 = vmatpush2.msra.mxu0 0.0
      %1753 = vmatprep.subr.mxu0 0.0
      %1754 = vmatpush2.msra.mxu0 0.0
      %1755 = vmatprep.subr.mxu0 0.0
      %1756 = vmatpush2.msra.mxu0 0.0
      %1757 = vmatprep.subr.mxu0 0.0
      %1758 = vmatpush2.msra.mxu0 0.0
      %1759 = vmatprep.subr.mxu0 0.0
      %1760 = vmatpush2.msra.mxu0 0.0
      %1761 = vmatprep.subr.mxu0 0.0
      %1762 = vmatpush2.msra.mxu0 0.0
      %1763 = vmatprep.subr.mxu0 0.0
      %1764 = vmatpush2.msra.mxu0 0.0
      %1765 = vmatprep.subr.mxu0 0.0
      %1766 = vmatpush2.msra.mxu0 0.0
      %1767 = vmatprep.subr.mxu0 0.0
      %1768 = vmatpush2.msra.mxu0 0.0
      %1769 = vmatprep.subr.mxu0 0.0
      %1770 = vmatpush2.msra.mxu0 0.0
      %1771 = vmatprep.subr.mxu0 0.0
      %1772 = vmatpush2.msra.mxu0 0.0
      %1773 = vmatprep.subr.mxu0 0.0
      %1774 = vmatpush2.msra.mxu0 0.0
      %1775 = vmatprep.mubr.f32.mxu0 0.0
      %1776 = vmatmul.mubr.f32.gmra.mxu0 %v1706
      %v1777 = vpop.f32.mrf.mxu0
      %v1778 = vadd.f32 0.0, %v1777
      %v1779 = vpop.f32.mrf.mxu0
      %v1780 = vadd.f32 0.0, %v1779
      %1781 = vmatprep.mubr.f32.mxu0 0.0
      %1782 = vmatmul.mubr.f32.gmra.mxu0 %v1709
      %v1783 = vpop.f32.mrf.mxu0
      %v1784 = vadd.f32 0.0, %v1783
      %v1785 = vpop.f32.mrf.mxu0
      %v1786 = vadd.f32 0.0, %v1785
      %1787 = vdwg.mxu0
      %v1788 = vadd.f32 %v1660, %v1778
      %v1789 = vadd.f32 %v1662, %v1780
      %v1790 = vadd.f32 %v1666, %v1784
      %v1791 = vadd.f32 %v1668, %v1786
      %v1792 = vmul.f32 %v1463, %v744
      %v1793 = vmul.f32 %v1464, %v748
      %v1794 = vmul.f32 %v1473, %v746
      %v1795 = vmul.f32 %v1465, %v744
      %v1796 = vmul.f32 %v1466, %v748
      %v1797 = vmul.f32 %v1474, %v746
      %s1798 = scalar_lea.vmem %s5, 48
      %v1799 = vld [vmem:[%s1798] sm:$0xff]
      %v1800 = vld [vmem:[%s1798 + $0x8] sm:$0xff]
      %1807 = vrot.lane.b32.xlu0 %v1792, 112
      %v1808 = vpop.permute.xlu0 %1807
      %1809 = vrot.lane.b32.xlu0 %v1793, 112
      %v1810 = vpop.permute.xlu0 %1809
      %1811 = vrot.lane.b32.xlu0 %v1794, 112
      %v1812 = vpop.permute.xlu0 %1811
      %1813 = vrot.lane.b32.xlu0 %v1795, 112
      %v1814 = vpop.permute.xlu0 %1813
      %1815 = vrot.lane.b32.xlu0 %v1796, 112
      %v1816 = vpop.permute.xlu0 %1815
      %1817 = vrot.lane.b32.xlu0 %v1797, 112
      %v1818 = vpop.permute.xlu0 %1817
      %v1819 = vsel %vm767, %v1808, %v1810
      %v1820 = vsel %vm767, %v1810, %v1812
      %v1821 = vsel %vm767, %v1814, %v1816
      %v1822 = vsel %vm767, %v1816, %v1818
      %v1828 = vsel %vm747, %v1799, 0
      %v1831 = vsel %vm747, %v1800, 0
      %1833 = vmatprep.subr.mxu0 0.0
      %1834 = vmatpush1.msra.mxu0 0.0
      %1835 = vmatprep.subr.mxu0 0.0
      %1836 = vmatpush1.msra.mxu0 0.0
      %1837 = vmatprep.subr.mxu0 0.0
      %1838 = vmatpush1.msra.mxu0 0.0
      %1839 = vmatprep.subr.mxu0 0.0
      %1840 = vmatpush1.msra.mxu0 0.0
      %1841 = vmatprep.subr.mxu0 0.0
      %1842 = vmatpush1.msra.mxu0 0.0
      %1843 = vmatprep.subr.mxu0 0.0
      %1844 = vmatpush1.msra.mxu0 0.0
      %1845 = vmatprep.subr.mxu0 0.0
      %1846 = vmatpush1.msra.mxu0 0.0
      %1847 = vmatprep.subr.mxu0 0.0
      %1848 = vmatpush1.msra.mxu0 0.0
      %1849 = vmatprep.subr.mxu0 0.0
      %1850 = vmatpush1.msra.mxu0 0.0
      %1851 = vmatprep.subr.mxu0 0.0
      %1852 = vmatpush1.msra.mxu0 0.0
      %1853 = vmatprep.subr.mxu0 0.0
      %1854 = vmatpush1.msra.mxu0 0.0
      %1855 = vmatprep.subr.mxu0 0.0
      %1856 = vmatpush1.msra.mxu0 0.0
      %1857 = vmatprep.subr.mxu0 0.0
      %1858 = vmatpush1.msra.mxu0 0.0
      %1859 = vmatprep.subr.mxu0 0.0
      %1860 = vmatpush1.msra.mxu0 0.0
      %1861 = vmatprep.subr.mxu0 %v1822
      %1862 = vmatpush1.msra.mxu0 %v1821
      %1863 = vmatprep.subr.mxu0 %v1820
      %1864 = vmatpush1.msra.mxu0 %v1819
      %1865 = vmatprep.subr.mxu0 0.0
      %1866 = vmatpush2.msra.mxu0 0.0
      %1867 = vmatprep.subr.mxu0 0.0
      %1868 = vmatpush2.msra.mxu0 0.0
      %1869 = vmatprep.subr.mxu0 0.0
      %1870 = vmatpush2.msra.mxu0 0.0
      %1871 = vmatprep.subr.mxu0 0.0
      %1872 = vmatpush2.msra.mxu0 0.0
      %1873 = vmatprep.subr.mxu0 0.0
      %1874 = vmatpush2.msra.mxu0 0.0
      %1875 = vmatprep.subr.mxu0 0.0
      %1876 = vmatpush2.msra.mxu0 0.0
      %1877 = vmatprep.subr.mxu0 0.0
      %1878 = vmatpush2.msra.mxu0 0.0
      %1879 = vmatprep.subr.mxu0 0.0
      %1880 = vmatpush2.msra.mxu0 0.0
      %1881 = vmatprep.subr.mxu0 0.0
      %1882 = vmatpush2.msra.mxu0 0.0
      %1883 = vmatprep.subr.mxu0 0.0
      %1884 = vmatpush2.msra.mxu0 0.0
      %1885 = vmatprep.subr.mxu0 0.0
      %1886 = vmatpush2.msra.mxu0 0.0
      %1887 = vmatprep.subr.mxu0 0.0
      %1888 = vmatpush2.msra.mxu0 0.0
      %1889 = vmatprep.subr.mxu0 0.0
      %1890 = vmatpush2.msra.mxu0 0.0
      %1891 = vmatprep.subr.mxu0 0.0
      %1892 = vmatpush2.msra.mxu0 0.0
      %1893 = vmatprep.subr.mxu0 0.0
      %1894 = vmatpush2.msra.mxu0 0.0
      %1895 = vmatprep.subr.mxu0 0.0
      %1896 = vmatpush2.msra.mxu0 0.0
      %1897 = vmatprep.mubr.f32.mxu0 0.0
      %1898 = vmatmul.mubr.f32.gmra.mxu0 %v1828
      %v1899 = vpop.f32.mrf.mxu0
      %v1900 = vadd.f32 0.0, %v1899
      %v1901 = vpop.f32.mrf.mxu0
      %v1902 = vadd.f32 0.0, %v1901
      %1903 = vmatprep.mubr.f32.mxu0 0.0
      %1904 = vmatmul.mubr.f32.gmra.mxu0 %v1831
      %v1905 = vpop.f32.mrf.mxu0
      %v1906 = vadd.f32 0.0, %v1905
      %v1907 = vpop.f32.mrf.mxu0
      %v1908 = vadd.f32 0.0, %v1907
      %1909 = vdwg.mxu0
      %v1910 = vadd.f32 %v1788, %v1900
      %v1911 = vadd.f32 %v1789, %v1902
      %v1912 = vadd.f32 %v1790, %v1906
      %v1913 = vadd.f32 %v1791, %v1908
      %s1914 = scalar_lea.vmem %s5, 64
      %v1915 = vld [vmem:[%s1914] sm:$0xff]
      %v1916 = vld [vmem:[%s1914 + $0x8] sm:$0xff]
      %1917 = vrot.lane.b32.xlu0 %v1463, 111
      %v1918 = vpop.permute.xlu0 %1917
      %1919 = vrot.lane.b32.xlu0 %v1464, 111
      %v1920 = vpop.permute.xlu0 %1919
      %1921 = vrot.lane.b32.xlu0 %v1473, 111
      %v1922 = vpop.permute.xlu0 %1921
      %1923 = vrot.lane.b32.xlu0 %v1465, 111
      %v1924 = vpop.permute.xlu0 %1923
      %1925 = vrot.lane.b32.xlu0 %v1466, 111
      %v1926 = vpop.permute.xlu0 %1925
      %1927 = vrot.lane.b32.xlu0 %v1474, 111
      %v1928 = vpop.permute.xlu0 %1927
      %v1929 = vsel %vm868, %v1918, %v1920
      %v1930 = vsel %vm868, %v1920, %v1922
      %v1931 = vsel %vm868, %v1924, %v1926
      %v1932 = vsel %vm868, %v1926, %v1928
      %v1938 = vsel %vm747, %v1915, 0
      %v1941 = vsel %vm747, %v1916, 0
      %1943 = vmatprep.subr.mxu0 0.0
      %1944 = vmatpush1.msra.mxu0 0.0
      %1945 = vmatprep.subr.mxu0 0.0
      %1946 = vmatpush1.msra.mxu0 0.0
      %1947 = vmatprep.subr.mxu0 0.0
      %1948 = vmatpush1.msra.mxu0 0.0
      %1949 = vmatprep.subr.mxu0 0.0
      %1950 = vmatpush1.msra.mxu0 0.0
      %1951 = vmatprep.subr.mxu0 0.0
      %1952 = vmatpush1.msra.mxu0 0.0
      %1953 = vmatprep.subr.mxu0 0.0
      %1954 = vmatpush1.msra.mxu0 0.0
      %1955 = vmatprep.subr.mxu0 0.0
      %1956 = vmatpush1.msra.mxu0 0.0
      %1957 = vmatprep.subr.mxu0 0.0
      %1958 = vmatpush1.msra.mxu0 0.0
      %1959 = vmatprep.subr.mxu0 0.0
      %1960 = vmatpush1.msra.mxu0 0.0
      %1961 = vmatprep.subr.mxu0 0.0
      %1962 = vmatpush1.msra.mxu0 0.0
      %1963 = vmatprep.subr.mxu0 0.0
      %1964 = vmatpush1.msra.mxu0 0.0
      %1965 = vmatprep.subr.mxu0 0.0
      %1966 = vmatpush1.msra.mxu0 0.0
      %1967 = vmatprep.subr.mxu0 0.0
      %1968 = vmatpush1.msra.mxu0 0.0
      %1969 = vmatprep.subr.mxu0 0.0
      %1970 = vmatpush1.msra.mxu0 0.0
      %1971 = vmatprep.subr.mxu0 %v1932
      %1972 = vmatpush1.msra.mxu0 %v1931
      %1973 = vmatprep.subr.mxu0 %v1930
      %1974 = vmatpush1.msra.mxu0 %v1929
      %1975 = vmatprep.subr.mxu0 0.0
      %1976 = vmatpush2.msra.mxu0 0.0
      %1977 = vmatprep.subr.mxu0 0.0
      %1978 = vmatpush2.msra.mxu0 0.0
      %1979 = vmatprep.subr.mxu0 0.0
      %1980 = vmatpush2.msra.mxu0 0.0
      %1981 = vmatprep.subr.mxu0 0.0
      %1982 = vmatpush2.msra.mxu0 0.0
      %1983 = vmatprep.subr.mxu0 0.0
      %1984 = vmatpush2.msra.mxu0 0.0
      %1985 = vmatprep.subr.mxu0 0.0
      %1986 = vmatpush2.msra.mxu0 0.0
      %1987 = vmatprep.subr.mxu0 0.0
      %1988 = vmatpush2.msra.mxu0 0.0
      %1989 = vmatprep.subr.mxu0 0.0
      %1990 = vmatpush2.msra.mxu0 0.0
      %1991 = vmatprep.subr.mxu0 0.0
      %1992 = vmatpush2.msra.mxu0 0.0
      %1993 = vmatprep.subr.mxu0 0.0
      %1994 = vmatpush2.msra.mxu0 0.0
      %1995 = vmatprep.subr.mxu0 0.0
      %1996 = vmatpush2.msra.mxu0 0.0
      %1997 = vmatprep.subr.mxu0 0.0
      %1998 = vmatpush2.msra.mxu0 0.0
      %1999 = vmatprep.subr.mxu0 0.0
      %2000 = vmatpush2.msra.mxu0 0.0
      %2001 = vmatprep.subr.mxu0 0.0
      %2002 = vmatpush2.msra.mxu0 0.0
      %2003 = vmatprep.subr.mxu0 0.0
      %2004 = vmatpush2.msra.mxu0 0.0
      %2005 = vmatprep.subr.mxu0 0.0
      %2006 = vmatpush2.msra.mxu0 0.0
      %2007 = vmatprep.mubr.f32.mxu0 0.0
      %2008 = vmatmul.mubr.f32.gmra.mxu0 %v1938
      %v2009 = vpop.f32.mrf.mxu0
      %v2010 = vadd.f32 0.0, %v2009
      %v2011 = vpop.f32.mrf.mxu0
      %v2012 = vadd.f32 0.0, %v2011
      %2013 = vmatprep.mubr.f32.mxu0 0.0
      %2014 = vmatmul.mubr.f32.gmra.mxu0 %v1941
      %v2015 = vpop.f32.mrf.mxu0
      %v2016 = vadd.f32 0.0, %v2015
      %v2017 = vpop.f32.mrf.mxu0
      %v2018 = vadd.f32 0.0, %v2017
      %2019 = vdwg.mxu0
      %v2020 = vadd.f32 %v1910, %v2010
      %v2021 = vadd.f32 %v1911, %v2012
      %v2022 = vadd.f32 %v1912, %v2016
      %v2023 = vadd.f32 %v1913, %v2018
      %v2024 = vmul.f32 %v1463, %v961
      %v2025 = vmul.f32 %v1464, %v965
      %v2026 = vmul.f32 %v1473, %v963
      %v2027 = vmul.f32 %v1465, %v961
      %v2028 = vmul.f32 %v1466, %v965
      %v2029 = vmul.f32 %v1474, %v963
      %s2030 = scalar_lea.vmem %s5, 80
      %v2031 = vld [vmem:[%s2030] sm:$0xff]
      %v2032 = vld [vmem:[%s2030 + $0x8] sm:$0xff]
      %2039 = vrot.lane.b32.xlu0 %v2024, 110
      %v2040 = vpop.permute.xlu0 %2039
      %2041 = vrot.lane.b32.xlu0 %v2025, 110
      %v2042 = vpop.permute.xlu0 %2041
      %2043 = vrot.lane.b32.xlu0 %v2026, 110
      %v2044 = vpop.permute.xlu0 %2043
      %2045 = vrot.lane.b32.xlu0 %v2027, 110
      %v2046 = vpop.permute.xlu0 %2045
      %2047 = vrot.lane.b32.xlu0 %v2028, 110
      %v2048 = vpop.permute.xlu0 %2047
      %2049 = vrot.lane.b32.xlu0 %v2029, 110
      %v2050 = vpop.permute.xlu0 %2049
      %v2051 = vsel %vm984, %v2040, %v2042
      %v2052 = vsel %vm984, %v2042, %v2044
      %v2053 = vsel %vm984, %v2046, %v2048
      %v2054 = vsel %vm984, %v2048, %v2050
      %v2060 = vsel %vm747, %v2031, 0
      %v2063 = vsel %vm747, %v2032, 0
      %2065 = vmatprep.subr.mxu0 0.0
      %2066 = vmatpush1.msra.mxu0 0.0
      %2067 = vmatprep.subr.mxu0 0.0
      %2068 = vmatpush1.msra.mxu0 0.0
      %2069 = vmatprep.subr.mxu0 0.0
      %2070 = vmatpush1.msra.mxu0 0.0
      %2071 = vmatprep.subr.mxu0 0.0
      %2072 = vmatpush1.msra.mxu0 0.0
      %2073 = vmatprep.subr.mxu0 0.0
      %2074 = vmatpush1.msra.mxu0 0.0
      %2075 = vmatprep.subr.mxu0 0.0
      %2076 = vmatpush1.msra.mxu0 0.0
      %2077 = vmatprep.subr.mxu0 0.0
      %2078 = vmatpush1.msra.mxu0 0.0
      %2079 = vmatprep.subr.mxu0 0.0
      %2080 = vmatpush1.msra.mxu0 0.0
      %2081 = vmatprep.subr.mxu0 0.0
      %2082 = vmatpush1.msra.mxu0 0.0
      %2083 = vmatprep.subr.mxu0 0.0
      %2084 = vmatpush1.msra.mxu0 0.0
      %2085 = vmatprep.subr.mxu0 0.0
      %2086 = vmatpush1.msra.mxu0 0.0
      %2087 = vmatprep.subr.mxu0 0.0
      %2088 = vmatpush1.msra.mxu0 0.0
      %2089 = vmatprep.subr.mxu0 0.0
      %2090 = vmatpush1.msra.mxu0 0.0
      %2091 = vmatprep.subr.mxu0 0.0
      %2092 = vmatpush1.msra.mxu0 0.0
      %2093 = vmatprep.subr.mxu0 %v2054
      %2094 = vmatpush1.msra.mxu0 %v2053
      %2095 = vmatprep.subr.mxu0 %v2052
      %2096 = vmatpush1.msra.mxu0 %v2051
      %2097 = vmatprep.subr.mxu0 0.0
      %2098 = vmatpush2.msra.mxu0 0.0
      %2099 = vmatprep.subr.mxu0 0.0
      %2100 = vmatpush2.msra.mxu0 0.0
      %2101 = vmatprep.subr.mxu0 0.0
      %2102 = vmatpush2.msra.mxu0 0.0
      %2103 = vmatprep.subr.mxu0 0.0
      %2104 = vmatpush2.msra.mxu0 0.0
      %2105 = vmatprep.subr.mxu0 0.0
      %2106 = vmatpush2.msra.mxu0 0.0
      %2107 = vmatprep.subr.mxu0 0.0
      %2108 = vmatpush2.msra.mxu0 0.0
      %2109 = vmatprep.subr.mxu0 0.0
      %2110 = vmatpush2.msra.mxu0 0.0
      %2111 = vmatprep.subr.mxu0 0.0
      %2112 = vmatpush2.msra.mxu0 0.0
      %2113 = vmatprep.subr.mxu0 0.0
      %2114 = vmatpush2.msra.mxu0 0.0
      %2115 = vmatprep.subr.mxu0 0.0
      %2116 = vmatpush2.msra.mxu0 0.0
      %2117 = vmatprep.subr.mxu0 0.0
      %2118 = vmatpush2.msra.mxu0 0.0
      %2119 = vmatprep.subr.mxu0 0.0
      %2120 = vmatpush2.msra.mxu0 0.0
      %2121 = vmatprep.subr.mxu0 0.0
      %2122 = vmatpush2.msra.mxu0 0.0
      %2123 = vmatprep.subr.mxu0 0.0
      %2124 = vmatpush2.msra.mxu0 0.0
      %2125 = vmatprep.subr.mxu0 0.0
      %2126 = vmatpush2.msra.mxu0 0.0
      %2127 = vmatprep.subr.mxu0 0.0
      %2128 = vmatpush2.msra.mxu0 0.0
      %2129 = vmatprep.mubr.f32.mxu0 0.0
      %2130 = vmatmul.mubr.f32.gmra.mxu0 %v2060
      %v2131 = vpop.f32.mrf.mxu0
      %v2132 = vadd.f32 0.0, %v2131
      %v2133 = vpop.f32.mrf.mxu0
      %v2134 = vadd.f32 0.0, %v2133
      %2135 = vmatprep.mubr.f32.mxu0 0.0
      %2136 = vmatmul.mubr.f32.gmra.mxu0 %v2063
      %v2137 = vpop.f32.mrf.mxu0
      %v2138 = vadd.f32 0.0, %v2137
      %v2139 = vpop.f32.mrf.mxu0
      %v2140 = vadd.f32 0.0, %v2139
      %2141 = vdwg.mxu0
      %v2142 = vadd.f32 %v2020, %v2132
      %v2143 = vadd.f32 %v2021, %v2134
      %v2144 = vadd.f32 %v2022, %v2138
      %v2145 = vadd.f32 %v2023, %v2140
      %v2146 = vmul.f32 %v1463, %v1077
      %v2147 = vmul.f32 %v1464, %v1081
      %v2148 = vmul.f32 %v1473, %v1079
      %v2149 = vmul.f32 %v1465, %v1077
      %v2150 = vmul.f32 %v1466, %v1081
      %v2151 = vmul.f32 %v1474, %v1079
      %s2152 = scalar_lea.vmem %s5, 96
      %v2153 = vld [vmem:[%s2152] sm:$0xff]
      %v2154 = vld [vmem:[%s2152 + $0x8] sm:$0xff]
      %2161 = vrot.lane.b32.xlu0 %v2146, 96
      %v2162 = vpop.permute.xlu0 %2161
      %2163 = vrot.lane.b32.xlu0 %v2147, 96
      %v2164 = vpop.permute.xlu0 %2163
      %2165 = vrot.lane.b32.xlu0 %v2148, 96
      %v2166 = vpop.permute.xlu0 %2165
      %2167 = vrot.lane.b32.xlu0 %v2149, 96
      %v2168 = vpop.permute.xlu0 %2167
      %2169 = vrot.lane.b32.xlu0 %v2150, 96
      %v2170 = vpop.permute.xlu0 %2169
      %2171 = vrot.lane.b32.xlu0 %v2151, 96
      %v2172 = vpop.permute.xlu0 %2171
      %v2173 = vsel %vm1100, %v2162, %v2164
      %v2174 = vsel %vm1100, %v2164, %v2166
      %v2175 = vsel %vm1100, %v2168, %v2170
      %v2176 = vsel %vm1100, %v2170, %v2172
      %v2182 = vsel %vm747, %v2153, 0
      %v2185 = vsel %vm747, %v2154, 0
      %2187 = vmatprep.subr.mxu0 0.0
      %2188 = vmatpush1.msra.mxu0 0.0
      %2189 = vmatprep.subr.mxu0 0.0
      %2190 = vmatpush1.msra.mxu0 0.0
      %2191 = vmatprep.subr.mxu0 0.0
      %2192 = vmatpush1.msra.mxu0 0.0
      %2193 = vmatprep.subr.mxu0 0.0
      %2194 = vmatpush1.msra.mxu0 0.0
      %2195 = vmatprep.subr.mxu0 0.0
      %2196 = vmatpush1.msra.mxu0 0.0
      %2197 = vmatprep.subr.mxu0 0.0
      %2198 = vmatpush1.msra.mxu0 0.0
      %2199 = vmatprep.subr.mxu0 0.0
      %2200 = vmatpush1.msra.mxu0 0.0
      %2201 = vmatprep.subr.mxu0 0.0
      %2202 = vmatpush1.msra.mxu0 0.0
      %2203 = vmatprep.subr.mxu0 0.0
      %2204 = vmatpush1.msra.mxu0 0.0
      %2205 = vmatprep.subr.mxu0 0.0
      %2206 = vmatpush1.msra.mxu0 0.0
      %2207 = vmatprep.subr.mxu0 0.0
      %2208 = vmatpush1.msra.mxu0 0.0
      %2209 = vmatprep.subr.mxu0 0.0
      %2210 = vmatpush1.msra.mxu0 0.0
      %2211 = vmatprep.subr.mxu0 0.0
      %2212 = vmatpush1.msra.mxu0 0.0
      %2213 = vmatprep.subr.mxu0 0.0
      %2214 = vmatpush1.msra.mxu0 0.0
      %2215 = vmatprep.subr.mxu0 %v2176
      %2216 = vmatpush1.msra.mxu0 %v2175
      %2217 = vmatprep.subr.mxu0 %v2174
      %2218 = vmatpush1.msra.mxu0 %v2173
      %2219 = vmatprep.subr.mxu0 0.0
      %2220 = vmatpush2.msra.mxu0 0.0
      %2221 = vmatprep.subr.mxu0 0.0
      %2222 = vmatpush2.msra.mxu0 0.0
      %2223 = vmatprep.subr.mxu0 0.0
      %2224 = vmatpush2.msra.mxu0 0.0
      %2225 = vmatprep.subr.mxu0 0.0
      %2226 = vmatpush2.msra.mxu0 0.0
      %2227 = vmatprep.subr.mxu0 0.0
      %2228 = vmatpush2.msra.mxu0 0.0
      %2229 = vmatprep.subr.mxu0 0.0
      %2230 = vmatpush2.msra.mxu0 0.0
      %2231 = vmatprep.subr.mxu0 0.0
      %2232 = vmatpush2.msra.mxu0 0.0
      %2233 = vmatprep.subr.mxu0 0.0
      %2234 = vmatpush2.msra.mxu0 0.0
      %2235 = vmatprep.subr.mxu0 0.0
      %2236 = vmatpush2.msra.mxu0 0.0
      %2237 = vmatprep.subr.mxu0 0.0
      %2238 = vmatpush2.msra.mxu0 0.0
      %2239 = vmatprep.subr.mxu0 0.0
      %2240 = vmatpush2.msra.mxu0 0.0
      %2241 = vmatprep.subr.mxu0 0.0
      %2242 = vmatpush2.msra.mxu0 0.0
      %2243 = vmatprep.subr.mxu0 0.0
      %2244 = vmatpush2.msra.mxu0 0.0
      %2245 = vmatprep.subr.mxu0 0.0
      %2246 = vmatpush2.msra.mxu0 0.0
      %2247 = vmatprep.subr.mxu0 0.0
      %2248 = vmatpush2.msra.mxu0 0.0
      %2249 = vmatprep.subr.mxu0 0.0
      %2250 = vmatpush2.msra.mxu0 0.0
      %2251 = vmatprep.mubr.f32.mxu0 0.0
      %2252 = vmatmul.mubr.f32.gmra.mxu0 %v2182
      %v2253 = vpop.f32.mrf.mxu0
      %v2254 = vadd.f32 0.0, %v2253
      %v2255 = vpop.f32.mrf.mxu0
      %v2256 = vadd.f32 0.0, %v2255
      %2257 = vmatprep.mubr.f32.mxu0 0.0
      %2258 = vmatmul.mubr.f32.gmra.mxu0 %v2185
      %v2259 = vpop.f32.mrf.mxu0
      %v2260 = vadd.f32 0.0, %v2259
      %v2261 = vpop.f32.mrf.mxu0
      %v2262 = vadd.f32 0.0, %v2261
      %2263 = vdwg.mxu0
      %v2264 = vadd.f32 %v2142, %v2254
      %v2265 = vadd.f32 %v2143, %v2256
      %v2266 = vadd.f32 %v2144, %v2260
      %v2267 = vadd.f32 %v2145, %v2262
      %s2268 = scalar_lea.vmem %s5, 112
      %v2269 = vld [vmem:[%s2268] sm:$0xff]
      %v2270 = vld [vmem:[%s2268 + $0x8] sm:$0xff]
      %2271 = vrot.lane.b32.xlu0 %v1463, 95
      %v2272 = vpop.permute.xlu0 %2271
      %2273 = vrot.lane.b32.xlu0 %v1464, 95
      %v2274 = vpop.permute.xlu0 %2273
      %2275 = vrot.lane.b32.xlu0 %v1473, 95
      %v2276 = vpop.permute.xlu0 %2275
      %2277 = vrot.lane.b32.xlu0 %v1465, 95
      %v2278 = vpop.permute.xlu0 %2277
      %2279 = vrot.lane.b32.xlu0 %v1466, 95
      %v2280 = vpop.permute.xlu0 %2279
      %2281 = vrot.lane.b32.xlu0 %v1474, 95
      %v2282 = vpop.permute.xlu0 %2281
      %v2283 = vsel %vm1201, %v2272, %v2274
      %v2284 = vsel %vm1201, %v2274, %v2276
      %v2285 = vsel %vm1201, %v2278, %v2280
      %v2286 = vsel %vm1201, %v2280, %v2282
      %v2292 = vsel %vm747, %v2269, 0
      %v2295 = vsel %vm747, %v2270, 0
      %2297 = vmatprep.subr.mxu0 0.0
      %2298 = vmatpush1.msra.mxu0 0.0
      %2299 = vmatprep.subr.mxu0 0.0
      %2300 = vmatpush1.msra.mxu0 0.0
      %2301 = vmatprep.subr.mxu0 0.0
      %2302 = vmatpush1.msra.mxu0 0.0
      %2303 = vmatprep.subr.mxu0 0.0
      %2304 = vmatpush1.msra.mxu0 0.0
      %2305 = vmatprep.subr.mxu0 0.0
      %2306 = vmatpush1.msra.mxu0 0.0
      %2307 = vmatprep.subr.mxu0 0.0
      %2308 = vmatpush1.msra.mxu0 0.0
      %2309 = vmatprep.subr.mxu0 0.0
      %2310 = vmatpush1.msra.mxu0 0.0
      %2311 = vmatprep.subr.mxu0 0.0
      %2312 = vmatpush1.msra.mxu0 0.0
      %2313 = vmatprep.subr.mxu0 0.0
      %2314 = vmatpush1.msra.mxu0 0.0
      %2315 = vmatprep.subr.mxu0 0.0
      %2316 = vmatpush1.msra.mxu0 0.0
      %2317 = vmatprep.subr.mxu0 0.0
      %2318 = vmatpush1.msra.mxu0 0.0
      %2319 = vmatprep.subr.mxu0 0.0
      %2320 = vmatpush1.msra.mxu0 0.0
      %2321 = vmatprep.subr.mxu0 0.0
      %2322 = vmatpush1.msra.mxu0 0.0
      %2323 = vmatprep.subr.mxu0 0.0
      %2324 = vmatpush1.msra.mxu0 0.0
      %2325 = vmatprep.subr.mxu0 %v2286
      %2326 = vmatpush1.msra.mxu0 %v2285
      %2327 = vmatprep.subr.mxu0 %v2284
      %2328 = vmatpush1.msra.mxu0 %v2283
      %2329 = vmatprep.subr.mxu0 0.0
      %2330 = vmatpush2.msra.mxu0 0.0
      %2331 = vmatprep.subr.mxu0 0.0
      %2332 = vmatpush2.msra.mxu0 0.0
      %2333 = vmatprep.subr.mxu0 0.0
      %2334 = vmatpush2.msra.mxu0 0.0
      %2335 = vmatprep.subr.mxu0 0.0
      %2336 = vmatpush2.msra.mxu0 0.0
      %2337 = vmatprep.subr.mxu0 0.0
      %2338 = vmatpush2.msra.mxu0 0.0
      %2339 = vmatprep.subr.mxu0 0.0
      %2340 = vmatpush2.msra.mxu0 0.0
      %2341 = vmatprep.subr.mxu0 0.0
      %2342 = vmatpush2.msra.mxu0 0.0
      %2343 = vmatprep.subr.mxu0 0.0
      %2344 = vmatpush2.msra.mxu0 0.0
      %2345 = vmatprep.subr.mxu0 0.0
      %2346 = vmatpush2.msra.mxu0 0.0
      %2347 = vmatprep.subr.mxu0 0.0
      %2348 = vmatpush2.msra.mxu0 0.0
      %2349 = vmatprep.subr.mxu0 0.0
      %2350 = vmatpush2.msra.mxu0 0.0
      %2351 = vmatprep.subr.mxu0 0.0
      %2352 = vmatpush2.msra.mxu0 0.0
      %2353 = vmatprep.subr.mxu0 0.0
      %2354 = vmatpush2.msra.mxu0 0.0
      %2355 = vmatprep.subr.mxu0 0.0
      %2356 = vmatpush2.msra.mxu0 0.0
      %2357 = vmatprep.subr.mxu0 0.0
      %2358 = vmatpush2.msra.mxu0 0.0
      %2359 = vmatprep.subr.mxu0 0.0
      %2360 = vmatpush2.msra.mxu0 0.0
      %2361 = vmatprep.mubr.f32.mxu0 0.0
      %2362 = vmatmul.mubr.f32.gmra.mxu0 %v2292
      %v2363 = vpop.f32.mrf.mxu0
      %v2364 = vadd.f32 0.0, %v2363
      %v2365 = vpop.f32.mrf.mxu0
      %v2366 = vadd.f32 0.0, %v2365
      %2367 = vmatprep.mubr.f32.mxu0 0.0
      %2368 = vmatmul.mubr.f32.gmra.mxu0 %v2295
      %v2369 = vpop.f32.mrf.mxu0
      %v2370 = vadd.f32 0.0, %v2369
      %v2371 = vpop.f32.mrf.mxu0
      %v2372 = vadd.f32 0.0, %v2371
      %2373 = vdwg.mxu0
      %v2374 = vadd.f32 %v2264, %v2364
      %v2375 = vadd.f32 %v2265, %v2366
      %v2376 = vadd.f32 %v2266, %v2370
      %v2377 = vadd.f32 %v2267, %v2372
      %v2378 = vmul.f32 %v1463, %v1294
      %v2379 = vmul.f32 %v1464, %v1298
      %v2380 = vmul.f32 %v1473, %v1296
      %v2381 = vmul.f32 %v1465, %v1294
      %v2382 = vmul.f32 %v1466, %v1298
      %v2383 = vmul.f32 %v1474, %v1296
      %s2384 = scalar_lea.vmem %s5, 128
      %v2385 = vld [vmem:[%s2384] sm:$0xff]
      %v2386 = vld [vmem:[%s2384 + $0x8] sm:$0xff]
      %2393 = vrot.lane.b32.xlu0 %v2378, 94
      %v2394 = vpop.permute.xlu0 %2393
      %2395 = vrot.lane.b32.xlu0 %v2379, 94
      %v2396 = vpop.permute.xlu0 %2395
      %2397 = vrot.lane.b32.xlu0 %v2380, 94
      %v2398 = vpop.permute.xlu0 %2397
      %2399 = vrot.lane.b32.xlu0 %v2381, 94
      %v2400 = vpop.permute.xlu0 %2399
      %2401 = vrot.lane.b32.xlu0 %v2382, 94
      %v2402 = vpop.permute.xlu0 %2401
      %2403 = vrot.lane.b32.xlu0 %v2383, 94
      %v2404 = vpop.permute.xlu0 %2403
      %v2405 = vsel %vm1317, %v2394, %v2396
      %v2406 = vsel %vm1317, %v2396, %v2398
      %v2407 = vsel %vm1317, %v2400, %v2402
      %v2408 = vsel %vm1317, %v2402, %v2404
      %v2414 = vsel %vm747, %v2385, 0
      %v2417 = vsel %vm747, %v2386, 0
      %2419 = vmatprep.subr.mxu0 0.0
      %2420 = vmatpush1.msra.mxu0 0.0
      %2421 = vmatprep.subr.mxu0 0.0
      %2422 = vmatpush1.msra.mxu0 0.0
      %2423 = vmatprep.subr.mxu0 0.0
      %2424 = vmatpush1.msra.mxu0 0.0
      %2425 = vmatprep.subr.mxu0 0.0
      %2426 = vmatpush1.msra.mxu0 0.0
      %2427 = vmatprep.subr.mxu0 0.0
      %2428 = vmatpush1.msra.mxu0 0.0
      %2429 = vmatprep.subr.mxu0 0.0
      %2430 = vmatpush1.msra.mxu0 0.0
      %2431 = vmatprep.subr.mxu0 0.0
      %2432 = vmatpush1.msra.mxu0 0.0
      %2433 = vmatprep.subr.mxu0 0.0
      %2434 = vmatpush1.msra.mxu0 0.0
      %2435 = vmatprep.subr.mxu0 0.0
      %2436 = vmatpush1.msra.mxu0 0.0
      %2437 = vmatprep.subr.mxu0 0.0
      %2438 = vmatpush1.msra.mxu0 0.0
      %2439 = vmatprep.subr.mxu0 0.0
      %2440 = vmatpush1.msra.mxu0 0.0
      %2441 = vmatprep.subr.mxu0 0.0
      %2442 = vmatpush1.msra.mxu0 0.0
      %2443 = vmatprep.subr.mxu0 0.0
      %2444 = vmatpush1.msra.mxu0 0.0
      %2445 = vmatprep.subr.mxu0 0.0
      %2446 = vmatpush1.msra.mxu0 0.0
      %2447 = vmatprep.subr.mxu0 %v2408
      %2448 = vmatpush1.msra.mxu0 %v2407
      %2449 = vmatprep.subr.mxu0 %v2406
      %2450 = vmatpush1.msra.mxu0 %v2405
      %2451 = vmatprep.subr.mxu0 0.0
      %2452 = vmatpush2.msra.mxu0 0.0
      %2453 = vmatprep.subr.mxu0 0.0
      %2454 = vmatpush2.msra.mxu0 0.0
      %2455 = vmatprep.subr.mxu0 0.0
      %2456 = vmatpush2.msra.mxu0 0.0
      %2457 = vmatprep.subr.mxu0 0.0
      %2458 = vmatpush2.msra.mxu0 0.0
      %2459 = vmatprep.subr.mxu0 0.0
      %2460 = vmatpush2.msra.mxu0 0.0
      %2461 = vmatprep.subr.mxu0 0.0
      %2462 = vmatpush2.msra.mxu0 0.0
      %2463 = vmatprep.subr.mxu0 0.0
      %2464 = vmatpush2.msra.mxu0 0.0
      %2465 = vmatprep.subr.mxu0 0.0
      %2466 = vmatpush2.msra.mxu0 0.0
      %2467 = vmatprep.subr.mxu0 0.0
      %2468 = vmatpush2.msra.mxu0 0.0
      %2469 = vmatprep.subr.mxu0 0.0
      %2470 = vmatpush2.msra.mxu0 0.0
      %2471 = vmatprep.subr.mxu0 0.0
      %2472 = vmatpush2.msra.mxu0 0.0
      %2473 = vmatprep.subr.mxu0 0.0
      %2474 = vmatpush2.msra.mxu0 0.0
      %2475 = vmatprep.subr.mxu0 0.0
      %2476 = vmatpush2.msra.mxu0 0.0
      %2477 = vmatprep.subr.mxu0 0.0
      %2478 = vmatpush2.msra.mxu0 0.0
      %2479 = vmatprep.subr.mxu0 0.0
      %2480 = vmatpush2.msra.mxu0 0.0
      %2481 = vmatprep.subr.mxu0 0.0
      %2482 = vmatpush2.msra.mxu0 0.0
      %2483 = vmatprep.mubr.f32.mxu0 0.0
      %2484 = vmatmul.mubr.f32.gmra.mxu0 %v2414
      %v2485 = vpop.f32.mrf.mxu0
      %v2486 = vadd.f32 0.0, %v2485
      %v2487 = vpop.f32.mrf.mxu0
      %v2488 = vadd.f32 0.0, %v2487
      %2489 = vmatprep.mubr.f32.mxu0 0.0
      %2490 = vmatmul.mubr.f32.gmra.mxu0 %v2417
      %v2491 = vpop.f32.mrf.mxu0
      %v2492 = vadd.f32 0.0, %v2491
      %v2493 = vpop.f32.mrf.mxu0
      %v2494 = vadd.f32 0.0, %v2493
      %2495 = vdwg.mxu0
      %v2496 = vadd.f32 %v2374, %v2486
      %v2497 = vadd.f32 %v2375, %v2488
      %v2498 = vadd.f32 %v2376, %v2492
      %v2499 = vadd.f32 %v2377, %v2494
      %v2500 = vmax.f32 %v2496, 0.0
      %v2501 = vmax.f32 %v2497, 0.0
      %v2502 = vmax.f32 %v2498, 0.0
      %v2503 = vmax.f32 %v2499, 0.0
      %v2504 = vld [vmem:[%s6] sm:$0xff]
      %v2505 = vld [vmem:[%s6 + $0x8] sm:$0xff]
      %v2506 = vld [vmem:[%s6 + $0x10] sm:$0xff]
      %v2507 = vld [vmem:[%s6 + $0x18] sm:$0xff]
      %v2508 = vld [vmem:[%s6 + $0x20] sm:$0xff]
      %v2509 = vld [vmem:[%s6 + $0x28] sm:$0xff]
      %v2510 = vld [vmem:[%s6 + $0x30] sm:$0xff]
      %v2511 = vld [vmem:[%s6 + $0x38] sm:$0xff]
      %v2512 = vld [vmem:[%s7] sm:$0xff]
      %v2513 = vld [vmem:[%s7 + $0x8] sm:$0xff]
      %v2514 = vld [vmem:[%s7 + $0x10] sm:$0xff]
      %v2515 = vld [vmem:[%s7 + $0x18] sm:$0xff]
      %v2516 = vld [vmem:[%s7 + $0x20] sm:$0xff]
      %v2517 = vld [vmem:[%s7 + $0x28] sm:$0xff]
      %v2518 = vld [vmem:[%s7 + $0x30] sm:$0xff]
      %v2519 = vld [vmem:[%s7 + $0x38] sm:$0xff]
      %2521 = vset.pattern.permute.xlu0 0
      %2522 = vperm.xlu0 %2521, %v2512
      %v2523 = vpop.permute.xlu0 %2522
      %2526 = vset.pattern.permute.xlu0 0
      %2527 = vperm.xlu0 %2526, %v2513
      %v2528 = vpop.permute.xlu0 %2527
      %2531 = vset.pattern.permute.xlu0 0
      %2532 = vperm.xlu0 %2531, %v2514
      %v2533 = vpop.permute.xlu0 %2532
      %2536 = vset.pattern.permute.xlu0 0
      %2537 = vperm.xlu0 %2536, %v2515
      %v2538 = vpop.permute.xlu0 %2537
      %2541 = vset.pattern.permute.xlu0 0
      %2542 = vperm.xlu0 %2541, %v2516
      %v2543 = vpop.permute.xlu0 %2542
      %2546 = vset.pattern.permute.xlu0 0
      %2547 = vperm.xlu0 %2546, %v2517
      %v2548 = vpop.permute.xlu0 %2547
      %2551 = vset.pattern.permute.xlu0 0
      %2552 = vperm.xlu0 %2551, %v2518
      %v2553 = vpop.permute.xlu0 %2552
      %2556 = vset.pattern.permute.xlu0 0
      %2557 = vperm.xlu0 %2556, %v2519
      %v2558 = vpop.permute.xlu0 %2557
      %v2561 = vsel %vm747, %v2504, 0
      %v2564 = vsel %vm747, %v2505, 0
      %v2567 = vsel %vm747, %v2506, 0
      %v2570 = vsel %vm747, %v2507, 0
      %v2573 = vsel %vm747, %v2508, 0
      %v2576 = vsel %vm747, %v2509, 0
      %v2579 = vsel %vm747, %v2510, 0
      %v2582 = vsel %vm747, %v2511, 0
      %2584 = vmatprep.subr.mxu0 0.0
      %2585 = vmatpush1.msra.mxu0 0.0
      %2586 = vmatprep.subr.mxu0 0.0
      %2587 = vmatpush1.msra.mxu0 0.0
      %2588 = vmatprep.subr.mxu0 0.0
      %2589 = vmatpush1.msra.mxu0 0.0
      %2590 = vmatprep.subr.mxu0 0.0
      %2591 = vmatpush1.msra.mxu0 0.0
      %2592 = vmatprep.subr.mxu0 0.0
      %2593 = vmatpush1.msra.mxu0 0.0
      %2594 = vmatprep.subr.mxu0 0.0
      %2595 = vmatpush1.msra.mxu0 0.0
      %2596 = vmatprep.subr.mxu0 0.0
      %2597 = vmatpush1.msra.mxu0 0.0
      %2598 = vmatprep.subr.mxu0 0.0
      %2599 = vmatpush1.msra.mxu0 0.0
      %2600 = vmatprep.subr.mxu0 0.0
      %2601 = vmatpush1.msra.mxu0 0.0
      %2602 = vmatprep.subr.mxu0 0.0
      %2603 = vmatpush1.msra.mxu0 0.0
      %2604 = vmatprep.subr.mxu0 0.0
      %2605 = vmatpush1.msra.mxu0 0.0
      %2606 = vmatprep.subr.mxu0 0.0
      %2607 = vmatpush1.msra.mxu0 0.0
      %2608 = vmatprep.subr.mxu0 0.0
      %2609 = vmatpush1.msra.mxu0 0.0
      %2610 = vmatprep.subr.mxu0 0.0
      %2611 = vmatpush1.msra.mxu0 0.0
      %2612 = vmatprep.subr.mxu0 %v2503
      %2613 = vmatpush1.msra.mxu0 %v2502
      %2614 = vmatprep.subr.mxu0 %v2501
      %2615 = vmatpush1.msra.mxu0 %v2500
      %2616 = vmatprep.subr.mxu0 0.0
      %2617 = vmatpush2.msra.mxu0 0.0
      %2618 = vmatprep.subr.mxu0 0.0
      %2619 = vmatpush2.msra.mxu0 0.0
      %2620 = vmatprep.subr.mxu0 0.0
      %2621 = vmatpush2.msra.mxu0 0.0
      %2622 = vmatprep.subr.mxu0 0.0
      %2623 = vmatpush2.msra.mxu0 0.0
      %2624 = vmatprep.subr.mxu0 0.0
      %2625 = vmatpush2.msra.mxu0 0.0
      %2626 = vmatprep.subr.mxu0 0.0
      %2627 = vmatpush2.msra.mxu0 0.0
      %2628 = vmatprep.subr.mxu0 0.0
      %2629 = vmatpush2.msra.mxu0 0.0
      %2630 = vmatprep.subr.mxu0 0.0
      %2631 = vmatpush2.msra.mxu0 0.0
      %2632 = vmatprep.subr.mxu0 0.0
      %2633 = vmatpush2.msra.mxu0 0.0
      %2634 = vmatprep.subr.mxu0 0.0
      %2635 = vmatpush2.msra.mxu0 0.0
      %2636 = vmatprep.subr.mxu0 0.0
      %2637 = vmatpush2.msra.mxu0 0.0
      %2638 = vmatprep.subr.mxu0 0.0
      %2639 = vmatpush2.msra.mxu0 0.0
      %2640 = vmatprep.subr.mxu0 0.0
      %2641 = vmatpush2.msra.mxu0 0.0
      %2642 = vmatprep.subr.mxu0 0.0
      %2643 = vmatpush2.msra.mxu0 0.0
      %2644 = vmatprep.subr.mxu0 0.0
      %2645 = vmatpush2.msra.mxu0 0.0
      %2646 = vmatprep.subr.mxu0 0.0
      %2647 = vmatpush2.msra.mxu0 0.0
      %2648 = vmatprep.mubr.f32.mxu0 0.0
      %2649 = vmatmul.mubr.f32.gmra.mxu0 %v2561
      %v2650 = vpop.f32.mrf.mxu0
      %v2651 = vadd.f32 %v2523, %v2650
      %v2652 = vpop.f32.mrf.mxu0
      %v2653 = vadd.f32 %v2523, %v2652
      %2654 = vmatprep.mubr.f32.mxu0 0.0
      %2655 = vmatmul.mubr.f32.gmra.mxu0 %v2564
      %v2656 = vpop.f32.mrf.mxu0
      %v2657 = vadd.f32 %v2528, %v2656
      %v2658 = vpop.f32.mrf.mxu0
      %v2659 = vadd.f32 %v2528, %v2658
      %2660 = vmatprep.mubr.f32.mxu0 0.0
      %2661 = vmatmul.mubr.f32.gmra.mxu0 %v2567
      %v2662 = vpop.f32.mrf.mxu0
      %v2663 = vadd.f32 %v2533, %v2662
      %v2664 = vpop.f32.mrf.mxu0
      %v2665 = vadd.f32 %v2533, %v2664
      %2666 = vmatprep.mubr.f32.mxu0 0.0
      %2667 = vmatmul.mubr.f32.gmra.mxu0 %v2570
      %v2668 = vpop.f32.mrf.mxu0
      %v2669 = vadd.f32 %v2538, %v2668
      %v2670 = vpop.f32.mrf.mxu0
      %v2671 = vadd.f32 %v2538, %v2670
      %2672 = vmatprep.mubr.f32.mxu0 0.0
      %2673 = vmatmul.mubr.f32.gmra.mxu0 %v2573
      %v2674 = vpop.f32.mrf.mxu0
      %v2675 = vadd.f32 %v2543, %v2674
      %v2676 = vpop.f32.mrf.mxu0
      %v2677 = vadd.f32 %v2543, %v2676
      %2678 = vmatprep.mubr.f32.mxu0 0.0
      %2679 = vmatmul.mubr.f32.gmra.mxu0 %v2576
      %v2680 = vpop.f32.mrf.mxu0
      %v2681 = vadd.f32 %v2548, %v2680
      %v2682 = vpop.f32.mrf.mxu0
      %v2683 = vadd.f32 %v2548, %v2682
      %2684 = vmatprep.mubr.f32.mxu0 0.0
      %2685 = vmatmul.mubr.f32.gmra.mxu0 %v2579
      %v2686 = vpop.f32.mrf.mxu0
      %v2687 = vadd.f32 %v2553, %v2686
      %v2688 = vpop.f32.mrf.mxu0
      %v2689 = vadd.f32 %v2553, %v2688
      %2690 = vmatprep.mubr.f32.mxu0 0.0
      %2691 = vmatmul.mubr.f32.gmra.mxu0 %v2582
      %v2692 = vpop.f32.mrf.mxu0
      %v2693 = vadd.f32 %v2558, %v2692
      %v2694 = vpop.f32.mrf.mxu0
      %v2695 = vadd.f32 %v2558, %v2694
      %2696 = vdwg.mxu0
      %v2697 = vmax.f32 %v2651, 0.0
      %v2698 = vmax.f32 %v2653, 0.0
      %v2699 = vmax.f32 %v2657, 0.0
      %v2700 = vmax.f32 %v2659, 0.0
      %v2701 = vmax.f32 %v2663, 0.0
      %v2702 = vmax.f32 %v2665, 0.0
      %v2703 = vmax.f32 %v2669, 0.0
      %v2704 = vmax.f32 %v2671, 0.0
      %v2705 = vmax.f32 %v2675, 0.0
      %v2706 = vmax.f32 %v2677, 0.0
      %v2707 = vmax.f32 %v2681, 0.0
      %v2708 = vmax.f32 %v2683, 0.0
      %v2709 = vmax.f32 %v2687, 0.0
      %v2710 = vmax.f32 %v2689, 0.0
      %v2711 = vmax.f32 %v2693, 0.0
      %v2712 = vmax.f32 %v2695, 0.0
      %v2713 = vsub.f32 %v2697, %v2701
      %v2714 = vsub.f32 %v2698, %v2702
      %v2715 = vsub.f32 %v2699, %v2703
      %v2716 = vsub.f32 %v2700, %v2704
      %v2717 = vsub.f32 %v2713, %v2705
      %v2718 = vsub.f32 %v2714, %v2706
      %v2719 = vsub.f32 %v2715, %v2707
      %v2720 = vsub.f32 %v2716, %v2708
      %v2721 = vadd.f32 %v2717, %v2709
      %v2722 = vadd.f32 %v2718, %v2710
      %v2723 = vadd.f32 %v2719, %v2711
      %v2724 = vadd.f32 %v2720, %v2712
      %v2725 = vadd.f32 %v2713, %v2705
      %v2726 = vadd.f32 %v2714, %v2706
      %v2727 = vadd.f32 %v2715, %v2707
      %v2728 = vadd.f32 %v2716, %v2708
      %v2729 = vsub.f32 %v2725, %v2709
      %v2730 = vsub.f32 %v2726, %v2710
      %v2731 = vsub.f32 %v2727, %v2711
      %v2732 = vsub.f32 %v2728, %v2712
      %v2733 = vadd.f32 %v2697, %v2701
      %v2734 = vadd.f32 %v2698, %v2702
      %v2735 = vadd.f32 %v2699, %v2703
      %v2736 = vadd.f32 %v2700, %v2704
      %v2737 = vsub.f32 %v2733, %v2705
      %v2738 = vsub.f32 %v2734, %v2706
      %v2739 = vsub.f32 %v2735, %v2707
      %v2740 = vsub.f32 %v2736, %v2708
      %v2741 = vsub.f32 %v2737, %v2709
      %v2742 = vsub.f32 %v2738, %v2710
      %v2743 = vsub.f32 %v2739, %v2711
      %v2744 = vsub.f32 %v2740, %v2712
      %v2745 = vadd.f32 %v2733, %v2705
      %v2746 = vadd.f32 %v2734, %v2706
      %v2747 = vadd.f32 %v2735, %v2707
      %v2748 = vadd.f32 %v2736, %v2708
      %v2749 = vadd.f32 %v2745, %v2709
      %v2750 = vadd.f32 %v2746, %v2710
      %v2751 = vadd.f32 %v2747, %v2711
      %v2752 = vadd.f32 %v2748, %v2712
      %v2753 = vadd.f32 %v2721, %v2741
      %v2754 = vadd.f32 %v2722, %v2742
      %v2755 = vadd.f32 %v2723, %v2743
      %v2756 = vadd.f32 %v2724, %v2744
      %v2757 = vadd.f32 %v2753, %v2729
      %v2758 = vadd.f32 %v2754, %v2730
      %v2759 = vadd.f32 %v2755, %v2731
      %v2760 = vadd.f32 %v2756, %v2732
      %v2761 = vadd.f32 %v2757, %v2749
      %v2762 = vadd.f32 %v2758, %v2750
      %v2763 = vadd.f32 %v2759, %v2751
      %v2764 = vadd.f32 %v2760, %v2752
      %v2765 = vadd.f32 %v2761, %v2762
      %2766 = vadd.xlane.f32.xlu0 %v2765
      %v2767 = vpop.xlane.xlu0 %2766
      %v2768 = vadd.f32 %v2763, %v2764
      %2769 = vadd.xlane.f32.xlu0 %v2768
      %v2770 = vpop.xlane.xlu0 %2769
      %v2771 = vmul.f32 %v2767, 0.0009765625
      %v2772 = vmul.f32 %v2770, 0.0009765625
      %v2773 = vld [vmem:[%s8] sm:$0xf]
      %v2774 = vld [vmem:[%s9] sm:$0xf]
      %v2776 = vsel %vm747, %v2773, 0
      %2778 = vmatprep.subr.mxu0 0.0
      %2779 = vmatpush1.msra.mxu0 0.0
      %2780 = vmatprep.subr.mxu0 0.0
      %2781 = vmatpush1.msra.mxu0 0.0
      %2782 = vmatprep.subr.mxu0 0.0
      %2783 = vmatpush1.msra.mxu0 0.0
      %2784 = vmatprep.subr.mxu0 0.0
      %2785 = vmatpush1.msra.mxu0 0.0
      %2786 = vmatprep.subr.mxu0 0.0
      %2787 = vmatpush1.msra.mxu0 0.0
      %2788 = vmatprep.subr.mxu0 0.0
      %2789 = vmatpush1.msra.mxu0 0.0
      %2790 = vmatprep.subr.mxu0 0.0
      %2791 = vmatpush1.msra.mxu0 0.0
      %2792 = vmatprep.subr.mxu0 0.0
      %2793 = vmatpush1.msra.mxu0 0.0
      %2794 = vmatprep.subr.mxu0 0.0
      %2795 = vmatpush1.msra.mxu0 0.0
      %2796 = vmatprep.subr.mxu0 0.0
      %2797 = vmatpush1.msra.mxu0 0.0
      %2798 = vmatprep.subr.mxu0 0.0
      %2799 = vmatpush1.msra.mxu0 0.0
      %2800 = vmatprep.subr.mxu0 0.0
      %2801 = vmatpush1.msra.mxu0 0.0
      %2802 = vmatprep.subr.mxu0 0.0
      %2803 = vmatpush1.msra.mxu0 0.0
      %2804 = vmatprep.subr.mxu0 0.0
      %2805 = vmatpush1.msra.mxu0 0.0
      %2806 = vmatprep.subr.mxu0 0.0
      %2807 = vmatpush1.msra.mxu0 %v2772
      %2808 = vmatprep.subr.mxu0 0.0
      %2809 = vmatpush1.msra.mxu0 %v2771
      %2810 = vmatprep.subr.mxu0 0.0
      %2811 = vmatpush2.msra.mxu0 0.0
      %2812 = vmatprep.subr.mxu0 0.0
      %2813 = vmatpush2.msra.mxu0 0.0
      %2814 = vmatprep.subr.mxu0 0.0
      %2815 = vmatpush2.msra.mxu0 0.0
      %2816 = vmatprep.subr.mxu0 0.0
      %2817 = vmatpush2.msra.mxu0 0.0
      %2818 = vmatprep.subr.mxu0 0.0
      %2819 = vmatpush2.msra.mxu0 0.0
      %2820 = vmatprep.subr.mxu0 0.0
      %2821 = vmatpush2.msra.mxu0 0.0
      %2822 = vmatprep.subr.mxu0 0.0
      %2823 = vmatpush2.msra.mxu0 0.0
      %2824 = vmatprep.subr.mxu0 0.0
      %2825 = vmatpush2.msra.mxu0 0.0
      %2826 = vmatprep.subr.mxu0 0.0
      %2827 = vmatpush2.msra.mxu0 0.0
      %2828 = vmatprep.subr.mxu0 0.0
      %2829 = vmatpush2.msra.mxu0 0.0
      %2830 = vmatprep.subr.mxu0 0.0
      %2831 = vmatpush2.msra.mxu0 0.0
      %2832 = vmatprep.subr.mxu0 0.0
      %2833 = vmatpush2.msra.mxu0 0.0
      %2834 = vmatprep.subr.mxu0 0.0
      %2835 = vmatpush2.msra.mxu0 0.0
      %2836 = vmatprep.subr.mxu0 0.0
      %2837 = vmatpush2.msra.mxu0 0.0
      %2838 = vmatprep.subr.mxu0 0.0
      %2839 = vmatpush2.msra.mxu0 0.0
      %2840 = vmatprep.subr.mxu0 0.0
      %2841 = vmatpush2.msra.mxu0 0.0
      %2842 = vmatprep.mubr.f32.mxu0 0.0
      %2843 = vmatmul.mubr.f32.gmra.mxu0 %v2776
      %v2844 = vpop.f32.mrf.mxu0
      %v2845 = vadd.f32 %v2774, %v2844
      %v2846 = vpop.f32.mrf.mxu0
      %2847 = vdwg.mxu0
      %v2848 = vmax.f32 %v2845, 0.0
      %v2849 = vld [vmem:[%s10] sm:$0xff]
      %v2850 = vld [vmem:[%s10 + $0x8] sm:$0xff]
      %v2851 = vld [vmem:[%s11] sm:$0xff]
      %v2852 = vld [vmem:[%s11 + $0x8] sm:$0xff]
      %vm2853 = vcmask 31744
      %v2855 = vsel %vm2853, %v2849, 0
      %v2858 = vsel %vm2853, %v2850, 0
      %vm2860 = vcmask 1043456
      %v2862 = vsel %vm2860, %v2848, 0
      %2864 = vmatprep.subr.mxu0 0.0
      %2865 = vmatpush1.msra.mxu0 0.0
      %2866 = vmatprep.subr.mxu0 0.0
      %2867 = vmatpush1.msra.mxu0 0.0
      %2868 = vmatprep.subr.mxu0 0.0
      %2869 = vmatpush1.msra.mxu0 0.0
      %2870 = vmatprep.subr.mxu0 0.0
      %2871 = vmatpush1.msra.mxu0 0.0
      %2872 = vmatprep.subr.mxu0 0.0
      %2873 = vmatpush1.msra.mxu0 0.0
      %2874 = vmatprep.subr.mxu0 0.0
      %2875 = vmatpush1.msra.mxu0 0.0
      %2876 = vmatprep.subr.mxu0 0.0
      %2877 = vmatpush1.msra.mxu0 0.0
      %2878 = vmatprep.subr.mxu0 0.0
      %2879 = vmatpush1.msra.mxu0 0.0
      %2880 = vmatprep.subr.mxu0 0.0
      %2881 = vmatpush1.msra.mxu0 0.0
      %2882 = vmatprep.subr.mxu0 0.0
      %2883 = vmatpush1.msra.mxu0 0.0
      %2884 = vmatprep.subr.mxu0 0.0
      %2885 = vmatpush1.msra.mxu0 0.0
      %2886 = vmatprep.subr.mxu0 0.0
      %2887 = vmatpush1.msra.mxu0 0.0
      %2888 = vmatprep.subr.mxu0 0.0
      %2889 = vmatpush1.msra.mxu0 0.0
      %2890 = vmatprep.subr.mxu0 0.0
      %2891 = vmatpush1.msra.mxu0 0.0
      %2892 = vmatprep.subr.mxu0 0.0
      %2893 = vmatpush1.msra.mxu0 0.0
      %2894 = vmatprep.subr.mxu0 0.0
      %2895 = vmatpush1.msra.mxu0 %v2862
      %2896 = vmatprep.subr.mxu0 0.0
      %2897 = vmatpush2.msra.mxu0 0.0
      %2898 = vmatprep.subr.mxu0 0.0
      %2899 = vmatpush2.msra.mxu0 0.0
      %2900 = vmatprep.subr.mxu0 0.0
      %2901 = vmatpush2.msra.mxu0 0.0
      %2902 = vmatprep.subr.mxu0 0.0
      %2903 = vmatpush2.msra.mxu0 0.0
      %2904 = vmatprep.subr.mxu0 0.0
      %2905 = vmatpush2.msra.mxu0 0.0
      %2906 = vmatprep.subr.mxu0 0.0
      %2907 = vmatpush2.msra.mxu0 0.0
      %2908 = vmatprep.subr.mxu0 0.0
      %2909 = vmatpush2.msra.mxu0 0.0
      %2910 = vmatprep.subr.mxu0 0.0
      %2911 = vmatpush2.msra.mxu0 0.0
      %2912 = vmatprep.subr.mxu0 0.0
      %2913 = vmatpush2.msra.mxu0 0.0
      %2914 = vmatprep.subr.mxu0 0.0
      %2915 = vmatpush2.msra.mxu0 0.0
      %2916 = vmatprep.subr.mxu0 0.0
      %2917 = vmatpush2.msra.mxu0 0.0
      %2918 = vmatprep.subr.mxu0 0.0
      %2919 = vmatpush2.msra.mxu0 0.0
      %2920 = vmatprep.subr.mxu0 0.0
      %2921 = vmatpush2.msra.mxu0 0.0
      %2922 = vmatprep.subr.mxu0 0.0
      %2923 = vmatpush2.msra.mxu0 0.0
      %2924 = vmatprep.subr.mxu0 0.0
      %2925 = vmatpush2.msra.mxu0 0.0
      %2926 = vmatprep.subr.mxu0 0.0
      %2927 = vmatpush2.msra.mxu0 0.0
      %2928 = vmatprep.mubr.f32.mxu0 0.0
      %2929 = vmatmul.mubr.f32.gmra.mxu0 %v2855
      %v2930 = vpop.f32.mrf.mxu0
      %v2931 = vadd.f32 %v2851, %v2930
      %v2932 = vpop.f32.mrf.mxu0
      %2933 = vmatprep.mubr.f32.mxu0 0.0
      %2934 = vmatmul.mubr.f32.gmra.mxu0 %v2858
      %v2935 = vpop.f32.mrf.mxu0
      %v2936 = vadd.f32 %v2852, %v2935
      %v2937 = vpop.f32.mrf.mxu0
      %2938 = vdwg.mxu0
      %v2939 = vsub.f32 0.0, %v2931
      %v2940 = vsub.f32 0.0, %v2936
      %v2941 = vmul.f32 %v2939, 1.442695
      %v2942 = vpow.pop %v2941
      %v2943 = vmul.f32 %v2940, 1.442695
      %v2944 = vpow.pop %v2943
      %v2945 = vadd.f32 %v2942, 1.0
      %v2946 = vadd.f32 %v2944, 1.0
      %v2947 = vrcp.pop %v2945
      %v2948 = vmul.f32 1.0, %v2947
      %v2949 = vrcp.pop %v2946
      %v2950 = vmul.f32 1.0, %v2949
      %2952 = vset.pattern.permute.xlu0 0
      %2953 = vperm.xlu0 %2952, %v2948
      %v2954 = vpop.permute.xlu0 %2953
      %2957 = vset.pattern.permute.xlu0 0
      %2958 = vperm.xlu0 %2957, %v2950
      %v2959 = vpop.permute.xlu0 %2958
      %v2961 = vmul.f32 %v2721, %v2954
      %v2962 = vmul.f32 %v2722, %v2954
      %v2963 = vmul.f32 %v2723, %v2959
      %v2964 = vmul.f32 %v2724, %v2959
      %2965 = vst [vmem:[%s413] sm:$0xff] %v2961
      %2966 = vst [vmem:[%s413 + $0x8] sm:$0xff] %v2962
      %2967 = vst [vmem:[%s413 + $0x10] sm:$0xff] %v2963
      %2968 = vst [vmem:[%s413 + $0x18] sm:$0xff] %v2964
      %v2969 = vmul.f32 %v2729, %v2954
      %v2970 = vmul.f32 %v2730, %v2954
      %v2971 = vmul.f32 %v2731, %v2959
      %v2972 = vmul.f32 %v2732, %v2959
      %s2973 = scalar_lea.vmem %s413, 64
      %2974 = vst [vmem:[%s2973] sm:$0xff] %v2969
      %2975 = vst [vmem:[%s2973 + $0x8] sm:$0xff] %v2970
      %2976 = vst [vmem:[%s2973 + $0x10] sm:$0xff] %v2971
      %2977 = vst [vmem:[%s2973 + $0x18] sm:$0xff] %v2972
      %v2978 = vmul.f32 %v2741, %v2954
      %v2979 = vmul.f32 %v2742, %v2954
      %v2980 = vmul.f32 %v2743, %v2959
      %v2981 = vmul.f32 %v2744, %v2959
      %s2982 = scalar_lea.vmem %s413, 32
      %2983 = vst [vmem:[%s2982] sm:$0xff] %v2978
      %2984 = vst [vmem:[%s2982 + $0x8] sm:$0xff] %v2979
      %2985 = vst [vmem:[%s2982 + $0x10] sm:$0xff] %v2980
      %2986 = vst [vmem:[%s2982 + $0x18] sm:$0xff] %v2981
      %v2987 = vmul.f32 %v2749, %v2954
      %v2988 = vmul.f32 %v2750, %v2954
      %v2989 = vmul.f32 %v2751, %v2959
      %v2990 = vmul.f32 %v2752, %v2959
      %s2991 = scalar_lea.vmem %s413, 96
      %2992 = vst [vmem:[%s2991] sm:$0xff] %v2987
      %2993 = vst [vmem:[%s2991 + $0x8] sm:$0xff] %v2988
      %2994 = vst [vmem:[%s2991 + $0x10] sm:$0xff] %v2989
      %2995 = vst [vmem:[%s2991 + $0x18] sm:$0xff] %v2990
      %p2996 = scmp.lt.s32.totalorder %s23, 1
      %s2997 = scalar_select %p2996, %s23, 1
      %s2998 = smul.addr %s2997, 16
      %s2999 = smul.addr %s2998, 8
      %s3000 = scalar_lea.vmem %s12, %s2999
      // Predicated region
      $region69: #{unetdec_forward.1} parent=67 // pred_check
        %p3001 = pneg %p298
      $region70: #{unetdec_forward.1} parent=67 // pred_check_branch
        %3003 = sbr.rel (%p3001) target = $region72
      $region71: #{unetdec_forward.1} parent=67 // pred_region
        _
      $region72: #{unetdec_forward.1} parent=67 // pred_fallthru
        _
    $region68: #{unetdec_forward.1} parent=5 // pred_fallthru
      _
    %p3004 = scmp.le.s32.totalorder 2, %s18
    // Predicated region
    $region73: #{unetdec_forward.1} parent=5 // pred_check
      %p3005 = pneg %p3004
    $region74: #{unetdec_forward.1} parent=5 // pred_check_branch
      %3007 = sbr.rel (%p3005) target = $region76
    $region75: #{unetdec_forward.1} parent=5 // pred_region
      %s3008 = ssub.s32 %s18, 2
      // Predicated region
      $region77: #{unetdec_forward.1} parent=75 // pred_check
        %p3009 = pneg %p304
      $region78: #{unetdec_forward.1} parent=75 // pred_check_branch
        %3011 = sbr.rel (%p3009) target = $region80
      $region79: #{unetdec_forward.1} parent=75 // pred_region
        %p3012 = scmp.lt.s32.totalorder %s24, 1
        %s3013 = scalar_select %p3012, %s24, 1
        %s3014 = smul.addr %s3013, 16
        %s3015 = smul.addr %s3014, 8
        %s3016 = scalar_lea.vmem %s12, %s3015
      $region80: #{unetdec_forward.1} parent=75 // pred_fallthru
        _
    $region76: #{unetdec_forward.1} parent=5 // pred_fallthru
      _
  $region6: #{unetdec_forward.1} parent=0 // loop_footer
    %s22 = sadd.s32 1, %s18
  $region7: #{unetdec_forward.1} parent=0 // loop_footer_branch
    %17 = sbr.rel target = $region3
  $region8: #{unetdec_forward.1} parent=0 // loop_exit
    _

</llo_original>
